<compile_context>
chip_gen: v5e
topology: v5e:2x2
jax: 0.10.0
libtpu: 0.0.40
codegen_flags: <defaults>
</compile_context>

<pallas_src>
import jax
import jax.numpy as jnp
from jax.experimental import pallas as pl
from jax.experimental.pallas import tpu as pltpu


_MiB = 1024 * 1024
_INV_SQRT2 = 0.7071067811865476


def _erf_approx(x):
    # Abramowitz & Stegun 7.1.26 rational approximation, |error| < 1.5e-7 — far below
    # bf16 resolution. The reciprocal goes to the EUP (approx=True) so it does not load
    # the VALU slot; everything else is abs/exp/mul/add/where with clean Mosaic lowerings.
    a1, a2, a3, a4, a5 = (0.254829592, -0.284496736, 1.421413741,
                          -1.453152027, 1.061405429)
    p = 0.3275911
    ax = jnp.abs(x)
    t = pl.reciprocal(1.0 + p * ax, approx=True)
    poly = ((((a5 * t + a4) * t + a3) * t + a2) * t + a1) * t
    y = 1.0 - poly * jnp.exp(-ax * ax)
    return jnp.where(x < 0, -y, y)


def _gelu_exact(x):
    # erf-based GELU (matches PyTorch nn.GELU default / F.gelu, approximate='none').
    # NOTE: a shorter tanh-form approximation would be indistinguishable after the bf16
    # cast and cheaper on the VALU, but is kept exact here to match the PyTorch module.
    return 0.5 * x * (1.0 + _erf_approx(x * _INV_SQRT2))


def _expert_mlp_kernel_acc(x_ref, w1_ref, b1_ref, w2_ref, b2_ref, o_ref, acc_ref):
    # x_ref:  (tm, H)    token tile for THIS expert
    # w1_ref: (H, tf)    this expert's first-linear weight F-tile (expert dim squeezed)
    # b1_ref: (1, tf)
    # w2_ref: (tf, H)    this expert's second-linear weight F-tile
    # b2_ref: (1, H)
    # o_ref:  (tm, H)    output tile (resident across the F grid axis)
    # acc_ref:(tm, H)    f32 accumulator scratch
    f = pl.program_id(2)

    @pl.when(f == 0)
    def _():
        acc_ref[...] = jnp.zeros_like(acc_ref)

    # bf16 x bf16 -> f32 accumulate on the MXU.
    h = jnp.dot(x_ref[...], w1_ref[...],
                preferred_element_type=jnp.float32) + b1_ref[...]
    h = _gelu_exact(h)
    acc_ref[...] += jnp.dot(h.astype(w2_ref.dtype), w2_ref[...],
                            preferred_element_type=jnp.float32)

    @pl.when(f == pl.num_programs(2) - 1)
    def _():
        # b2 is added once, only in the finalize branch (not per F step).
        o_ref[...] = (acc_ref[...] + b2_ref[...]).astype(o_ref.dtype)


def _expert_mlp_kernel_single(x_ref, w1_ref, b1_ref, w2_ref, b2_ref, o_ref):
    # f_tiles == 1 fast path: no accumulator / zero-init / final copy.
    h = jnp.dot(x_ref[...], w1_ref[...],
                preferred_element_type=jnp.float32) + b1_ref[...]
    h = _gelu_exact(h)
    y = jnp.dot(h.astype(w2_ref.dtype), w2_ref[...],
                preferred_element_type=jnp.float32)
    o_ref[...] = (y + b2_ref[...]).astype(o_ref.dtype)


def _divisors_desc(n):
    return [d for d in range(n, 0, -1) if n % d == 0]


def _legal_tm_candidates(chunk):
    # tm must be a multiple of 8 (sublane) or equal the full chunk dim.
    cands = [d for d in _divisors_desc(chunk) if d % 8 == 0 or d == chunk]

    def key(d):
        cls = 0 if d % 256 == 0 else (1 if d % 128 == 0 else (2 if d % 8 == 0 else 3))
        return (cls, -d)

    return sorted(set(cands), key=key)


def _legal_tf_candidates(F):
    # tf must be a multiple of 128 (lane) or equal the full F dim.
    cands = [d for d in _divisors_desc(F) if d % 128 == 0 or d == F]

    def key(d):
        cls = 0 if d % 256 == 0 else (1 if d % 128 == 0 else 2)
        return (cls, -d)

    return sorted(set(cands), key=key)


def _vmem_tile_bytes(tm, tf, H, itemsize):
    """Estimated resident VMEM for one grid step with double-buffered streaming tiles."""
    x_b = 2 * tm * H * itemsize                # x tile (double-buffered)
    w_b = 2 * (H * tf + tf * H) * itemsize     # w1 + w2 tiles (double-buffered)
    o_b = 2 * tm * H * itemsize                # output tile
    acc_b = tm * H * 4                         # f32 accumulator scratch
    h_b = tm * tf * 6                          # f32 intermediate + bf16 cast temp
    bias_b = 2 * (tf + H) * itemsize           # b1 / b2 tiles
    return x_b + w_b + o_b + acc_b + h_b + bias_b


def _vmem_capacity_bytes():
    """Per-TensorCore VMEM capacity (generation-aware), with a conservative fallback."""
    try:
        cap = int(getattr(pltpu.get_tpu_info(), "vmem_capacity_bytes", 0))
        if 0 < cap <= 128 * _MiB:
            return cap
    except Exception:
        pass
    return 64 * _MiB  # conservative (v7x per-core VMEM); safe on v5e/v6e too


def local_experts_forward(inputs, w1, b1, w2, b2, *, tm=None, tf=None):
    """Pallas equivalent of LocalExperts.forward(inputs, input_split=None).

    inputs: [T, H]; w1: [E, H, F]; b1: [E, F]; w2: [E, F, H]; b2: [E, H].
    T must be divisible by E (equal-size chunks, matching torch.chunk on divisible T).
    """
    T, H = inputs.shape
    E, _, F = w1.shape
    assert T % E == 0, "tokens must split evenly across local experts"
    chunk = T // E

    itemsize = jnp.dtype(inputs.dtype).itemsize

    # ---- VMEM-aware, generation-aware tile selection ----------------------------------
    phys_vmem = _vmem_capacity_bytes()
    # ~54 MiB on v7x (64 MiB physical), ~108 MiB on v5e/v6e (128 MiB physical).
    vmem_limit = min(int(phys_vmem * 0.85), phys_vmem - 8 * _MiB)
    budget = int(vmem_limit * 0.85)  # headroom for compiler-managed temporaries

    tm_cands = _legal_tm_candidates(chunk)
    tf_cands = _legal_tf_candidates(F)

    if tm is None:
        # Maximise tm first (ideally tm == chunk so expert weights are streamed from HBM
        # exactly once), while guaranteeing room for at least a ~256-wide F tile.
        tf_floor = min([d for d in tf_cands if d >= min(256, F)] or tf_cands)
        tm = next((d for d in tm_cands
                   if _vmem_tile_bytes(d, tf_floor, H, itemsize) <= budget),
                  min(tm_cands))
    if tf is None:
        # Then the largest (256-aligned preferred) F tile that still fits the budget.
        tf = next((d for d in tf_cands
                   if _vmem_tile_bytes(tm, d, H, itemsize) <= budget),
                  min(tf_cands))

    assert chunk % tm == 0 and (tm % 8 == 0 or tm == chunk)
    assert F % tf == 0 and (tf % 128 == 0 or tf == F)
    m_tiles = chunk // tm
    f_tiles = F // tf

    # Expose the expert axis explicitly; biases get a unit sublane dim so their blocked
    # last-two dims are (1, tf)/(1, H) — lane-dense and tile-legal.
    x3 = inputs.reshape(E, chunk, H)
    b1r = b1.reshape(E, 1, F)
    b2r = b2.reshape(E, 1, H)

    w_item = jnp.dtype(w1.dtype).itemsize
    cost = pl.CostEstimate(
        flops=4 * T * H * F,                 # two matmuls, 2*T*H*F flops each
        transcendentals=T * F,               # one exp per GELU element
        # Weights are re-streamed once per m-tile; activations read+written once.
        bytes_accessed=m_tiles * (w1.size + w2.size + b1.size + b2.size) * w_item
        + 2 * inputs.size * itemsize,
    )

    if f_tiles == 1:
        grid = (E, m_tiles)
        in_specs = [
            pl.BlockSpec((pl.Squeezed(), tm, H), lambda e, m: (e, m, 0)),   # x tile
            pl.BlockSpec((pl.Squeezed(), H, F), lambda e, m: (e, 0, 0)),    # w1[e]
            pl.BlockSpec((pl.Squeezed(), 1, F), lambda e, m: (e, 0, 0)),    # b1[e]
            pl.BlockSpec((pl.Squeezed(), F, H), lambda e, m: (e, 0, 0)),    # w2[e]
            pl.BlockSpec((pl.Squeezed(), 1, H), lambda e, m: (e, 0, 0)),    # b2[e]
        ]
        out_specs = pl.BlockSpec((pl.Squeezed(), tm, H), lambda e, m: (e, m, 0))
        scratch_shapes = ()
        kernel = _expert_mlp_kernel_single
        # E leads: on v7x the 2 TensorCores split experts (disjoint weight streams).
        dims = ("parallel", "arbitrary") if E > 1 else ("parallel", "parallel")
    else:
        grid = (E, m_tiles, f_tiles)          # reduction axis (F) last
        in_specs = [
            pl.BlockSpec((pl.Squeezed(), tm, H), lambda e, m, f: (e, m, 0)),   # x tile
            pl.BlockSpec((pl.Squeezed(), H, tf), lambda e, m, f: (e, 0, f)),   # w1[e] F-tile
            pl.BlockSpec((pl.Squeezed(), 1, tf), lambda e, m, f: (e, 0, f)),   # b1[e] F-tile
            pl.BlockSpec((pl.Squeezed(), tf, H), lambda e, m, f: (e, f, 0)),   # w2[e] F-tile
            pl.BlockSpec((pl.Squeezed(), 1, H), lambda e, m, f: (e, 0, 0)),    # b2[e]
        ]
        out_specs = pl.BlockSpec((pl.Squeezed(), tm, H), lambda e, m, f: (e, m, 0))
        scratch_shapes = (pltpu.VMEM((tm, H), jnp.float32),)
        kernel = _expert_mlp_kernel_acc
        dims = (("parallel", "arbitrary", "arbitrary") if E > 1
                else ("parallel", "parallel", "arbitrary"))

    grid_spec = pltpu.PrefetchScalarGridSpec(
        num_scalar_prefetch=0,
        grid=grid,
        in_specs=in_specs,
        out_specs=out_specs,
        scratch_shapes=scratch_shapes,
    )

    out3 = pl.pallas_call(
        kernel,
        out_shape=jax.ShapeDtypeStruct((E, chunk, H), inputs.dtype),
        grid_spec=grid_spec,
        compiler_params=pltpu.CompilerParams(
            dimension_semantics=dims,
            vmem_limit_bytes=vmem_limit,
        ),
        cost_estimate=cost,
    )(x3, w1, b1r, w2, b2r)
    return out3.reshape(T, H)


def _reference(inputs, w1, b1, w2, b2):
    """Plain-JAX (f32, exact GELU) reference of the chunked expert forward."""
    E = w1.shape[0]
    hp = jax.lax.Precision.HIGHEST
    chunks = jnp.split(inputs.astype(jnp.float32), E, axis=0)
    outs = []
    for e in range(E):
        h = jnp.dot(chunks[e], w1[e].astype(jnp.float32), precision=hp)
        h = jax.nn.gelu(h + b1[e].astype(jnp.float32), approximate=False)
        y = jnp.dot(h, w2[e].astype(jnp.float32), precision=hp)
        outs.append(y + b2[e].astype(jnp.float32))
    return jnp.concatenate(outs, axis=0)


if __name__ == "__main__":
    # Small, tile-friendly sizes: 2 local experts, 128 tokens/expert, hidden=256, ffn=512.
    E = 2            # num_local_experts
    chunk = 128      # tokens per expert
    T = E * chunk    # total tokens
    H = 256          # hidden size
    F = 512          # expert FFN size

    key = jax.random.PRNGKey(0)
    k_x, k_w1, k_b1, k_w2, k_b2 = jax.random.split(key, 5)

    dt = jnp.bfloat16
    x = jax.random.normal(k_x, (T, H), dtype=jnp.float32).astype(dt)
    w1 = (jax.random.normal(k_w1, (E, H, F), dtype=jnp.float32) * 0.02).astype(dt)
    b1 = (jax.random.normal(k_b1, (E, F), dtype=jnp.float32) * 0.02).astype(dt)
    w2 = (jax.random.normal(k_w2, (E, F, H), dtype=jnp.float32) * 0.02).astype(dt)
    b2 = (jax.random.normal(k_b2, (E, H), dtype=jnp.float32) * 0.02).astype(dt)

    ref = _reference(x, w1, b1, w2, b2)

    # Run 1: auto-picked tiles (tm = chunk = 128, tf = F = 512) -> single-F fast path.
    out_auto = jax.block_until_ready(local_experts_forward(x, w1, b1, w2, b2))
    assert out_auto.shape == x.shape
    err = float(jnp.max(jnp.abs(out_auto.astype(jnp.float32) - ref)))
    assert err < 2e-2, f"auto-tile max abs err {err}"

    # Run 2: force tf=256 -> grid (2, 1, 2) exercises the F-reduction accumulator path.
    out_acc = jax.block_until_ready(local_experts_forward(x, w1, b1, w2, b2, tf=256))
    assert out_acc.shape == x.shape
    err = float(jnp.max(jnp.abs(out_acc.astype(jnp.float32) - ref)))
    assert err < 2e-2, f"acc-path max abs err {err}"

    # TODO(synk): the `input_split` (ragged per-expert token counts) path needs
    # data-dependent chunk offsets (scalar-prefetch index_map); only the equal-chunk
    # path (`input_split=None`) is implemented here.
    print("KERNEL_OK")
</pallas_src>

<mosaic_0001>
module attributes {stable_mosaic.version = 11 : i64} {
  func.func @_expert_mlp_kernel_single(%arg0: i32, %arg1: i32, %arg2: memref<1x128x256xbf16, #tpu.memory_space<vmem>>, %arg3: memref<1x256x512xbf16, #tpu.memory_space<vmem>>, %arg4: memref<1x1x512xbf16, #tpu.memory_space<vmem>>, %arg5: memref<1x512x256xbf16, #tpu.memory_space<vmem>>, %arg6: memref<1x1x256xbf16, #tpu.memory_space<vmem>>, %arg7: memref<1x128x256xbf16, #tpu.memory_space<vmem>>) attributes {dimension_semantics = [#tpu.dimension_semantics<parallel>, #tpu.dimension_semantics<arbitrary>], iteration_bounds = array<i64: 2, 1>, scalar_prefetch = 0 : i64, scratch_operands = 0 : i64, tpu.core_type = #tpu.core_type<tc>, window_params = [{transform_indices = @transform_0, window_bounds = array<i64: 1, 128, 256>}, {transform_indices = @transform_1, window_bounds = array<i64: 1, 256, 512>}, {transform_indices = @transform_2, window_bounds = array<i64: 1, 1, 512>}, {transform_indices = @transform_3, window_bounds = array<i64: 1, 512, 256>}, {transform_indices = @transform_4, window_bounds = array<i64: 1, 1, 256>}, {transform_indices = @transform_5, window_bounds = array<i64: 1, 128, 256>}]} {
    %c0 = arith.constant 0 : index
    %c0_0 = arith.constant 0 : index
    %c0_1 = arith.constant 0 : index
    %0 = vector.load %arg2[%c0, %c0_0, %c0_1] : memref<1x128x256xbf16, #tpu.memory_space<vmem>>, vector<1x128x256xbf16>
    %1 = vector.shape_cast %0 : vector<1x128x256xbf16> to vector<128x256xbf16>
    %c0_2 = arith.constant 0 : index
    %c0_3 = arith.constant 0 : index
    %c0_4 = arith.constant 0 : index
    %2 = vector.load %arg3[%c0_2, %c0_3, %c0_4] : memref<1x256x512xbf16, #tpu.memory_space<vmem>>, vector<1x256x512xbf16>
    %3 = vector.shape_cast %2 : vector<1x256x512xbf16> to vector<256x512xbf16>
    %cst = arith.constant dense<0.000000e+00> : vector<128x512xf32>
    %4 = tpu.matmul %1, %3, %cst {dimension_numbers = #tpu.dot_dimension_numbers<[1], [0], [0], [1], [0, 0, 1, 1], [], []>} : vector<128x256xbf16>, vector<256x512xbf16>, vector<128x512xf32> -> vector<128x512xf32>
    %c0_5 = arith.constant 0 : index
    %c0_6 = arith.constant 0 : index
    %c0_7 = arith.constant 0 : index
    %5 = vector.load %arg4[%c0_5, %c0_6, %c0_7] : memref<1x1x512xbf16, #tpu.memory_space<vmem>>, vector<1x1x512xbf16>
    %6 = vector.shape_cast %5 : vector<1x1x512xbf16> to vector<1x512xbf16>
    %7 = arith.extf %6 : vector<1x512xbf16> to vector<1x512xf32>
    %8 = vector.broadcast %7 : vector<1x512xf32> to vector<128x512xf32>
    %9 = arith.addf %4, %8 : vector<128x512xf32>
    %cst_8 = arith.constant 5.000000e-01 : f32
    %10 = vector.broadcast %cst_8 : f32 to vector<128x512xf32>
    %11 = arith.mulf %10, %9 : vector<128x512xf32>
    %cst_9 = arith.constant 0.707106769 : f32
    %12 = vector.broadcast %cst_9 : f32 to vector<128x512xf32>
    %13 = arith.mulf %9, %12 : vector<128x512xf32>
    %14 = math.absf %13 : vector<128x512xf32>
    %cst_10 = arith.constant 0.327591091 : f32
    %15 = vector.broadcast %cst_10 : f32 to vector<128x512xf32>
    %16 = arith.mulf %15, %14 : vector<128x512xf32>
    %cst_11 = arith.constant 1.000000e+00 : f32
    %17 = vector.broadcast %cst_11 : f32 to vector<128x512xf32>
    %18 = arith.addf %17, %16 : vector<128x512xf32>
    %19 = tpu.reciprocal %18 {approx = true} : vector<128x512xf32> -> vector<128x512xf32>
    %cst_12 = arith.constant 1.06140542 : f32
    %20 = vector.broadcast %cst_12 : f32 to vector<128x512xf32>
    %21 = arith.mulf %20, %19 : vector<128x512xf32>
    %cst_13 = arith.constant -1.45315206 : f32
    %22 = vector.broadcast %cst_13 : f32 to vector<128x512xf32>
    %23 = arith.addf %21, %22 : vector<128x512xf32>
    %24 = arith.mulf %23, %19 : vector<128x512xf32>
    %cst_14 = arith.constant 1.42141378 : f32
    %25 = vector.broadcast %cst_14 : f32 to vector<128x512xf32>
    %26 = arith.addf %24, %25 : vector<128x512xf32>
    %27 = arith.mulf %26, %19 : vector<128x512xf32>
    %cst_15 = arith.constant -0.284496725 : f32
    %28 = vector.broadcast %cst_15 : f32 to vector<128x512xf32>
    %29 = arith.addf %27, %28 : vector<128x512xf32>
    %30 = arith.mulf %29, %19 : vector<128x512xf32>
    %cst_16 = arith.constant 0.254829586 : f32
    %31 = vector.broadcast %cst_16 : f32 to vector<128x512xf32>
    %32 = arith.addf %30, %31 : vector<128x512xf32>
    %33 = arith.mulf %32, %19 : vector<128x512xf32>
    %cst_17 = arith.constant 0.000000e+00 : f32
    %34 = vector.broadcast %cst_17 : f32 to vector<128x512xf32>
    %35 = arith.subf %34, %14 : vector<128x512xf32>
    %36 = arith.mulf %35, %14 : vector<128x512xf32>
    %37 = math.exp %36 : vector<128x512xf32>
    %38 = arith.mulf %33, %37 : vector<128x512xf32>
    %cst_18 = arith.constant 1.000000e+00 : f32
    %39 = vector.broadcast %cst_18 : f32 to vector<128x512xf32>
    %40 = arith.subf %39, %38 : vector<128x512xf32>
    %cst_19 = arith.constant 0.000000e+00 : f32
    %41 = vector.broadcast %cst_19 : f32 to vector<128x512xf32>
    %42 = arith.cmpf olt, %13, %41 : vector<128x512xf32>
    %cst_20 = arith.constant 0.000000e+00 : f32
    %43 = vector.broadcast %cst_20 : f32 to vector<128x512xf32>
    %44 = arith.subf %43, %40 : vector<128x512xf32>
    %45 = arith.select %42, %44, %40 : vector<128x512xi1>, vector<128x512xf32>
    %cst_21 = arith.constant 1.000000e+00 : f32
    %46 = vector.broadcast %cst_21 : f32 to vector<128x512xf32>
    %47 = arith.addf %46, %45 : vector<128x512xf32>
    %48 = arith.mulf %11, %47 : vector<128x512xf32>
    %49 = arith.truncf %48 : vector<128x512xf32> to vector<128x512xbf16>
    %c0_22 = arith.constant 0 : index
    %c0_23 = arith.constant 0 : index
    %c0_24 = arith.constant 0 : index
    %50 = vector.load %arg5[%c0_22, %c0_23, %c0_24] : memref<1x512x256xbf16, #tpu.memory_space<vmem>>, vector<1x512x256xbf16>
    %51 = vector.shape_cast %50 : vector<1x512x256xbf16> to vector<512x256xbf16>
    %cst_25 = arith.constant dense<0.000000e+00> : vector<128x256xf32>
    %52 = tpu.matmul %49, %51, %cst_25 {dimension_numbers = #tpu.dot_dimension_numbers<[1], [0], [0], [1], [0, 0, 1, 1], [], []>} : vector<128x512xbf16>, vector<512x256xbf16>, vector<128x256xf32> -> vector<128x256xf32>
    %c0_26 = arith.constant 0 : index
    %c0_27 = arith.constant 0 : index
    %c0_28 = arith.constant 0 : index
    %53 = vector.load %arg6[%c0_26, %c0_27, %c0_28] : memref<1x1x256xbf16, #tpu.memory_space<vmem>>, vector<1x1x256xbf16>
    %54 = vector.shape_cast %53 : vector<1x1x256xbf16> to vector<1x256xbf16>
    %55 = arith.extf %54 : vector<1x256xbf16> to vector<1x256xf32>
    %56 = vector.broadcast %55 : vector<1x256xf32> to vector<128x256xf32>
    %57 = arith.addf %52, %56 : vector<128x256xf32>
    %58 = arith.truncf %57 : vector<128x256xf32> to vector<128x256xbf16>
    %c0_29 = arith.constant 0 : index
    %c0_30 = arith.constant 0 : index
    %c0_31 = arith.constant 0 : index
    %59 = vector.load %arg7[%c0_29, %c0_30, %c0_31] : memref<1x128x256xbf16, #tpu.memory_space<vmem>>, vector<1x128x256xbf16>
    %60 = vector.shape_cast %59 : vector<1x128x256xbf16> to vector<128x256xbf16>
    %61 = vector.shape_cast %58 : vector<128x256xbf16> to vector<1x128x256xbf16>
    tpu.vector_store %arg7[%c0_29, %c0_30, %c0_31], %61 {strides = array<i32>} : memref<1x128x256xbf16, #tpu.memory_space<vmem>>, vector<1x128x256xbf16>,
    return
  }
  func.func @transform_0(%arg0: i32, %arg1: i32) -> (i32, i32, i32) {
    %c0_i32 = arith.constant 0 : i32
    %c0_i32_0 = arith.constant 0 : i32
    return %arg0, %arg1, %c0_i32 : i32, i32, i32
  }
  func.func @transform_1(%arg0: i32, %arg1: i32) -> (i32, i32, i32) {
    %c0_i32 = arith.constant 0 : i32
    %c0_i32_0 = arith.constant 0 : i32
    %c0_i32_1 = arith.constant 0 : i32
    return %arg0, %c0_i32, %c0_i32_0 : i32, i32, i32
  }
  func.func @transform_2(%arg0: i32, %arg1: i32) -> (i32, i32, i32) {
    %c0_i32 = arith.constant 0 : i32
    %c0_i32_0 = arith.constant 0 : i32
    %c0_i32_1 = arith.constant 0 : i32
    return %arg0, %c0_i32, %c0_i32_0 : i32, i32, i32
  }
  func.func @transform_3(%arg0: i32, %arg1: i32) -> (i32, i32, i32) {
    %c0_i32 = arith.constant 0 : i32
    %c0_i32_0 = arith.constant 0 : i32
    %c0_i32_1 = arith.constant 0 : i32
    return %arg0, %c0_i32, %c0_i32_0 : i32, i32, i32
  }
  func.func @transform_4(%arg0: i32, %arg1: i32) -> (i32, i32, i32) {
    %c0_i32 = arith.constant 0 : i32
    %c0_i32_0 = arith.constant 0 : i32
    %c0_i32_1 = arith.constant 0 : i32
    return %arg0, %c0_i32, %c0_i32_0 : i32, i32, i32
  }
  func.func @transform_5(%arg0: i32, %arg1: i32) -> (i32, i32, i32) {
    %c0_i32 = arith.constant 0 : i32
    %c0_i32_0 = arith.constant 0 : i32
    return %arg0, %arg1, %c0_i32 : i32, i32, i32
  }
}

</mosaic_0001>

<llo_original>
// kernel: tpu_custom_call.1
$region0: #{tpu_custom_call.1}
  #allocation0 [shape = 'u32[]', space=smem, size = 0x4, offset = 0x4, fixed_abs, tag = 'smem constant byte address 0x4 - core index']
  #allocation1 [shape = 'u32[72,128]{1,0:T(1,128)}', space=vmem, size = 0x9000, scoped, tag = 'internal scratch']
  %s0 = inlined_call_operand.hbm [shape: bf16[2,128,256], index: 0, kind: input, shape index: {}]
  %s1 = inlined_call_operand.hbm [shape: bf16[2,256,512], index: 1, kind: input, shape index: {}]
  %s2 = inlined_call_operand.vmem [shape: bf16[2,1,512], index: 2, kind: input, shape index: {}]
  %s3 = inlined_call_operand.hbm [shape: bf16[2,512,256], index: 3, kind: input, shape index: {}]
  %s4 = inlined_call_operand.vmem [shape: bf16[2,1,256], index: 4, kind: input, shape index: {}]
  %s5 = inlined_call_operand.hbm [shape: bf16[2,128,256], index: 5, kind: output, shape index: {}]
  %s6 = sld [smem:[#allocation0]]
  $region65: #{tpu_custom_call.1} parent=0
    _
  %s8 = ssub.s32 1, %s6
  %s9 = scalar_select 0, %s8, %s6
  $region1: #{tpu_custom_call.1} parent=0
    #allocation2 [shape = 'u8[131072]{0}', space=vmem, size = 0x20000, scoped, tag = 'input window, operand 0']
    #allocation3 [shape = 's32[2]{0}', space=sflag, size = 0x8, scoped, tag = 'scoped memory for tpu_custom_call.1']
    #allocation4 [shape = 's32[2]{0}', space=sflag, size = 0x8, scoped, tag = 'scoped memory for tpu_custom_call.1']
    #allocation5 [shape = 'u8[524288]{0}', space=vmem, size = 0x80000, scoped, tag = 'input window, operand 1']
    #allocation6 [shape = 's32[2]{0}', space=sflag, size = 0x8, scoped, tag = 'scoped memory for tpu_custom_call.1']
    #allocation7 [shape = 'u8[524288]{0}', space=vmem, size = 0x80000, scoped, tag = 'input window, operand 3']
    #allocation8 [shape = 'u8[131072]{0}', space=vmem, size = 0x20000, scoped, tag = 'output window, operand 0']
    %10 = vsyncpa [#allocation3], 0
    %s11 = scalar_lea.sflag [#allocation3], 1
    %12 = vsyncpa %s11, 0
    %13 = vsyncpa [#allocation6], 0
    %s14 = scalar_lea.sflag [#allocation6], 1
    %15 = vsyncpa %s14, 0
    %16 = vsyncpa [#allocation4], 0
    %s17 = scalar_lea.sflag [#allocation4], 1
    %18 = vsyncpa %s17, 0
    loop: start=0, step=1, limit=4
    $region2: #{tpu_custom_call.1} parent=1 // loop_pre_header
      _
    $region3: #{tpu_custom_call.1} parent=1 // loop_header
      %s20 = sphi 0, %s24
      %p21 = scmp.ge.s32.totalorder %s20, 4
      %s27 = sphi 0, %s39
      %s28 = sphi 0, %s35
      %s29 = sphi 0, %s27
      %s30 = sphi 0, %s28
      %s31 = sphi 0, %s29
      %s32 = sphi 0, %s30
      %s44 = sphi 0, %s46
      %s47 = sphi 0, %s44
      %s48 = sphi 0, %s47
      %s64 = sphi 0, %s48
      %s70 = sphi 0, %s72
      %s73 = sphi 0, %s70
      %s74 = sphi 0, %s73
      %s90 = sphi 0, %s74
      %s96 = sphi 0, %s98
      %s99 = sphi 0, %s96
      %s100 = sphi 0, %s99
      %s116 = sphi 0, %s100
      %s122 = sphi 0, %s124
      %s125 = sphi 0, %s122
      %s126 = sphi 0, %s125
      %s142 = sphi 0, %s126
      %s148 = sphi 0, %s150
      %s151 = sphi 0, %s148
      %s152 = sphi 0, %s151
      %s168 = sphi 0, %s152
      %s176 = sphi 0, %s178
      %s179 = sphi 0, %s176
      %s180 = sphi 0, %s179
      %s196 = sphi 0, %s180
    $region4: #{tpu_custom_call.1} parent=1 // loop_header_branch
      %23 = sbr.rel (%p21) target = $region8
    $region5: #{tpu_custom_call.1} parent=1 // loop_body
      %s25 = ssub.s32 %s20, 1
      %s26 = ssub.s32 %s20, 2
      %s33 = sadd.s32 1, %s28
      %p34 = scmp.ge.s32.totalorder %s33, 1
      %s35 = scalar_select %p34, 0, %s33
      %s36 = sadd.s32 1, %s27
      %s37 = scalar_select %p34, %s36, %s27
      %p38 = scmp.ge.s32.totalorder %s37, 2
      %s39 = scalar_select %p38, 0, %s37
      %s40 = ssub.s32 %s27, %s39
      %s41 = ssub.s32 %s28, %s35
      %s42 = sor.u32 %s40, %s41
      %p43 = scmp.eq.s32.totalorder %s42, 0
      %s45 = sadd.s32 %s44, 1
      %s46 = scalar_select %p43, %s44, %s45
      %p49 = pneg %p43
      %p50 = scmp.eq.s32.totalorder %s20, 1
      %p51 = por %p49, %p50
      %p52 = scmp.ne.s32.totalorder %s44, %s47
      %p53 = scmp.eq.s32.totalorder %s20, 0
      %p54 = por %p52, %p53
      %p55 = scmp.ne.s32.totalorder %s44, %s47
      %p56 = scmp.eq.s32.totalorder %s25, 1
      %p57 = por %p55, %p56
      %p58 = scmp.ne.s32.totalorder %s47, %s48
      %p59 = scmp.eq.s32.totalorder %s25, 0
      %p60 = por %p58, %p59
      %p61 = scmp.ne.s32.totalorder %s47, %s48
      %p62 = scmp.eq.s32.totalorder %s26, 1
      %p63 = por %p61, %p62
      %p65 = scmp.ne.s32.totalorder %s48, %s64
      %p66 = scmp.eq.s32.totalorder %s26, 0
      %p67 = por %p65, %p66
      %s68 = ssub.s32 %s27, %s39
      %p69 = scmp.eq.s32.totalorder %s68, 0
      %s71 = sadd.s32 %s70, 1
      %s72 = scalar_select %p69, %s70, %s71
      %p75 = pneg %p69
      %p76 = scmp.eq.s32.totalorder %s20, 1
      %p77 = por %p75, %p76
      %p78 = scmp.ne.s32.totalorder %s70, %s73
      %p79 = scmp.eq.s32.totalorder %s20, 0
      %p80 = por %p78, %p79
      %p81 = scmp.ne.s32.totalorder %s70, %s73
      %p82 = scmp.eq.s32.totalorder %s25, 1
      %p83 = por %p81, %p82
      %p84 = scmp.ne.s32.totalorder %s73, %s74
      %p85 = scmp.eq.s32.totalorder %s25, 0
      %p86 = por %p84, %p85
      %p87 = scmp.ne.s32.totalorder %s73, %s74
      %p88 = scmp.eq.s32.totalorder %s26, 1
      %p89 = por %p87, %p88
      %p91 = scmp.ne.s32.totalorder %s74, %s90
      %p92 = scmp.eq.s32.totalorder %s26, 0
      %p93 = por %p91, %p92
      %s94 = ssub.s32 %s27, %s39
      %p95 = scmp.eq.s32.totalorder %s94, 0
      %s97 = sadd.s32 %s96, 1
      %s98 = scalar_select %p95, %s96, %s97
      %p101 = pneg %p95
      %p102 = scmp.eq.s32.totalorder %s20, 1
      %p103 = por %p101, %p102
      %p104 = scmp.ne.s32.totalorder %s96, %s99
      %p105 = scmp.eq.s32.totalorder %s20, 0
      %p106 = por %p104, %p105
      %p107 = scmp.ne.s32.totalorder %s96, %s99
      %p108 = scmp.eq.s32.totalorder %s25, 1
      %p109 = por %p107, %p108
      %p110 = scmp.ne.s32.totalorder %s99, %s100
      %p111 = scmp.eq.s32.totalorder %s25, 0
      %p112 = por %p110, %p111
      %p113 = scmp.ne.s32.totalorder %s99, %s100
      %p114 = scmp.eq.s32.totalorder %s26, 1
      %p115 = por %p113, %p114
      %p117 = scmp.ne.s32.totalorder %s100, %s116
      %p118 = scmp.eq.s32.totalorder %s26, 0
      %p119 = por %p117, %p118
      %s120 = ssub.s32 %s27, %s39
      %p121 = scmp.eq.s32.totalorder %s120, 0
      %s123 = sadd.s32 %s122, 1
      %s124 = scalar_select %p121, %s122, %s123
      %p127 = pneg %p121
      %p128 = scmp.eq.s32.totalorder %s20, 1
      %p129 = por %p127, %p128
      %p130 = scmp.ne.s32.totalorder %s122, %s125
      %p131 = scmp.eq.s32.totalorder %s20, 0
      %p132 = por %p130, %p131
      %p133 = scmp.ne.s32.totalorder %s122, %s125
      %p134 = scmp.eq.s32.totalorder %s25, 1
      %p135 = por %p133, %p134
      %p136 = scmp.ne.s32.totalorder %s125, %s126
      %p137 = scmp.eq.s32.totalorder %s25, 0
      %p138 = por %p136, %p137
      %p139 = scmp.ne.s32.totalorder %s125, %s126
      %p140 = scmp.eq.s32.totalorder %s26, 1
      %p141 = por %p139, %p140
      %p143 = scmp.ne.s32.totalorder %s126, %s142
      %p144 = scmp.eq.s32.totalorder %s26, 0
      %p145 = por %p143, %p144
      %s146 = ssub.s32 %s27, %s39
      %p147 = scmp.eq.s32.totalorder %s146, 0
      %s149 = sadd.s32 %s148, 1
      %s150 = scalar_select %p147, %s148, %s149
      %p153 = pneg %p147
      %p154 = scmp.eq.s32.totalorder %s20, 1
      %p155 = por %p153, %p154
      %p156 = scmp.ne.s32.totalorder %s148, %s151
      %p157 = scmp.eq.s32.totalorder %s20, 0
      %p158 = por %p156, %p157
      %p159 = scmp.ne.s32.totalorder %s148, %s151
      %p160 = scmp.eq.s32.totalorder %s25, 1
      %p161 = por %p159, %p160
      %p162 = scmp.ne.s32.totalorder %s151, %s152
      %p163 = scmp.eq.s32.totalorder %s25, 0
      %p164 = por %p162, %p163
      %p165 = scmp.ne.s32.totalorder %s151, %s152
      %p166 = scmp.eq.s32.totalorder %s26, 1
      %p167 = por %p165, %p166
      %p169 = scmp.ne.s32.totalorder %s152, %s168
      %p170 = scmp.eq.s32.totalorder %s26, 0
      %p171 = por %p169, %p170
      %s172 = ssub.s32 %s27, %s39
      %s173 = ssub.s32 %s28, %s35
      %s174 = sor.u32 %s172, %s173
      %p175 = scmp.eq.s32.totalorder %s174, 0
      %s177 = sadd.s32 %s176, 1
      %s178 = scalar_select %p175, %s176, %s177
      %p181 = pneg %p175
      %p182 = scmp.eq.s32.totalorder %s20, 1
      %p183 = por %p181, %p182
      %p184 = scmp.ne.s32.totalorder %s176, %s179
      %p185 = scmp.eq.s32.totalorder %s20, 0
      %p186 = por %p184, %p185
      %p187 = scmp.ne.s32.totalorder %s176, %s179
      %p188 = scmp.eq.s32.totalorder %s25, 1
      %p189 = por %p187, %p188
      %p190 = scmp.ne.s32.totalorder %s179, %s180
      %p191 = scmp.eq.s32.totalorder %s25, 0
      %p192 = por %p190, %p191
      %p193 = scmp.ne.s32.totalorder %s179, %s180
      %p194 = scmp.eq.s32.totalorder %s26, 1
      %p195 = por %p193, %p194
      %p197 = scmp.ne.s32.totalorder %s180, %s196
      %p198 = scmp.eq.s32.totalorder %s26, 0
      %p199 = por %p197, %p198
      %p200 = scmp.le.s32.totalorder 1, %s20
      %p201 = scmp.lt.s32.totalorder %s20, 3
      %p202 = pnand %p200, %p201
      %p203 = pneg %p202
      // Predicated region
      $region9: #{tpu_custom_call.1} parent=5 // pred_check
        _
      $region10: #{tpu_custom_call.1} parent=5 // pred_check_branch
        %205 = sbr.rel (%p202) target = $region12
      $region11: #{tpu_custom_call.1} parent=5 // pred_region
        %s206 = ssub.s32 %s20, 1
      $region12: #{tpu_custom_call.1} parent=5 // pred_fallthru
        _
      %p207 = scmp.lt.s32.totalorder %s20, 2
      // Predicated region
      $region13: #{tpu_custom_call.1} parent=5 // pred_check
        %p208 = pneg %p207
      $region14: #{tpu_custom_call.1} parent=5 // pred_check_branch
        %210 = sbr.rel (%p208) target = $region16
      $region15: #{tpu_custom_call.1} parent=5 // pred_region
        // Predicated region
        $region17: #{tpu_custom_call.1} parent=15 // pred_check
          %p211 = pneg %p54
        $region18: #{tpu_custom_call.1} parent=15 // pred_check_branch
          %213 = sbr.rel (%p211) target = $region20
        $region19: #{tpu_custom_call.1} parent=15 // pred_region
          %s214 = sand.u32 %s44, 1
          %s215 = scalar_lea.sflag [#allocation3], %s214
          %s216 = sand.u32 %s44, 1
          %s217 = smul.addr %s216, 128
          %s218 = scalar_lea.vmem [#allocation2], %s217
          %s219 = smul.u32 16, %s28
          %221 = vsyncadd %s215, 0
          %s222 = smul.addr %s219, 2
          %s223 = smul.addr %s27, 32
          %s224 = sadd.s32 %s222, %s223
          %s225 = smul.addr %s224, 4
          %s226 = scalar_lea.hbm %s0, %s225
          %s227 = sshll.u32 %s226, 4
          %s228 = int_to_ptr.hbm [resolvable:$true] %s227
          %s229 = sshll.u32 %s218, 4
          %s230 = int_to_ptr.vmem [resolvable:$true] %s229
          %235 = dma.hbm_to_vmem [thread:$0]  %s228, 2048, %s230, %s215, 128, 128, 8
        $region20: #{tpu_custom_call.1} parent=15 // pred_fallthru
          _
        // Predicated region
        $region21: #{tpu_custom_call.1} parent=15 // pred_check
          %p236 = pneg %p80
        $region22: #{tpu_custom_call.1} parent=15 // pred_check_branch
          %238 = sbr.rel (%p236) target = $region24
        $region23: #{tpu_custom_call.1} parent=15 // pred_region
          %s239 = sand.u32 %s20, 1
          %s240 = scalar_lea.sflag [#allocation6], %s239
          %s241 = sand.u32 %s70, 1
          %s242 = smul.addr %s241, 512
          %s243 = scalar_lea.vmem [#allocation5], %s242
          %245 = vsyncadd %s240, 0
          %s246 = smul.addr %s27, 128
          %s247 = smul.addr %s246, 4
          %s248 = scalar_lea.hbm %s1, %s247
          %s249 = sshll.u32 %s248, 4
          %s250 = int_to_ptr.hbm [resolvable:$true] %s249
          %s251 = sshll.u32 %s243, 4
          %s252 = int_to_ptr.vmem [resolvable:$true] %s251
          %257 = dma.hbm_to_vmem [thread:$0]  %s250, 8192, %s252, %s240, 256, 256, 16
        $region24: #{tpu_custom_call.1} parent=15 // pred_fallthru
          _
        // Predicated region
        $region25: #{tpu_custom_call.1} parent=15 // pred_check
          %p258 = pneg %p106
        $region26: #{tpu_custom_call.1} parent=15 // pred_check_branch
          %260 = sbr.rel (%p258) target = $region28
        $region27: #{tpu_custom_call.1} parent=15 // pred_region
          %p261 = scmp.lt.s32.totalorder %s27, 1
          %s262 = scalar_select %p261, %s27, 1
          %s263 = smul.addr %s262, 4
          %s264 = scalar_lea.vmem %s2, %s263
        $region28: #{tpu_custom_call.1} parent=15 // pred_fallthru
          _
        // Predicated region
        $region29: #{tpu_custom_call.1} parent=15 // pred_check
          %p265 = pneg %p132
        $region30: #{tpu_custom_call.1} parent=15 // pred_check_branch
          %267 = sbr.rel (%p265) target = $region32
        $region31: #{tpu_custom_call.1} parent=15 // pred_region
          %s268 = sand.u32 %s20, 1
          %s269 = scalar_lea.sflag [#allocation6], %s268
          %s270 = sand.u32 %s122, 1
          %s271 = smul.addr %s270, 512
          %s272 = scalar_lea.vmem [#allocation7], %s271
          %274 = vsyncadd %s269, 0
          %s275 = smul.addr %s27, 128
          %s276 = smul.addr %s275, 4
          %s277 = scalar_lea.hbm %s3, %s276
          %s278 = sshll.u32 %s277, 4
          %s279 = int_to_ptr.hbm [resolvable:$true] %s278
          %s280 = sshll.u32 %s272, 4
          %s281 = int_to_ptr.vmem [resolvable:$true] %s280
          %286 = dma.hbm_to_vmem [thread:$0]  %s279, 8192, %s281, %s269, 128, 128, 8
        $region32: #{tpu_custom_call.1} parent=15 // pred_fallthru
          _
        // Predicated region
        $region33: #{tpu_custom_call.1} parent=15 // pred_check
          %p287 = pneg %p158
        $region34: #{tpu_custom_call.1} parent=15 // pred_check_branch
          %289 = sbr.rel (%p287) target = $region36
        $region35: #{tpu_custom_call.1} parent=15 // pred_region
          %p290 = scmp.lt.s32.totalorder %s27, 1
          %s291 = scalar_select %p290, %s27, 1
          %s292 = smul.addr %s291, 2
          %s293 = scalar_lea.vmem %s4, %s292
        $region36: #{tpu_custom_call.1} parent=15 // pred_fallthru
          _
      $region16: #{tpu_custom_call.1} parent=5 // pred_fallthru
        _
      %p294 = scmp.le.s32.totalorder 1, %s20
      %p295 = scmp.lt.s32.totalorder %s20, 3
      %p296 = pnand %p294, %p295
      %p297 = pneg %p296
      // Predicated region
      $region37: #{tpu_custom_call.1} parent=5 // pred_check
        _
      $region38: #{tpu_custom_call.1} parent=5 // pred_check_branch
        %299 = sbr.rel (%p296) target = $region40
      $region39: #{tpu_custom_call.1} parent=5 // pred_region
        %s300 = ssub.s32 %s20, 1
        %s301 = sand.u32 %s47, 1
        %s302 = scalar_lea.sflag [#allocation3], %s301
        %s303 = sand.u32 %s47, 1
        %s304 = smul.addr %s303, 128
        %s305 = scalar_lea.vmem [#allocation2], %s304
        // Predicated region
        $region41: #{tpu_custom_call.1} parent=39 // pred_check
          %p306 = pneg %p60
        $region42: #{tpu_custom_call.1} parent=39 // pred_check_branch
          %308 = sbr.rel (%p306) target = $region44
        $region43: #{tpu_custom_call.1} parent=39 // pred_region
          %310 = dma.done %s302, 2048
        $region44: #{tpu_custom_call.1} parent=39 // pred_fallthru
          _
        %s311 = sand.u32 %s25, 1
        %s312 = scalar_lea.sflag [#allocation6], %s311
        %s313 = sand.u32 %s73, 1
        %s314 = smul.addr %s313, 512
        %s315 = scalar_lea.vmem [#allocation5], %s314
        // Predicated region
        $region45: #{tpu_custom_call.1} parent=39 // pred_check
          %p316 = pneg %p86
        $region46: #{tpu_custom_call.1} parent=39 // pred_check_branch
          %318 = sbr.rel (%p316) target = $region48
        $region47: #{tpu_custom_call.1} parent=39 // pred_region
          %320 = dma.done %s312, 8192
        $region48: #{tpu_custom_call.1} parent=39 // pred_fallthru
          _
        %s321 = sand.u32 %s25, 1
        %s322 = scalar_lea.sflag [#allocation6], %s321
        %s323 = sand.u32 %s125, 1
        %s324 = smul.addr %s323, 512
        %s325 = scalar_lea.vmem [#allocation7], %s324
        // Predicated region
        $region49: #{tpu_custom_call.1} parent=39 // pred_check
          %p326 = pneg %p138
        $region50: #{tpu_custom_call.1} parent=39 // pred_check_branch
          %328 = sbr.rel (%p326) target = $region52
        $region51: #{tpu_custom_call.1} parent=39 // pred_region
          %330 = dma.done %s322, 8192
        $region52: #{tpu_custom_call.1} parent=39 // pred_fallthru
          _
        %s331 = sand.u32 %s47, 1
        %s332 = scalar_lea.sflag [#allocation3], %s331
        %s333 = sand.u32 %s47, 1
        %s334 = smul.addr %s333, 128
        %s335 = scalar_lea.vmem [#allocation2], %s334
        %p336 = pneg %p60
        %p337 = pneg %p57
        %s338 = sand.u32 %s25, 1
        %s339 = scalar_lea.sflag [#allocation6], %s338
        %s340 = sand.u32 %s73, 1
        %s341 = smul.addr %s340, 512
        %s342 = scalar_lea.vmem [#allocation5], %s341
        %p343 = pneg %p86
        %p344 = pneg %p83
        %p345 = scmp.lt.s32.totalorder %s29, 1
        %s346 = scalar_select %p345, %s29, 1
        %s347 = smul.addr %s346, 4
        %s348 = scalar_lea.vmem %s2, %s347
        %p349 = pneg %p112
        %p350 = pneg %p109
        %s351 = sand.u32 %s25, 1
        %s352 = scalar_lea.sflag [#allocation6], %s351
        %s353 = sand.u32 %s125, 1
        %s354 = smul.addr %s353, 512
        %s355 = scalar_lea.vmem [#allocation7], %s354
        %p356 = pneg %p138
        %p357 = pneg %p135
        %p358 = scmp.lt.s32.totalorder %s29, 1
        %s359 = scalar_select %p358, %s29, 1
        %s360 = smul.addr %s359, 2
        %s361 = scalar_lea.vmem %s4, %s360
        %p362 = pneg %p164
        %p363 = pneg %p161
        %p364 = pneg %p192
        %p365 = pneg %p189
        %s366 = sand.u32 %s179, 1
        %s367 = scalar_lea.sflag [#allocation4], %s366
        %s368 = sand.u32 %s179, 1
        %s369 = smul.addr %s368, 128
        %s370 = scalar_lea.vmem [#allocation8], %s369
        %s371 = smul.u32 16, %s30
        %p372 = scmp.lt.s32.totalorder %s29, 1
        %s373 = scalar_select %p372, %s29, 1
        %s374 = smul.addr %s373, 4
        %s375 = scalar_lea.vmem %s2, %s374
        %p376 = scmp.lt.s32.totalorder %s29, 1
        %s377 = scalar_select %p376, %s29, 1
        %s378 = smul.addr %s377, 2
        %s379 = scalar_lea.vmem %s4, %s378
        %s380 = smul.u32 16, %s30
        %v381 = vld [vmem:[%s305] sm:$0xff]
        %v382 = vld [vmem:[%s305 + $0x8] sm:$0xff]
        %v383 = vld [vmem:[%s305 + $0x10] sm:$0xff]
        %v384 = vld [vmem:[%s305 + $0x18] sm:$0xff]
        %v385 = vld [vmem:[%s305 + $0x20] sm:$0xff]
        %v386 = vld [vmem:[%s305 + $0x28] sm:$0xff]
        %v387 = vld [vmem:[%s305 + $0x30] sm:$0xff]
        %v388 = vld [vmem:[%s305 + $0x38] sm:$0xff]
        %v389 = vld [vmem:[%s305 + $0x40] sm:$0xff]
        %v390 = vld [vmem:[%s305 + $0x48] sm:$0xff]
        %v391 = vld [vmem:[%s305 + $0x50] sm:$0xff]
        %v392 = vld [vmem:[%s305 + $0x58] sm:$0xff]
        %v393 = vld [vmem:[%s305 + $0x60] sm:$0xff]
        %v394 = vld [vmem:[%s305 + $0x68] sm:$0xff]
        %v395 = vld [vmem:[%s305 + $0x70] sm:$0xff]
        %v396 = vld [vmem:[%s305 + $0x78] sm:$0xff]
        %v397 = vld [vmem:[%s315] sm:$0xff]
        %v398 = vld [vmem:[%s315 + $0x8] sm:$0xff]
        %v399 = vld [vmem:[%s315 + $0x10] sm:$0xff]
        %v400 = vld [vmem:[%s315 + $0x18] sm:$0xff]
        %v401 = vld [vmem:[%s315 + $0x20] sm:$0xff]
        %v402 = vld [vmem:[%s315 + $0x28] sm:$0xff]
        %v403 = vld [vmem:[%s315 + $0x30] sm:$0xff]
        %v404 = vld [vmem:[%s315 + $0x38] sm:$0xff]
        %v405 = vld [vmem:[%s315 + $0x40] sm:$0xff]
        %v406 = vld [vmem:[%s315 + $0x48] sm:$0xff]
        %v407 = vld [vmem:[%s315 + $0x50] sm:$0xff]
        %v408 = vld [vmem:[%s315 + $0x58] sm:$0xff]
        %v409 = vld [vmem:[%s315 + $0x60] sm:$0xff]
        %v410 = vld [vmem:[%s315 + $0x68] sm:$0xff]
        %v411 = vld [vmem:[%s315 + $0x70] sm:$0xff]
        %v412 = vld [vmem:[%s315 + $0x78] sm:$0xff]
        %v413 = vld [vmem:[%s315 + $0x80] sm:$0xff]
        %v414 = vld [vmem:[%s315 + $0x88] sm:$0xff]
        %v415 = vld [vmem:[%s315 + $0x90] sm:$0xff]
        %v416 = vld [vmem:[%s315 + $0x98] sm:$0xff]
        %v417 = vld [vmem:[%s315 + $0xa0] sm:$0xff]
        %v418 = vld [vmem:[%s315 + $0xa8] sm:$0xff]
        %v419 = vld [vmem:[%s315 + $0xb0] sm:$0xff]
        %v420 = vld [vmem:[%s315 + $0xb8] sm:$0xff]
        %v421 = vld [vmem:[%s315 + $0xc0] sm:$0xff]
        %v422 = vld [vmem:[%s315 + $0xc8] sm:$0xff]
        %v423 = vld [vmem:[%s315 + $0xd0] sm:$0xff]
        %v424 = vld [vmem:[%s315 + $0xd8] sm:$0xff]
        %v425 = vld [vmem:[%s315 + $0xe0] sm:$0xff]
        %v426 = vld [vmem:[%s315 + $0xe8] sm:$0xff]
        %v427 = vld [vmem:[%s315 + $0xf0] sm:$0xff]
        %v428 = vld [vmem:[%s315 + $0xf8] sm:$0xff]
        %v429 = vld [vmem:[%s315 + $0x100] sm:$0xff]
        %v430 = vld [vmem:[%s315 + $0x108] sm:$0xff]
        %v431 = vld [vmem:[%s315 + $0x110] sm:$0xff]
        %v432 = vld [vmem:[%s315 + $0x118] sm:$0xff]
        %v433 = vld [vmem:[%s315 + $0x120] sm:$0xff]
        %v434 = vld [vmem:[%s315 + $0x128] sm:$0xff]
        %v435 = vld [vmem:[%s315 + $0x130] sm:$0xff]
        %v436 = vld [vmem:[%s315 + $0x138] sm:$0xff]
        %v437 = vld [vmem:[%s315 + $0x140] sm:$0xff]
        %v438 = vld [vmem:[%s315 + $0x148] sm:$0xff]
        %v439 = vld [vmem:[%s315 + $0x150] sm:$0xff]
        %v440 = vld [vmem:[%s315 + $0x158] sm:$0xff]
        %v441 = vld [vmem:[%s315 + $0x160] sm:$0xff]
        %v442 = vld [vmem:[%s315 + $0x168] sm:$0xff]
        %v443 = vld [vmem:[%s315 + $0x170] sm:$0xff]
        %v444 = vld [vmem:[%s315 + $0x178] sm:$0xff]
        %v445 = vld [vmem:[%s315 + $0x180] sm:$0xff]
        %v446 = vld [vmem:[%s315 + $0x188] sm:$0xff]
        %v447 = vld [vmem:[%s315 + $0x190] sm:$0xff]
        %v448 = vld [vmem:[%s315 + $0x198] sm:$0xff]
        %v449 = vld [vmem:[%s315 + $0x1a0] sm:$0xff]
        %v450 = vld [vmem:[%s315 + $0x1a8] sm:$0xff]
        %v451 = vld [vmem:[%s315 + $0x1b0] sm:$0xff]
        %v452 = vld [vmem:[%s315 + $0x1b8] sm:$0xff]
        %v453 = vld [vmem:[%s315 + $0x1c0] sm:$0xff]
        %v454 = vld [vmem:[%s315 + $0x1c8] sm:$0xff]
        %v455 = vld [vmem:[%s315 + $0x1d0] sm:$0xff]
        %v456 = vld [vmem:[%s315 + $0x1d8] sm:$0xff]
        %v457 = vld [vmem:[%s315 + $0x1e0] sm:$0xff]
        %v458 = vld [vmem:[%s315 + $0x1e8] sm:$0xff]
        %v459 = vld [vmem:[%s315 + $0x1f0] sm:$0xff]
        %v460 = vld [vmem:[%s315 + $0x1f8] sm:$0xff]
        %v461 = vld [vmem:[%s375] sm:$0xf]
        %v462 = vunpack.c.l.bf16 %v461
        %v464 = vperm.slane %v462, 0
        %v465 = vperm.slane %v462, 2
        %v466 = vperm.slane %v462, 4
        %v467 = vperm.slane %v462, 6
        %v472 = vperm.slane %v464, 0
        %v473 = vperm.slane %v465, 0
        %v474 = vperm.slane %v466, 0
        %v475 = vperm.slane %v467, 0
        %v492 = vunpack.c.l.b16 %v381
        %v493 = vunpack.c.h.b16 %v381
        %v494 = vunpack.c.l.b16 %v382
        %v495 = vunpack.c.h.b16 %v382
        %v496 = vunpack.c.l.b16 %v383
        %v497 = vunpack.c.h.b16 %v383
        %v498 = vunpack.c.l.b16 %v384
        %v499 = vunpack.c.h.b16 %v384
        %v500 = vunpack.c.l.b16 %v385
        %v501 = vunpack.c.h.b16 %v385
        %v502 = vunpack.c.l.b16 %v386
        %v503 = vunpack.c.h.b16 %v386
        %v504 = vunpack.c.l.b16 %v387
        %v505 = vunpack.c.h.b16 %v387
        %v506 = vunpack.c.l.b16 %v388
        %v507 = vunpack.c.h.b16 %v388
        %v508 = vunpack.c.l.b16 %v389
        %v509 = vunpack.c.h.b16 %v389
        %v510 = vunpack.c.l.b16 %v390
        %v511 = vunpack.c.h.b16 %v390
        %v512 = vunpack.c.l.b16 %v391
        %v513 = vunpack.c.h.b16 %v391
        %v514 = vunpack.c.l.b16 %v392
        %v515 = vunpack.c.h.b16 %v392
        %v516 = vunpack.c.l.b16 %v393
        %v517 = vunpack.c.h.b16 %v393
        %v518 = vunpack.c.l.b16 %v394
        %v519 = vunpack.c.h.b16 %v394
        %v520 = vunpack.c.l.b16 %v395
        %v521 = vunpack.c.h.b16 %v395
        %v522 = vunpack.c.l.b16 %v396
        %v523 = vunpack.c.h.b16 %v396
        %v524 = vpack.c.b16 %v494, %v492
        %v525 = vpack.c.b16 %v495, %v493
        %v526 = vpack.c.b16 %v498, %v496
        %v527 = vpack.c.b16 %v499, %v497
        %v528 = vpack.c.b16 %v502, %v500
        %v529 = vpack.c.b16 %v503, %v501
        %v530 = vpack.c.b16 %v506, %v504
        %v531 = vpack.c.b16 %v507, %v505
        %v532 = vpack.c.b16 %v510, %v508
        %v533 = vpack.c.b16 %v511, %v509
        %v534 = vpack.c.b16 %v514, %v512
        %v535 = vpack.c.b16 %v515, %v513
        %v536 = vpack.c.b16 %v518, %v516
        %v537 = vpack.c.b16 %v519, %v517
        %v538 = vpack.c.b16 %v522, %v520
        %v539 = vpack.c.b16 %v523, %v521
        %v620 = vunpack.c.l.b16 %v397
        %v621 = vunpack.c.h.b16 %v397
        %v622 = vunpack.c.l.b16 %v398
        %v623 = vunpack.c.h.b16 %v398
        %v624 = vunpack.c.l.b16 %v399
        %v625 = vunpack.c.h.b16 %v399
        %v626 = vunpack.c.l.b16 %v400
        %v627 = vunpack.c.h.b16 %v400
        %v628 = vunpack.c.l.b16 %v401
        %v629 = vunpack.c.h.b16 %v401
        %v630 = vunpack.c.l.b16 %v402
        %v631 = vunpack.c.h.b16 %v402
        %v632 = vunpack.c.l.b16 %v403
        %v633 = vunpack.c.h.b16 %v403
        %v634 = vunpack.c.l.b16 %v404
        %v635 = vunpack.c.h.b16 %v404
        %v636 = vunpack.c.l.b16 %v405
        %v637 = vunpack.c.h.b16 %v405
        %v638 = vunpack.c.l.b16 %v406
        %v639 = vunpack.c.h.b16 %v406
        %v640 = vunpack.c.l.b16 %v407
        %v641 = vunpack.c.h.b16 %v407
        %v642 = vunpack.c.l.b16 %v408
        %v643 = vunpack.c.h.b16 %v408
        %v644 = vunpack.c.l.b16 %v409
        %v645 = vunpack.c.h.b16 %v409
        %v646 = vunpack.c.l.b16 %v410
        %v647 = vunpack.c.h.b16 %v410
        %v648 = vunpack.c.l.b16 %v411
        %v649 = vunpack.c.h.b16 %v411
        %v650 = vunpack.c.l.b16 %v412
        %v651 = vunpack.c.h.b16 %v412
        %v652 = vunpack.c.l.b16 %v413
        %v653 = vunpack.c.h.b16 %v413
        %v654 = vunpack.c.l.b16 %v414
        %v655 = vunpack.c.h.b16 %v414
        %v656 = vunpack.c.l.b16 %v415
        %v657 = vunpack.c.h.b16 %v415
        %v658 = vunpack.c.l.b16 %v416
        %v659 = vunpack.c.h.b16 %v416
        %v660 = vunpack.c.l.b16 %v417
        %v661 = vunpack.c.h.b16 %v417
        %v662 = vunpack.c.l.b16 %v418
        %v663 = vunpack.c.h.b16 %v418
        %v664 = vunpack.c.l.b16 %v419
        %v665 = vunpack.c.h.b16 %v419
        %v666 = vunpack.c.l.b16 %v420
        %v667 = vunpack.c.h.b16 %v420
        %v668 = vunpack.c.l.b16 %v421
        %v669 = vunpack.c.h.b16 %v421
        %v670 = vunpack.c.l.b16 %v422
        %v671 = vunpack.c.h.b16 %v422
        %v672 = vunpack.c.l.b16 %v423
        %v673 = vunpack.c.h.b16 %v423
        %v674 = vunpack.c.l.b16 %v424
        %v675 = vunpack.c.h.b16 %v424
        %v676 = vunpack.c.l.b16 %v425
        %v677 = vunpack.c.h.b16 %v425
        %v678 = vunpack.c.l.b16 %v426
        %v679 = vunpack.c.h.b16 %v426
        %v680 = vunpack.c.l.b16 %v427
        %v681 = vunpack.c.h.b16 %v427
        %v682 = vunpack.c.l.b16 %v428
        %v683 = vunpack.c.h.b16 %v428
        %v684 = vunpack.c.l.b16 %v429
        %v685 = vunpack.c.h.b16 %v429
        %v686 = vunpack.c.l.b16 %v430
        %v687 = vunpack.c.h.b16 %v430
        %v688 = vunpack.c.l.b16 %v431
        %v689 = vunpack.c.h.b16 %v431
        %v690 = vunpack.c.l.b16 %v432
        %v691 = vunpack.c.h.b16 %v432
        %v692 = vunpack.c.l.b16 %v433
        %v693 = vunpack.c.h.b16 %v433
        %v694 = vunpack.c.l.b16 %v434
        %v695 = vunpack.c.h.b16 %v434
        %v696 = vunpack.c.l.b16 %v435
        %v697 = vunpack.c.h.b16 %v435
        %v698 = vunpack.c.l.b16 %v436
        %v699 = vunpack.c.h.b16 %v436
        %v700 = vunpack.c.l.b16 %v437
        %v701 = vunpack.c.h.b16 %v437
        %v702 = vunpack.c.l.b16 %v438
        %v703 = vunpack.c.h.b16 %v438
        %v704 = vunpack.c.l.b16 %v439
        %v705 = vunpack.c.h.b16 %v439
        %v706 = vunpack.c.l.b16 %v440
        %v707 = vunpack.c.h.b16 %v440
        %v708 = vunpack.c.l.b16 %v441
        %v709 = vunpack.c.h.b16 %v441
        %v710 = vunpack.c.l.b16 %v442
        %v711 = vunpack.c.h.b16 %v442
        %v712 = vunpack.c.l.b16 %v443
        %v713 = vunpack.c.h.b16 %v443
        %v714 = vunpack.c.l.b16 %v444
        %v715 = vunpack.c.h.b16 %v444
        %v716 = vunpack.c.l.b16 %v445
        %v717 = vunpack.c.h.b16 %v445
        %v718 = vunpack.c.l.b16 %v446
        %v719 = vunpack.c.h.b16 %v446
        %v720 = vunpack.c.l.b16 %v447
        %v721 = vunpack.c.h.b16 %v447
        %v722 = vunpack.c.l.b16 %v448
        %v723 = vunpack.c.h.b16 %v448
        %v724 = vunpack.c.l.b16 %v449
        %v725 = vunpack.c.h.b16 %v449
        %v726 = vunpack.c.l.b16 %v450
        %v727 = vunpack.c.h.b16 %v450
        %v728 = vunpack.c.l.b16 %v451
        %v729 = vunpack.c.h.b16 %v451
        %v730 = vunpack.c.l.b16 %v452
        %v731 = vunpack.c.h.b16 %v452
        %v732 = vunpack.c.l.b16 %v453
        %v733 = vunpack.c.h.b16 %v453
        %v734 = vunpack.c.l.b16 %v454
        %v735 = vunpack.c.h.b16 %v454
        %v736 = vunpack.c.l.b16 %v455
        %v737 = vunpack.c.h.b16 %v455
        %v738 = vunpack.c.l.b16 %v456
        %v739 = vunpack.c.h.b16 %v456
        %v740 = vunpack.c.l.b16 %v457
        %v741 = vunpack.c.h.b16 %v457
        %v742 = vunpack.c.l.b16 %v458
        %v743 = vunpack.c.h.b16 %v458
        %v744 = vunpack.c.l.b16 %v459
        %v745 = vunpack.c.h.b16 %v459
        %v746 = vunpack.c.l.b16 %v460
        %v747 = vunpack.c.h.b16 %v460
        %v748 = vpack.c.b16 %v624, %v620
        %v749 = vpack.c.b16 %v625, %v621
        %v750 = vpack.c.b16 %v626, %v622
        %v751 = vpack.c.b16 %v627, %v623
        %v752 = vpack.c.b16 %v632, %v628
        %v753 = vpack.c.b16 %v633, %v629
        %v754 = vpack.c.b16 %v634, %v630
        %v755 = vpack.c.b16 %v635, %v631
        %v756 = vpack.c.b16 %v640, %v636
        %v757 = vpack.c.b16 %v641, %v637
        %v758 = vpack.c.b16 %v642, %v638
        %v759 = vpack.c.b16 %v643, %v639
        %v760 = vpack.c.b16 %v648, %v644
        %v761 = vpack.c.b16 %v649, %v645
        %v762 = vpack.c.b16 %v650, %v646
        %v763 = vpack.c.b16 %v651, %v647
        %v764 = vpack.c.b16 %v656, %v652
        %v765 = vpack.c.b16 %v657, %v653
        %v766 = vpack.c.b16 %v658, %v654
        %v767 = vpack.c.b16 %v659, %v655
        %v768 = vpack.c.b16 %v664, %v660
        %v769 = vpack.c.b16 %v665, %v661
        %v770 = vpack.c.b16 %v666, %v662
        %v771 = vpack.c.b16 %v667, %v663
        %v772 = vpack.c.b16 %v672, %v668
        %v773 = vpack.c.b16 %v673, %v669
        %v774 = vpack.c.b16 %v674, %v670
        %v775 = vpack.c.b16 %v675, %v671
        %v776 = vpack.c.b16 %v680, %v676
        %v777 = vpack.c.b16 %v681, %v677
        %v778 = vpack.c.b16 %v682, %v678
        %v779 = vpack.c.b16 %v683, %v679
        %v780 = vpack.c.b16 %v688, %v684
        %v781 = vpack.c.b16 %v689, %v685
        %v782 = vpack.c.b16 %v690, %v686
        %v783 = vpack.c.b16 %v691, %v687
        %v784 = vpack.c.b16 %v696, %v692
        %v785 = vpack.c.b16 %v697, %v693
        %v786 = vpack.c.b16 %v698, %v694
        %v787 = vpack.c.b16 %v699, %v695
        %v788 = vpack.c.b16 %v704, %v700
        %v789 = vpack.c.b16 %v705, %v701
        %v790 = vpack.c.b16 %v706, %v702
        %v791 = vpack.c.b16 %v707, %v703
        %v792 = vpack.c.b16 %v712, %v708
        %v793 = vpack.c.b16 %v713, %v709
        %v794 = vpack.c.b16 %v714, %v710
        %v795 = vpack.c.b16 %v715, %v711
        %v796 = vpack.c.b16 %v720, %v716
        %v797 = vpack.c.b16 %v721, %v717
        %v798 = vpack.c.b16 %v722, %v718
        %v799 = vpack.c.b16 %v723, %v719
        %v800 = vpack.c.b16 %v728, %v724
        %v801 = vpack.c.b16 %v729, %v725
        %v802 = vpack.c.b16 %v730, %v726
        %v803 = vpack.c.b16 %v731, %v727
        %v804 = vpack.c.b16 %v736, %v732
        %v805 = vpack.c.b16 %v737, %v733
        %v806 = vpack.c.b16 %v738, %v734
        %v807 = vpack.c.b16 %v739, %v735
        %v808 = vpack.c.b16 %v744, %v740
        %v809 = vpack.c.b16 %v745, %v741
        %v810 = vpack.c.b16 %v746, %v742
        %v811 = vpack.c.b16 %v747, %v743
        %876 = vmatpush.bf16.msra.mxu0 %v776
        %877 = vmatpush.bf16.msra.mxu0 %v772
        %878 = vmatpush.bf16.msra.mxu0 %v768
        %879 = vmatpush.bf16.msra.mxu0 %v764
        %880 = vmatpush.bf16.msra.mxu0 %v760
        %881 = vmatpush.bf16.msra.mxu0 %v756
        %882 = vmatpush.bf16.msra.mxu0 %v752
        %883 = vmatpush.bf16.msra.mxu0 %v748
        %884 = vmatmul.bf16.gmra.mxu0 %v524
        %v885 = vpop.f32.mrf.mxu0
        %v886 = vadd.f32 %v472, %v885
        %v887 = vpop.f32.mrf.mxu0
        %v888 = vadd.f32 %v472, %v887
        %889 = vmatmul.bf16.gmra.mxu0 %v526
        %v890 = vpop.f32.mrf.mxu0
        %v891 = vadd.f32 %v472, %v890
        %v892 = vpop.f32.mrf.mxu0
        %v893 = vadd.f32 %v472, %v892
        %894 = vmatmul.bf16.gmra.mxu0 %v528
        %v895 = vpop.f32.mrf.mxu0
        %v896 = vadd.f32 %v472, %v895
        %v897 = vpop.f32.mrf.mxu0
        %v898 = vadd.f32 %v472, %v897
        %899 = vmatmul.bf16.gmra.mxu0 %v530
        %v900 = vpop.f32.mrf.mxu0
        %v901 = vadd.f32 %v472, %v900
        %v902 = vpop.f32.mrf.mxu0
        %v903 = vadd.f32 %v472, %v902
        %904 = vmatmul.bf16.gmra.mxu0 %v532
        %v905 = vpop.f32.mrf.mxu0
        %v906 = vadd.f32 %v472, %v905
        %v907 = vpop.f32.mrf.mxu0
        %v908 = vadd.f32 %v472, %v907
        %909 = vmatmul.bf16.gmra.mxu0 %v534
        %v910 = vpop.f32.mrf.mxu0
        %v911 = vadd.f32 %v472, %v910
        %v912 = vpop.f32.mrf.mxu0
        %v913 = vadd.f32 %v472, %v912
        %914 = vmatmul.bf16.gmra.mxu0 %v536
        %v915 = vpop.f32.mrf.mxu0
        %v916 = vadd.f32 %v472, %v915
        %v917 = vpop.f32.mrf.mxu0
        %v918 = vadd.f32 %v472, %v917
        %919 = vmatmul.bf16.gmra.mxu0 %v538
        %v920 = vpop.f32.mrf.mxu0
        %v921 = vadd.f32 %v472, %v920
        %v922 = vpop.f32.mrf.mxu0
        %v923 = vadd.f32 %v472, %v922
        %924 = vdwg.mxu0
        %925 = vmatpush.bf16.msra.mxu0 %v808
        %926 = vmatpush.bf16.msra.mxu0 %v804
        %927 = vmatpush.bf16.msra.mxu0 %v800
        %928 = vmatpush.bf16.msra.mxu0 %v796
        %929 = vmatpush.bf16.msra.mxu0 %v792
        %930 = vmatpush.bf16.msra.mxu0 %v788
        %931 = vmatpush.bf16.msra.mxu0 %v784
        %932 = vmatpush.bf16.msra.mxu0 %v780
        %933 = vmatmul.bf16.gmra.mxu0 %v525
        %v934 = vpop.f32.mrf.mxu0
        %v935 = vadd.f32 %v886, %v934
        %v936 = vpop.f32.mrf.mxu0
        %v937 = vadd.f32 %v888, %v936
        %938 = vmatmul.bf16.gmra.mxu0 %v527
        %v939 = vpop.f32.mrf.mxu0
        %v940 = vadd.f32 %v891, %v939
        %v941 = vpop.f32.mrf.mxu0
        %v942 = vadd.f32 %v893, %v941
        %943 = vmatmul.bf16.gmra.mxu0 %v529
        %v944 = vpop.f32.mrf.mxu0
        %v945 = vadd.f32 %v896, %v944
        %v946 = vpop.f32.mrf.mxu0
        %v947 = vadd.f32 %v898, %v946
        %948 = vmatmul.bf16.gmra.mxu0 %v531
        %v949 = vpop.f32.mrf.mxu0
        %v950 = vadd.f32 %v901, %v949
        %v951 = vpop.f32.mrf.mxu0
        %v952 = vadd.f32 %v903, %v951
        %953 = vmatmul.bf16.gmra.mxu0 %v533
        %v954 = vpop.f32.mrf.mxu0
        %v955 = vadd.f32 %v906, %v954
        %v956 = vpop.f32.mrf.mxu0
        %v957 = vadd.f32 %v908, %v956
        %958 = vmatmul.bf16.gmra.mxu0 %v535
        %v959 = vpop.f32.mrf.mxu0
        %v960 = vadd.f32 %v911, %v959
        %v961 = vpop.f32.mrf.mxu0
        %v962 = vadd.f32 %v913, %v961
        %963 = vmatmul.bf16.gmra.mxu0 %v537
        %v964 = vpop.f32.mrf.mxu0
        %v965 = vadd.f32 %v916, %v964
        %v966 = vpop.f32.mrf.mxu0
        %v967 = vadd.f32 %v918, %v966
        %968 = vmatmul.bf16.gmra.mxu0 %v539
        %v969 = vpop.f32.mrf.mxu0
        %v970 = vadd.f32 %v921, %v969
        %v971 = vpop.f32.mrf.mxu0
        %v972 = vadd.f32 %v923, %v971
        %973 = vdwg.mxu0
        %974 = vmatpush.bf16.msra.mxu0 %v777
        %975 = vmatpush.bf16.msra.mxu0 %v773
        %976 = vmatpush.bf16.msra.mxu0 %v769
        %977 = vmatpush.bf16.msra.mxu0 %v765
        %978 = vmatpush.bf16.msra.mxu0 %v761
        %979 = vmatpush.bf16.msra.mxu0 %v757
        %980 = vmatpush.bf16.msra.mxu0 %v753
        %981 = vmatpush.bf16.msra.mxu0 %v749
        %982 = vmatmul.bf16.gmra.mxu0 %v524
        %v983 = vpop.f32.mrf.mxu0
        %v984 = vadd.f32 %v473, %v983
        %v985 = vpop.f32.mrf.mxu0
        %v986 = vadd.f32 %v473, %v985
        %987 = vmatmul.bf16.gmra.mxu0 %v526
        %v988 = vpop.f32.mrf.mxu0
        %v989 = vadd.f32 %v473, %v988
        %v990 = vpop.f32.mrf.mxu0
        %v991 = vadd.f32 %v473, %v990
        %992 = vmatmul.bf16.gmra.mxu0 %v528
        %v993 = vpop.f32.mrf.mxu0
        %v994 = vadd.f32 %v473, %v993
        %v995 = vpop.f32.mrf.mxu0
        %v996 = vadd.f32 %v473, %v995
        %997 = vmatmul.bf16.gmra.mxu0 %v530
        %v998 = vpop.f32.mrf.mxu0
        %v999 = vadd.f32 %v473, %v998
        %v1000 = vpop.f32.mrf.mxu0
        %v1001 = vadd.f32 %v473, %v1000
        %1002 = vmatmul.bf16.gmra.mxu0 %v532
        %v1003 = vpop.f32.mrf.mxu0
        %v1004 = vadd.f32 %v473, %v1003
        %v1005 = vpop.f32.mrf.mxu0
        %v1006 = vadd.f32 %v473, %v1005
        %1007 = vmatmul.bf16.gmra.mxu0 %v534
        %v1008 = vpop.f32.mrf.mxu0
        %v1009 = vadd.f32 %v473, %v1008
        %v1010 = vpop.f32.mrf.mxu0
        %v1011 = vadd.f32 %v473, %v1010
        %1012 = vmatmul.bf16.gmra.mxu0 %v536
        %v1013 = vpop.f32.mrf.mxu0
        %v1014 = vadd.f32 %v473, %v1013
        %v1015 = vpop.f32.mrf.mxu0
        %v1016 = vadd.f32 %v473, %v1015
        %1017 = vmatmul.bf16.gmra.mxu0 %v538
        %v1018 = vpop.f32.mrf.mxu0
        %v1019 = vadd.f32 %v473, %v1018
        %v1020 = vpop.f32.mrf.mxu0
        %v1021 = vadd.f32 %v473, %v1020
        %1022 = vdwg.mxu0
        %1023 = vmatpush.bf16.msra.mxu0 %v809
        %1024 = vmatpush.bf16.msra.mxu0 %v805
        %1025 = vmatpush.bf16.msra.mxu0 %v801
        %1026 = vmatpush.bf16.msra.mxu0 %v797
        %1027 = vmatpush.bf16.msra.mxu0 %v793
        %1028 = vmatpush.bf16.msra.mxu0 %v789
        %1029 = vmatpush.bf16.msra.mxu0 %v785
        %1030 = vmatpush.bf16.msra.mxu0 %v781
        %1031 = vmatmul.bf16.gmra.mxu0 %v525
        %v1032 = vpop.f32.mrf.mxu0
        %v1033 = vadd.f32 %v984, %v1032
        %v1034 = vpop.f32.mrf.mxu0
        %v1035 = vadd.f32 %v986, %v1034
        %1036 = vmatmul.bf16.gmra.mxu0 %v527
        %v1037 = vpop.f32.mrf.mxu0
        %v1038 = vadd.f32 %v989, %v1037
        %v1039 = vpop.f32.mrf.mxu0
        %v1040 = vadd.f32 %v991, %v1039
        %1041 = vmatmul.bf16.gmra.mxu0 %v529
        %v1042 = vpop.f32.mrf.mxu0
        %v1043 = vadd.f32 %v994, %v1042
        %v1044 = vpop.f32.mrf.mxu0
        %v1045 = vadd.f32 %v996, %v1044
        %1046 = vmatmul.bf16.gmra.mxu0 %v531
        %v1047 = vpop.f32.mrf.mxu0
        %v1048 = vadd.f32 %v999, %v1047
        %v1049 = vpop.f32.mrf.mxu0
        %v1050 = vadd.f32 %v1001, %v1049
        %1051 = vmatmul.bf16.gmra.mxu0 %v533
        %v1052 = vpop.f32.mrf.mxu0
        %v1053 = vadd.f32 %v1004, %v1052
        %v1054 = vpop.f32.mrf.mxu0
        %v1055 = vadd.f32 %v1006, %v1054
        %1056 = vmatmul.bf16.gmra.mxu0 %v535
        %v1057 = vpop.f32.mrf.mxu0
        %v1058 = vadd.f32 %v1009, %v1057
        %v1059 = vpop.f32.mrf.mxu0
        %v1060 = vadd.f32 %v1011, %v1059
        %1061 = vmatmul.bf16.gmra.mxu0 %v537
        %v1062 = vpop.f32.mrf.mxu0
        %v1063 = vadd.f32 %v1014, %v1062
        %v1064 = vpop.f32.mrf.mxu0
        %v1065 = vadd.f32 %v1016, %v1064
        %1066 = vmatmul.bf16.gmra.mxu0 %v539
        %v1067 = vpop.f32.mrf.mxu0
        %v1068 = vadd.f32 %v1019, %v1067
        %v1069 = vpop.f32.mrf.mxu0
        %v1070 = vadd.f32 %v1021, %v1069
        %1071 = vdwg.mxu0
        %1072 = vmatpush.bf16.msra.mxu0 %v778
        %1073 = vmatpush.bf16.msra.mxu0 %v774
        %1074 = vmatpush.bf16.msra.mxu0 %v770
        %1075 = vmatpush.bf16.msra.mxu0 %v766
        %1076 = vmatpush.bf16.msra.mxu0 %v762
        %1077 = vmatpush.bf16.msra.mxu0 %v758
        %1078 = vmatpush.bf16.msra.mxu0 %v754
        %1079 = vmatpush.bf16.msra.mxu0 %v750
        %1080 = vmatmul.bf16.gmra.mxu0 %v524
        %v1081 = vpop.f32.mrf.mxu0
        %v1082 = vadd.f32 %v474, %v1081
        %v1083 = vpop.f32.mrf.mxu0
        %v1084 = vadd.f32 %v474, %v1083
        %1085 = vmatmul.bf16.gmra.mxu0 %v526
        %v1086 = vpop.f32.mrf.mxu0
        %v1087 = vadd.f32 %v474, %v1086
        %v1088 = vpop.f32.mrf.mxu0
        %v1089 = vadd.f32 %v474, %v1088
        %1090 = vmatmul.bf16.gmra.mxu0 %v528
        %v1091 = vpop.f32.mrf.mxu0
        %v1092 = vadd.f32 %v474, %v1091
        %v1093 = vpop.f32.mrf.mxu0
        %v1094 = vadd.f32 %v474, %v1093
        %1095 = vmatmul.bf16.gmra.mxu0 %v530
        %v1096 = vpop.f32.mrf.mxu0
        %v1097 = vadd.f32 %v474, %v1096
        %v1098 = vpop.f32.mrf.mxu0
        %v1099 = vadd.f32 %v474, %v1098
        %1100 = vmatmul.bf16.gmra.mxu0 %v532
        %v1101 = vpop.f32.mrf.mxu0
        %v1102 = vadd.f32 %v474, %v1101
        %v1103 = vpop.f32.mrf.mxu0
        %v1104 = vadd.f32 %v474, %v1103
        %1105 = vmatmul.bf16.gmra.mxu0 %v534
        %v1106 = vpop.f32.mrf.mxu0
        %v1107 = vadd.f32 %v474, %v1106
        %v1108 = vpop.f32.mrf.mxu0
        %v1109 = vadd.f32 %v474, %v1108
        %1110 = vmatmul.bf16.gmra.mxu0 %v536
        %v1111 = vpop.f32.mrf.mxu0
        %v1112 = vadd.f32 %v474, %v1111
        %v1113 = vpop.f32.mrf.mxu0
        %v1114 = vadd.f32 %v474, %v1113
        %1115 = vmatmul.bf16.gmra.mxu0 %v538
        %v1116 = vpop.f32.mrf.mxu0
        %v1117 = vadd.f32 %v474, %v1116
        %v1118 = vpop.f32.mrf.mxu0
        %v1119 = vadd.f32 %v474, %v1118
        %1120 = vdwg.mxu0
        %1121 = vmatpush.bf16.msra.mxu0 %v810
        %1122 = vmatpush.bf16.msra.mxu0 %v806
        %1123 = vmatpush.bf16.msra.mxu0 %v802
        %1124 = vmatpush.bf16.msra.mxu0 %v798
        %1125 = vmatpush.bf16.msra.mxu0 %v794
        %1126 = vmatpush.bf16.msra.mxu0 %v790
        %1127 = vmatpush.bf16.msra.mxu0 %v786
        %1128 = vmatpush.bf16.msra.mxu0 %v782
        %1129 = vmatmul.bf16.gmra.mxu0 %v525
        %v1130 = vpop.f32.mrf.mxu0
        %v1131 = vadd.f32 %v1082, %v1130
        %v1132 = vpop.f32.mrf.mxu0
        %v1133 = vadd.f32 %v1084, %v1132
        %1134 = vmatmul.bf16.gmra.mxu0 %v527
        %v1135 = vpop.f32.mrf.mxu0
        %v1136 = vadd.f32 %v1087, %v1135
        %v1137 = vpop.f32.mrf.mxu0
        %v1138 = vadd.f32 %v1089, %v1137
        %1139 = vmatmul.bf16.gmra.mxu0 %v529
        %v1140 = vpop.f32.mrf.mxu0
        %v1141 = vadd.f32 %v1092, %v1140
        %v1142 = vpop.f32.mrf.mxu0
        %v1143 = vadd.f32 %v1094, %v1142
        %1144 = vmatmul.bf16.gmra.mxu0 %v531
        %v1145 = vpop.f32.mrf.mxu0
        %v1146 = vadd.f32 %v1097, %v1145
        %v1147 = vpop.f32.mrf.mxu0
        %v1148 = vadd.f32 %v1099, %v1147
        %1149 = vmatmul.bf16.gmra.mxu0 %v533
        %v1150 = vpop.f32.mrf.mxu0
        %v1151 = vadd.f32 %v1102, %v1150
        %v1152 = vpop.f32.mrf.mxu0
        %v1153 = vadd.f32 %v1104, %v1152
        %1154 = vmatmul.bf16.gmra.mxu0 %v535
        %v1155 = vpop.f32.mrf.mxu0
        %v1156 = vadd.f32 %v1107, %v1155
        %v1157 = vpop.f32.mrf.mxu0
        %v1158 = vadd.f32 %v1109, %v1157
        %1159 = vmatmul.bf16.gmra.mxu0 %v537
        %v1160 = vpop.f32.mrf.mxu0
        %v1161 = vadd.f32 %v1112, %v1160
        %v1162 = vpop.f32.mrf.mxu0
        %v1163 = vadd.f32 %v1114, %v1162
        %1164 = vmatmul.bf16.gmra.mxu0 %v539
        %v1165 = vpop.f32.mrf.mxu0
        %v1166 = vadd.f32 %v1117, %v1165
        %v1167 = vpop.f32.mrf.mxu0
        %v1168 = vadd.f32 %v1119, %v1167
        %1169 = vdwg.mxu0
        %1170 = vmatpush.bf16.msra.mxu0 %v779
        %1171 = vmatpush.bf16.msra.mxu0 %v775
        %1172 = vmatpush.bf16.msra.mxu0 %v771
        %1173 = vmatpush.bf16.msra.mxu0 %v767
        %1174 = vmatpush.bf16.msra.mxu0 %v763
        %1175 = vmatpush.bf16.msra.mxu0 %v759
        %1176 = vmatpush.bf16.msra.mxu0 %v755
        %1177 = vmatpush.bf16.msra.mxu0 %v751
        %1178 = vmatmul.bf16.gmra.mxu0 %v524
        %v1179 = vpop.f32.mrf.mxu0
        %v1180 = vadd.f32 %v475, %v1179
        %v1181 = vpop.f32.mrf.mxu0
        %v1182 = vadd.f32 %v475, %v1181
        %1183 = vmatmul.bf16.gmra.mxu0 %v526
        %v1184 = vpop.f32.mrf.mxu0
        %v1185 = vadd.f32 %v475, %v1184
        %v1186 = vpop.f32.mrf.mxu0
        %v1187 = vadd.f32 %v475, %v1186
        %1188 = vmatmul.bf16.gmra.mxu0 %v528
        %v1189 = vpop.f32.mrf.mxu0
        %v1190 = vadd.f32 %v475, %v1189
        %v1191 = vpop.f32.mrf.mxu0
        %v1192 = vadd.f32 %v475, %v1191
        %1193 = vmatmul.bf16.gmra.mxu0 %v530
        %v1194 = vpop.f32.mrf.mxu0
        %v1195 = vadd.f32 %v475, %v1194
        %v1196 = vpop.f32.mrf.mxu0
        %v1197 = vadd.f32 %v475, %v1196
        %1198 = vmatmul.bf16.gmra.mxu0 %v532
        %v1199 = vpop.f32.mrf.mxu0
        %v1200 = vadd.f32 %v475, %v1199
        %v1201 = vpop.f32.mrf.mxu0
        %v1202 = vadd.f32 %v475, %v1201
        %1203 = vmatmul.bf16.gmra.mxu0 %v534
        %v1204 = vpop.f32.mrf.mxu0
        %v1205 = vadd.f32 %v475, %v1204
        %v1206 = vpop.f32.mrf.mxu0
        %v1207 = vadd.f32 %v475, %v1206
        %1208 = vmatmul.bf16.gmra.mxu0 %v536
        %v1209 = vpop.f32.mrf.mxu0
        %v1210 = vadd.f32 %v475, %v1209
        %v1211 = vpop.f32.mrf.mxu0
        %v1212 = vadd.f32 %v475, %v1211
        %1213 = vmatmul.bf16.gmra.mxu0 %v538
        %v1214 = vpop.f32.mrf.mxu0
        %v1215 = vadd.f32 %v475, %v1214
        %v1216 = vpop.f32.mrf.mxu0
        %v1217 = vadd.f32 %v475, %v1216
        %1218 = vdwg.mxu0
        %1219 = vmatpush.bf16.msra.mxu0 %v811
        %1220 = vmatpush.bf16.msra.mxu0 %v807
        %1221 = vmatpush.bf16.msra.mxu0 %v803
        %1222 = vmatpush.bf16.msra.mxu0 %v799
        %1223 = vmatpush.bf16.msra.mxu0 %v795
        %1224 = vmatpush.bf16.msra.mxu0 %v791
        %1225 = vmatpush.bf16.msra.mxu0 %v787
        %1226 = vmatpush.bf16.msra.mxu0 %v783
        %1227 = vmatmul.bf16.gmra.mxu0 %v525
        %v1228 = vpop.f32.mrf.mxu0
        %v1229 = vadd.f32 %v1180, %v1228
        %v1230 = vpop.f32.mrf.mxu0
        %v1231 = vadd.f32 %v1182, %v1230
        %1232 = vmatmul.bf16.gmra.mxu0 %v527
        %v1233 = vpop.f32.mrf.mxu0
        %v1234 = vadd.f32 %v1185, %v1233
        %v1235 = vpop.f32.mrf.mxu0
        %v1236 = vadd.f32 %v1187, %v1235
        %1237 = vmatmul.bf16.gmra.mxu0 %v529
        %v1238 = vpop.f32.mrf.mxu0
        %v1239 = vadd.f32 %v1190, %v1238
        %v1240 = vpop.f32.mrf.mxu0
        %v1241 = vadd.f32 %v1192, %v1240
        %1242 = vmatmul.bf16.gmra.mxu0 %v531
        %v1243 = vpop.f32.mrf.mxu0
        %v1244 = vadd.f32 %v1195, %v1243
        %v1245 = vpop.f32.mrf.mxu0
        %v1246 = vadd.f32 %v1197, %v1245
        %1247 = vmatmul.bf16.gmra.mxu0 %v533
        %v1248 = vpop.f32.mrf.mxu0
        %v1249 = vadd.f32 %v1200, %v1248
        %v1250 = vpop.f32.mrf.mxu0
        %v1251 = vadd.f32 %v1202, %v1250
        %1252 = vmatmul.bf16.gmra.mxu0 %v535
        %v1253 = vpop.f32.mrf.mxu0
        %v1254 = vadd.f32 %v1205, %v1253
        %v1255 = vpop.f32.mrf.mxu0
        %v1256 = vadd.f32 %v1207, %v1255
        %1257 = vmatmul.bf16.gmra.mxu0 %v537
        %v1258 = vpop.f32.mrf.mxu0
        %v1259 = vadd.f32 %v1210, %v1258
        %v1260 = vpop.f32.mrf.mxu0
        %v1261 = vadd.f32 %v1212, %v1260
        %1262 = vmatmul.bf16.gmra.mxu0 %v539
        %v1263 = vpop.f32.mrf.mxu0
        %v1264 = vadd.f32 %v1215, %v1263
        %v1265 = vpop.f32.mrf.mxu0
        %v1266 = vadd.f32 %v1217, %v1265
        %1267 = vdwg.mxu0
        %v1268 = vmul.f32 %v935, 0.5
        %v1269 = vmul.f32 %v1033, 0.5
        %v1270 = vmul.f32 %v1131, 0.5
        %v1271 = vmul.f32 %v1229, 0.5
        %v1272 = vmul.f32 %v937, 0.5
        %v1273 = vmul.f32 %v1035, 0.5
        %v1274 = vmul.f32 %v1133, 0.5
        %v1275 = vmul.f32 %v1231, 0.5
        %v1276 = vmul.f32 %v940, 0.5
        %v1277 = vmul.f32 %v1038, 0.5
        %v1278 = vmul.f32 %v1136, 0.5
        %v1279 = vmul.f32 %v1234, 0.5
        %v1280 = vmul.f32 %v942, 0.5
        %v1281 = vmul.f32 %v1040, 0.5
        %v1282 = vmul.f32 %v1138, 0.5
        %v1283 = vmul.f32 %v1236, 0.5
        %v1284 = vmul.f32 %v945, 0.5
        %v1285 = vmul.f32 %v1043, 0.5
        %v1286 = vmul.f32 %v1141, 0.5
        %v1287 = vmul.f32 %v1239, 0.5
        %v1288 = vmul.f32 %v947, 0.5
        %v1289 = vmul.f32 %v1045, 0.5
        %v1290 = vmul.f32 %v1143, 0.5
        %v1291 = vmul.f32 %v1241, 0.5
        %v1292 = vmul.f32 %v950, 0.5
        %v1293 = vmul.f32 %v1048, 0.5
        %v1294 = vmul.f32 %v1146, 0.5
        %v1295 = vmul.f32 %v1244, 0.5
        %v1296 = vmul.f32 %v952, 0.5
        %v1297 = vmul.f32 %v1050, 0.5
        %v1298 = vmul.f32 %v1148, 0.5
        %v1299 = vmul.f32 %v1246, 0.5
        %v1300 = vmul.f32 %v955, 0.5
        %v1301 = vmul.f32 %v1053, 0.5
        %v1302 = vmul.f32 %v1151, 0.5
        %v1303 = vmul.f32 %v1249, 0.5
        %v1304 = vmul.f32 %v957, 0.5
        %v1305 = vmul.f32 %v1055, 0.5
        %v1306 = vmul.f32 %v1153, 0.5
        %v1307 = vmul.f32 %v1251, 0.5
        %v1308 = vmul.f32 %v960, 0.5
        %v1309 = vmul.f32 %v1058, 0.5
        %v1310 = vmul.f32 %v1156, 0.5
        %v1311 = vmul.f32 %v1254, 0.5
        %v1312 = vmul.f32 %v962, 0.5
        %v1313 = vmul.f32 %v1060, 0.5
        %v1314 = vmul.f32 %v1158, 0.5
        %v1315 = vmul.f32 %v1256, 0.5
        %v1316 = vmul.f32 %v965, 0.5
        %v1317 = vmul.f32 %v1063, 0.5
        %v1318 = vmul.f32 %v1161, 0.5
        %v1319 = vmul.f32 %v1259, 0.5
        %v1320 = vmul.f32 %v967, 0.5
        %v1321 = vmul.f32 %v1065, 0.5
        %v1322 = vmul.f32 %v1163, 0.5
        %v1323 = vmul.f32 %v1261, 0.5
        %v1324 = vmul.f32 %v970, 0.5
        %v1325 = vmul.f32 %v1068, 0.5
        %v1326 = vmul.f32 %v1166, 0.5
        %v1327 = vmul.f32 %v1264, 0.5
        %v1328 = vmul.f32 %v972, 0.5
        %v1329 = vmul.f32 %v1070, 0.5
        %v1330 = vmul.f32 %v1168, 0.5
        %v1331 = vmul.f32 %v1266, 0.5
        %v1332 = vmul.f32 %v935, 0.70710677
        %v1333 = vmul.f32 %v1033, 0.70710677
        %v1334 = vmul.f32 %v1131, 0.70710677
        %v1335 = vmul.f32 %v1229, 0.70710677
        %v1336 = vmul.f32 %v937, 0.70710677
        %v1337 = vmul.f32 %v1035, 0.70710677
        %v1338 = vmul.f32 %v1133, 0.70710677
        %v1339 = vmul.f32 %v1231, 0.70710677
        %v1340 = vmul.f32 %v940, 0.70710677
        %v1341 = vmul.f32 %v1038, 0.70710677
        %v1342 = vmul.f32 %v1136, 0.70710677
        %v1343 = vmul.f32 %v1234, 0.70710677
        %v1344 = vmul.f32 %v942, 0.70710677
        %v1345 = vmul.f32 %v1040, 0.70710677
        %v1346 = vmul.f32 %v1138, 0.70710677
        %v1347 = vmul.f32 %v1236, 0.70710677
        %v1348 = vmul.f32 %v945, 0.70710677
        %v1349 = vmul.f32 %v1043, 0.70710677
        %v1350 = vmul.f32 %v1141, 0.70710677
        %v1351 = vmul.f32 %v1239, 0.70710677
        %v1352 = vmul.f32 %v947, 0.70710677
        %v1353 = vmul.f32 %v1045, 0.70710677
        %v1354 = vmul.f32 %v1143, 0.70710677
        %v1355 = vmul.f32 %v1241, 0.70710677
        %v1356 = vmul.f32 %v950, 0.70710677
        %v1357 = vmul.f32 %v1048, 0.70710677
        %v1358 = vmul.f32 %v1146, 0.70710677
        %v1359 = vmul.f32 %v1244, 0.70710677
        %v1360 = vmul.f32 %v952, 0.70710677
        %v1361 = vmul.f32 %v1050, 0.70710677
        %v1362 = vmul.f32 %v1148, 0.70710677
        %v1363 = vmul.f32 %v1246, 0.70710677
        %v1364 = vmul.f32 %v955, 0.70710677
        %v1365 = vmul.f32 %v1053, 0.70710677
        %v1366 = vmul.f32 %v1151, 0.70710677
        %v1367 = vmul.f32 %v1249, 0.70710677
        %v1368 = vmul.f32 %v957, 0.70710677
        %v1369 = vmul.f32 %v1055, 0.70710677
        %v1370 = vmul.f32 %v1153, 0.70710677
        %v1371 = vmul.f32 %v1251, 0.70710677
        %v1372 = vmul.f32 %v960, 0.70710677
        %v1373 = vmul.f32 %v1058, 0.70710677
        %v1374 = vmul.f32 %v1156, 0.70710677
        %v1375 = vmul.f32 %v1254, 0.70710677
        %v1376 = vmul.f32 %v962, 0.70710677
        %v1377 = vmul.f32 %v1060, 0.70710677
        %v1378 = vmul.f32 %v1158, 0.70710677
        %v1379 = vmul.f32 %v1256, 0.70710677
        %v1380 = vmul.f32 %v965, 0.70710677
        %v1381 = vmul.f32 %v1063, 0.70710677
        %v1382 = vmul.f32 %v1161, 0.70710677
        %v1383 = vmul.f32 %v1259, 0.70710677
        %v1384 = vmul.f32 %v967, 0.70710677
        %v1385 = vmul.f32 %v1065, 0.70710677
        %v1386 = vmul.f32 %v1163, 0.70710677
        %v1387 = vmul.f32 %v1261, 0.70710677
        %v1388 = vmul.f32 %v970, 0.70710677
        %v1389 = vmul.f32 %v1068, 0.70710677
        %v1390 = vmul.f32 %v1166, 0.70710677
        %v1391 = vmul.f32 %v1264, 0.70710677
        %v1392 = vmul.f32 %v972, 0.70710677
        %v1393 = vmul.f32 %v1070, 0.70710677
        %v1394 = vmul.f32 %v1168, 0.70710677
        %v1395 = vmul.f32 %v1266, 0.70710677
        %v1396 = vand.u32 2147483647, %v1332
        %v1397 = vand.u32 2147483647, %v1333
        %v1398 = vand.u32 2147483647, %v1334
        %v1399 = vand.u32 2147483647, %v1335
        %v1400 = vand.u32 2147483647, %v1336
        %v1401 = vand.u32 2147483647, %v1337
        %v1402 = vand.u32 2147483647, %v1338
        %v1403 = vand.u32 2147483647, %v1339
        %v1404 = vand.u32 2147483647, %v1340
        %v1405 = vand.u32 2147483647, %v1341
        %v1406 = vand.u32 2147483647, %v1342
        %v1407 = vand.u32 2147483647, %v1343
        %v1408 = vand.u32 2147483647, %v1344
        %v1409 = vand.u32 2147483647, %v1345
        %v1410 = vand.u32 2147483647, %v1346
        %v1411 = vand.u32 2147483647, %v1347
        %v1412 = vand.u32 2147483647, %v1348
        %v1413 = vand.u32 2147483647, %v1349
        %v1414 = vand.u32 2147483647, %v1350
        %v1415 = vand.u32 2147483647, %v1351
        %v1416 = vand.u32 2147483647, %v1352
        %v1417 = vand.u32 2147483647, %v1353
        %v1418 = vand.u32 2147483647, %v1354
        %v1419 = vand.u32 2147483647, %v1355
        %v1420 = vand.u32 2147483647, %v1356
        %v1421 = vand.u32 2147483647, %v1357
        %v1422 = vand.u32 2147483647, %v1358
        %v1423 = vand.u32 2147483647, %v1359
        %v1424 = vand.u32 2147483647, %v1360
        %v1425 = vand.u32 2147483647, %v1361
        %v1426 = vand.u32 2147483647, %v1362
        %v1427 = vand.u32 2147483647, %v1363
        %v1428 = vand.u32 2147483647, %v1364
        %v1429 = vand.u32 2147483647, %v1365
        %v1430 = vand.u32 2147483647, %v1366
        %v1431 = vand.u32 2147483647, %v1367
        %v1432 = vand.u32 2147483647, %v1368
        %v1433 = vand.u32 2147483647, %v1369
        %v1434 = vand.u32 2147483647, %v1370
        %v1435 = vand.u32 2147483647, %v1371
        %v1436 = vand.u32 2147483647, %v1372
        %v1437 = vand.u32 2147483647, %v1373
        %v1438 = vand.u32 2147483647, %v1374
        %v1439 = vand.u32 2147483647, %v1375
        %v1440 = vand.u32 2147483647, %v1376
        %v1441 = vand.u32 2147483647, %v1377
        %v1442 = vand.u32 2147483647, %v1378
        %v1443 = vand.u32 2147483647, %v1379
        %v1444 = vand.u32 2147483647, %v1380
        %v1445 = vand.u32 2147483647, %v1381
        %v1446 = vand.u32 2147483647, %v1382
        %v1447 = vand.u32 2147483647, %v1383
        %v1448 = vand.u32 2147483647, %v1384
        %v1449 = vand.u32 2147483647, %v1385
        %v1450 = vand.u32 2147483647, %v1386
        %v1451 = vand.u32 2147483647, %v1387
        %v1452 = vand.u32 2147483647, %v1388
        %v1453 = vand.u32 2147483647, %v1389
        %v1454 = vand.u32 2147483647, %v1390
        %v1455 = vand.u32 2147483647, %v1391
        %v1456 = vand.u32 2147483647, %v1392
        %v1457 = vand.u32 2147483647, %v1393
        %v1458 = vand.u32 2147483647, %v1394
        %v1459 = vand.u32 2147483647, %v1395
        %v1460 = vmul.f32 %v1396, 0.3275911
        %v1461 = vmul.f32 %v1397, 0.3275911
        %v1462 = vmul.f32 %v1398, 0.3275911
        %v1463 = vmul.f32 %v1399, 0.3275911
        %v1464 = vmul.f32 %v1400, 0.3275911
        %v1465 = vmul.f32 %v1401, 0.3275911
        %v1466 = vmul.f32 %v1402, 0.3275911
        %v1467 = vmul.f32 %v1403, 0.3275911
        %v1468 = vmul.f32 %v1404, 0.3275911
        %v1469 = vmul.f32 %v1405, 0.3275911
        %v1470 = vmul.f32 %v1406, 0.3275911
        %v1471 = vmul.f32 %v1407, 0.3275911
        %v1472 = vmul.f32 %v1408, 0.3275911
        %v1473 = vmul.f32 %v1409, 0.3275911
        %v1474 = vmul.f32 %v1410, 0.3275911
        %v1475 = vmul.f32 %v1411, 0.3275911
        %v1476 = vmul.f32 %v1412, 0.3275911
        %v1477 = vmul.f32 %v1413, 0.3275911
        %v1478 = vmul.f32 %v1414, 0.3275911
        %v1479 = vmul.f32 %v1415, 0.3275911
        %v1480 = vmul.f32 %v1416, 0.3275911
        %v1481 = vmul.f32 %v1417, 0.3275911
        %v1482 = vmul.f32 %v1418, 0.3275911
        %v1483 = vmul.f32 %v1419, 0.3275911
        %v1484 = vmul.f32 %v1420, 0.3275911
        %v1485 = vmul.f32 %v1421, 0.3275911
        %v1486 = vmul.f32 %v1422, 0.3275911
        %v1487 = vmul.f32 %v1423, 0.3275911
        %v1488 = vmul.f32 %v1424, 0.3275911
        %v1489 = vmul.f32 %v1425, 0.3275911
        %v1490 = vmul.f32 %v1426, 0.3275911
        %v1491 = vmul.f32 %v1427, 0.3275911
        %v1492 = vmul.f32 %v1428, 0.3275911
        %v1493 = vmul.f32 %v1429, 0.3275911
        %v1494 = vmul.f32 %v1430, 0.3275911
        %v1495 = vmul.f32 %v1431, 0.3275911
        %v1496 = vmul.f32 %v1432, 0.3275911
        %v1497 = vmul.f32 %v1433, 0.3275911
        %v1498 = vmul.f32 %v1434, 0.3275911
        %v1499 = vmul.f32 %v1435, 0.3275911
        %v1500 = vmul.f32 %v1436, 0.3275911
        %v1501 = vmul.f32 %v1437, 0.3275911
        %v1502 = vmul.f32 %v1438, 0.3275911
        %v1503 = vmul.f32 %v1439, 0.3275911
        %v1504 = vmul.f32 %v1440, 0.3275911
        %v1505 = vmul.f32 %v1441, 0.3275911
        %v1506 = vmul.f32 %v1442, 0.3275911
        %v1507 = vmul.f32 %v1443, 0.3275911
        %v1508 = vmul.f32 %v1444, 0.3275911
        %v1509 = vmul.f32 %v1445, 0.3275911
        %v1510 = vmul.f32 %v1446, 0.3275911
        %v1511 = vmul.f32 %v1447, 0.3275911
        %v1512 = vmul.f32 %v1448, 0.3275911
        %v1513 = vmul.f32 %v1449, 0.3275911
        %v1514 = vmul.f32 %v1450, 0.3275911
        %v1515 = vmul.f32 %v1451, 0.3275911
        %v1516 = vmul.f32 %v1452, 0.3275911
        %v1517 = vmul.f32 %v1453, 0.3275911
        %v1518 = vmul.f32 %v1454, 0.3275911
        %v1519 = vmul.f32 %v1455, 0.3275911
        %v1520 = vmul.f32 %v1456, 0.3275911
        %v1521 = vmul.f32 %v1457, 0.3275911
        %v1522 = vmul.f32 %v1458, 0.3275911
        %v1523 = vmul.f32 %v1459, 0.3275911
        %v1524 = vadd.f32 %v1460, 1.0
        %v1525 = vadd.f32 %v1461, 1.0
        %v1526 = vadd.f32 %v1462, 1.0
        %v1527 = vadd.f32 %v1463, 1.0
        %v1528 = vadd.f32 %v1464, 1.0
        %v1529 = vadd.f32 %v1465, 1.0
        %v1530 = vadd.f32 %v1466, 1.0
        %v1531 = vadd.f32 %v1467, 1.0
        %v1532 = vadd.f32 %v1468, 1.0
        %v1533 = vadd.f32 %v1469, 1.0
        %v1534 = vadd.f32 %v1470, 1.0
        %v1535 = vadd.f32 %v1471, 1.0
        %v1536 = vadd.f32 %v1472, 1.0
        %v1537 = vadd.f32 %v1473, 1.0
        %v1538 = vadd.f32 %v1474, 1.0
        %v1539 = vadd.f32 %v1475, 1.0
        %v1540 = vadd.f32 %v1476, 1.0
        %v1541 = vadd.f32 %v1477, 1.0
        %v1542 = vadd.f32 %v1478, 1.0
        %v1543 = vadd.f32 %v1479, 1.0
        %v1544 = vadd.f32 %v1480, 1.0
        %v1545 = vadd.f32 %v1481, 1.0
        %v1546 = vadd.f32 %v1482, 1.0
        %v1547 = vadd.f32 %v1483, 1.0
        %v1548 = vadd.f32 %v1484, 1.0
        %v1549 = vadd.f32 %v1485, 1.0
        %v1550 = vadd.f32 %v1486, 1.0
        %v1551 = vadd.f32 %v1487, 1.0
        %v1552 = vadd.f32 %v1488, 1.0
        %v1553 = vadd.f32 %v1489, 1.0
        %v1554 = vadd.f32 %v1490, 1.0
        %v1555 = vadd.f32 %v1491, 1.0
        %v1556 = vadd.f32 %v1492, 1.0
        %v1557 = vadd.f32 %v1493, 1.0
        %v1558 = vadd.f32 %v1494, 1.0
        %v1559 = vadd.f32 %v1495, 1.0
        %v1560 = vadd.f32 %v1496, 1.0
        %v1561 = vadd.f32 %v1497, 1.0
        %v1562 = vadd.f32 %v1498, 1.0
        %v1563 = vadd.f32 %v1499, 1.0
        %v1564 = vadd.f32 %v1500, 1.0
        %v1565 = vadd.f32 %v1501, 1.0
        %v1566 = vadd.f32 %v1502, 1.0
        %v1567 = vadd.f32 %v1503, 1.0
        %v1568 = vadd.f32 %v1504, 1.0
        %v1569 = vadd.f32 %v1505, 1.0
        %v1570 = vadd.f32 %v1506, 1.0
        %v1571 = vadd.f32 %v1507, 1.0
        %v1572 = vadd.f32 %v1508, 1.0
        %v1573 = vadd.f32 %v1509, 1.0
        %v1574 = vadd.f32 %v1510, 1.0
        %v1575 = vadd.f32 %v1511, 1.0
        %v1576 = vadd.f32 %v1512, 1.0
        %v1577 = vadd.f32 %v1513, 1.0
        %v1578 = vadd.f32 %v1514, 1.0
        %v1579 = vadd.f32 %v1515, 1.0
        %v1580 = vadd.f32 %v1516, 1.0
        %v1581 = vadd.f32 %v1517, 1.0
        %v1582 = vadd.f32 %v1518, 1.0
        %v1583 = vadd.f32 %v1519, 1.0
        %v1584 = vadd.f32 %v1520, 1.0
        %v1585 = vadd.f32 %v1521, 1.0
        %v1586 = vadd.f32 %v1522, 1.0
        %v1587 = vadd.f32 %v1523, 1.0
        %v1588 = vrcp.pop %v1524
        %v1589 = vrcp.pop %v1525
        %v1590 = vrcp.pop %v1526
        %v1591 = vrcp.pop %v1527
        %v1592 = vrcp.pop %v1528
        %v1593 = vrcp.pop %v1529
        %v1594 = vrcp.pop %v1530
        %v1595 = vrcp.pop %v1531
        %v1596 = vrcp.pop %v1532
        %v1597 = vrcp.pop %v1533
        %v1598 = vrcp.pop %v1534
        %v1599 = vrcp.pop %v1535
        %v1600 = vrcp.pop %v1536
        %v1601 = vrcp.pop %v1537
        %v1602 = vrcp.pop %v1538
        %v1603 = vrcp.pop %v1539
        %v1604 = vrcp.pop %v1540
        %v1605 = vrcp.pop %v1541
        %v1606 = vrcp.pop %v1542
        %v1607 = vrcp.pop %v1543
        %v1608 = vrcp.pop %v1544
        %v1609 = vrcp.pop %v1545
        %v1610 = vrcp.pop %v1546
        %v1611 = vrcp.pop %v1547
        %v1612 = vrcp.pop %v1548
        %v1613 = vrcp.pop %v1549
        %v1614 = vrcp.pop %v1550
        %v1615 = vrcp.pop %v1551
        %v1616 = vrcp.pop %v1552
        %v1617 = vrcp.pop %v1553
        %v1618 = vrcp.pop %v1554
        %v1619 = vrcp.pop %v1555
        %v1620 = vrcp.pop %v1556
        %v1621 = vrcp.pop %v1557
        %v1622 = vrcp.pop %v1558
        %v1623 = vrcp.pop %v1559
        %v1624 = vrcp.pop %v1560
        %v1625 = vrcp.pop %v1561
        %v1626 = vrcp.pop %v1562
        %v1627 = vrcp.pop %v1563
        %v1628 = vrcp.pop %v1564
        %v1629 = vrcp.pop %v1565
        %v1630 = vrcp.pop %v1566
        %v1631 = vrcp.pop %v1567
        %v1632 = vrcp.pop %v1568
        %v1633 = vrcp.pop %v1569
        %v1634 = vrcp.pop %v1570
        %v1635 = vrcp.pop %v1571
        %v1636 = vrcp.pop %v1572
        %v1637 = vrcp.pop %v1573
        %v1638 = vrcp.pop %v1574
        %v1639 = vrcp.pop %v1575
        %v1640 = vrcp.pop %v1576
        %v1641 = vrcp.pop %v1577
        %v1642 = vrcp.pop %v1578
        %v1643 = vrcp.pop %v1579
        %v1644 = vrcp.pop %v1580
        %v1645 = vrcp.pop %v1581
        %v1646 = vrcp.pop %v1582
        %v1647 = vrcp.pop %v1583
        %v1648 = vrcp.pop %v1584
        %v1649 = vrcp.pop %v1585
        %v1650 = vrcp.pop %v1586
        %v1651 = vrcp.pop %v1587
        %v1652 = vmul.f32 %v1588, 1.0614054
        %v1653 = vmul.f32 %v1589, 1.0614054
        %v1654 = vmul.f32 %v1590, 1.0614054
        %v1655 = vmul.f32 %v1591, 1.0614054
        %v1656 = vmul.f32 %v1592, 1.0614054
        %v1657 = vmul.f32 %v1593, 1.0614054
        %v1658 = vmul.f32 %v1594, 1.0614054
        %v1659 = vmul.f32 %v1595, 1.0614054
        %v1660 = vmul.f32 %v1596, 1.0614054
        %v1661 = vmul.f32 %v1597, 1.0614054
        %v1662 = vmul.f32 %v1598, 1.0614054
        %v1663 = vmul.f32 %v1599, 1.0614054
        %v1664 = vmul.f32 %v1600, 1.0614054
        %v1665 = vmul.f32 %v1601, 1.0614054
        %v1666 = vmul.f32 %v1602, 1.0614054
        %v1667 = vmul.f32 %v1603, 1.0614054
        %v1668 = vmul.f32 %v1604, 1.0614054
        %v1669 = vmul.f32 %v1605, 1.0614054
        %v1670 = vmul.f32 %v1606, 1.0614054
        %v1671 = vmul.f32 %v1607, 1.0614054
        %v1672 = vmul.f32 %v1608, 1.0614054
        %v1673 = vmul.f32 %v1609, 1.0614054
        %v1674 = vmul.f32 %v1610, 1.0614054
        %v1675 = vmul.f32 %v1611, 1.0614054
        %v1676 = vmul.f32 %v1612, 1.0614054
        %v1677 = vmul.f32 %v1613, 1.0614054
        %v1678 = vmul.f32 %v1614, 1.0614054
        %v1679 = vmul.f32 %v1615, 1.0614054
        %v1680 = vmul.f32 %v1616, 1.0614054
        %v1681 = vmul.f32 %v1617, 1.0614054
        %v1682 = vmul.f32 %v1618, 1.0614054
        %v1683 = vmul.f32 %v1619, 1.0614054
        %v1684 = vmul.f32 %v1620, 1.0614054
        %v1685 = vmul.f32 %v1621, 1.0614054
        %v1686 = vmul.f32 %v1622, 1.0614054
        %v1687 = vmul.f32 %v1623, 1.0614054
        %v1688 = vmul.f32 %v1624, 1.0614054
        %v1689 = vmul.f32 %v1625, 1.0614054
        %v1690 = vmul.f32 %v1626, 1.0614054
        %v1691 = vmul.f32 %v1627, 1.0614054
        %v1692 = vmul.f32 %v1628, 1.0614054
        %v1693 = vmul.f32 %v1629, 1.0614054
        %v1694 = vmul.f32 %v1630, 1.0614054
        %v1695 = vmul.f32 %v1631, 1.0614054
        %v1696 = vmul.f32 %v1632, 1.0614054
        %v1697 = vmul.f32 %v1633, 1.0614054
        %v1698 = vmul.f32 %v1634, 1.0614054
        %v1699 = vmul.f32 %v1635, 1.0614054
        %v1700 = vmul.f32 %v1636, 1.0614054
        %v1701 = vmul.f32 %v1637, 1.0614054
        %v1702 = vmul.f32 %v1638, 1.0614054
        %v1703 = vmul.f32 %v1639, 1.0614054
        %v1704 = vmul.f32 %v1640, 1.0614054
        %v1705 = vmul.f32 %v1641, 1.0614054
        %v1706 = vmul.f32 %v1642, 1.0614054
        %v1707 = vmul.f32 %v1643, 1.0614054
        %v1708 = vmul.f32 %v1644, 1.0614054
        %v1709 = vmul.f32 %v1645, 1.0614054
        %v1710 = vmul.f32 %v1646, 1.0614054
        %v1711 = vmul.f32 %v1647, 1.0614054
        %v1712 = vmul.f32 %v1648, 1.0614054
        %v1713 = vmul.f32 %v1649, 1.0614054
        %v1714 = vmul.f32 %v1650, 1.0614054
        %v1715 = vmul.f32 %v1651, 1.0614054
        %v1716 = vadd.f32 %v1652, -1.4531521
        %v1717 = vadd.f32 %v1653, -1.4531521
        %v1718 = vadd.f32 %v1654, -1.4531521
        %v1719 = vadd.f32 %v1655, -1.4531521
        %v1720 = vadd.f32 %v1656, -1.4531521
        %v1721 = vadd.f32 %v1657, -1.4531521
        %v1722 = vadd.f32 %v1658, -1.4531521
        %v1723 = vadd.f32 %v1659, -1.4531521
        %v1724 = vadd.f32 %v1660, -1.4531521
        %v1725 = vadd.f32 %v1661, -1.4531521
        %v1726 = vadd.f32 %v1662, -1.4531521
        %v1727 = vadd.f32 %v1663, -1.4531521
        %v1728 = vadd.f32 %v1664, -1.4531521
        %v1729 = vadd.f32 %v1665, -1.4531521
        %v1730 = vadd.f32 %v1666, -1.4531521
        %v1731 = vadd.f32 %v1667, -1.4531521
        %v1732 = vadd.f32 %v1668, -1.4531521
        %v1733 = vadd.f32 %v1669, -1.4531521
        %v1734 = vadd.f32 %v1670, -1.4531521
        %v1735 = vadd.f32 %v1671, -1.4531521
        %v1736 = vadd.f32 %v1672, -1.4531521
        %v1737 = vadd.f32 %v1673, -1.4531521
        %v1738 = vadd.f32 %v1674, -1.4531521
        %v1739 = vadd.f32 %v1675, -1.4531521
        %v1740 = vadd.f32 %v1676, -1.4531521
        %v1741 = vadd.f32 %v1677, -1.4531521
        %v1742 = vadd.f32 %v1678, -1.4531521
        %v1743 = vadd.f32 %v1679, -1.4531521
        %v1744 = vadd.f32 %v1680, -1.4531521
        %v1745 = vadd.f32 %v1681, -1.4531521
        %v1746 = vadd.f32 %v1682, -1.4531521
        %v1747 = vadd.f32 %v1683, -1.4531521
        %v1748 = vadd.f32 %v1684, -1.4531521
        %v1749 = vadd.f32 %v1685, -1.4531521
        %v1750 = vadd.f32 %v1686, -1.4531521
        %v1751 = vadd.f32 %v1687, -1.4531521
        %v1752 = vadd.f32 %v1688, -1.4531521
        %v1753 = vadd.f32 %v1689, -1.4531521
        %v1754 = vadd.f32 %v1690, -1.4531521
        %v1755 = vadd.f32 %v1691, -1.4531521
        %v1756 = vadd.f32 %v1692, -1.4531521
        %v1757 = vadd.f32 %v1693, -1.4531521
        %v1758 = vadd.f32 %v1694, -1.4531521
        %v1759 = vadd.f32 %v1695, -1.4531521
        %v1760 = vadd.f32 %v1696, -1.4531521
        %v1761 = vadd.f32 %v1697, -1.4531521
        %v1762 = vadd.f32 %v1698, -1.4531521
        %v1763 = vadd.f32 %v1699, -1.4531521
        %v1764 = vadd.f32 %v1700, -1.4531521
        %v1765 = vadd.f32 %v1701, -1.4531521
        %v1766 = vadd.f32 %v1702, -1.4531521
        %v1767 = vadd.f32 %v1703, -1.4531521
        %v1768 = vadd.f32 %v1704, -1.4531521
        %v1769 = vadd.f32 %v1705, -1.4531521
        %v1770 = vadd.f32 %v1706, -1.4531521
        %v1771 = vadd.f32 %v1707, -1.4531521
        %v1772 = vadd.f32 %v1708, -1.4531521
        %v1773 = vadd.f32 %v1709, -1.4531521
        %v1774 = vadd.f32 %v1710, -1.4531521
        %v1775 = vadd.f32 %v1711, -1.4531521
        %v1776 = vadd.f32 %v1712, -1.4531521
        %v1777 = vadd.f32 %v1713, -1.4531521
        %v1778 = vadd.f32 %v1714, -1.4531521
        %v1779 = vadd.f32 %v1715, -1.4531521
        %v1780 = vmul.f32 %v1716, %v1588
        %v1781 = vmul.f32 %v1717, %v1589
        %v1782 = vmul.f32 %v1718, %v1590
        %v1783 = vmul.f32 %v1719, %v1591
        %v1784 = vmul.f32 %v1720, %v1592
        %v1785 = vmul.f32 %v1721, %v1593
        %v1786 = vmul.f32 %v1722, %v1594
        %v1787 = vmul.f32 %v1723, %v1595
        %v1788 = vmul.f32 %v1724, %v1596
        %v1789 = vmul.f32 %v1725, %v1597
        %v1790 = vmul.f32 %v1726, %v1598
        %v1791 = vmul.f32 %v1727, %v1599
        %v1792 = vmul.f32 %v1728, %v1600
        %v1793 = vmul.f32 %v1729, %v1601
        %v1794 = vmul.f32 %v1730, %v1602
        %v1795 = vmul.f32 %v1731, %v1603
        %v1796 = vmul.f32 %v1732, %v1604
        %v1797 = vmul.f32 %v1733, %v1605
        %v1798 = vmul.f32 %v1734, %v1606
        %v1799 = vmul.f32 %v1735, %v1607
        %v1800 = vmul.f32 %v1736, %v1608
        %v1801 = vmul.f32 %v1737, %v1609
        %v1802 = vmul.f32 %v1738, %v1610
        %v1803 = vmul.f32 %v1739, %v1611
        %v1804 = vmul.f32 %v1740, %v1612
        %v1805 = vmul.f32 %v1741, %v1613
        %v1806 = vmul.f32 %v1742, %v1614
        %v1807 = vmul.f32 %v1743, %v1615
        %v1808 = vmul.f32 %v1744, %v1616
        %v1809 = vmul.f32 %v1745, %v1617
        %v1810 = vmul.f32 %v1746, %v1618
        %v1811 = vmul.f32 %v1747, %v1619
        %v1812 = vmul.f32 %v1748, %v1620
        %v1813 = vmul.f32 %v1749, %v1621
        %v1814 = vmul.f32 %v1750, %v1622
        %v1815 = vmul.f32 %v1751, %v1623
        %v1816 = vmul.f32 %v1752, %v1624
        %v1817 = vmul.f32 %v1753, %v1625
        %v1818 = vmul.f32 %v1754, %v1626
        %v1819 = vmul.f32 %v1755, %v1627
        %v1820 = vmul.f32 %v1756, %v1628
        %v1821 = vmul.f32 %v1757, %v1629
        %v1822 = vmul.f32 %v1758, %v1630
        %v1823 = vmul.f32 %v1759, %v1631
        %v1824 = vmul.f32 %v1760, %v1632
        %v1825 = vmul.f32 %v1761, %v1633
        %v1826 = vmul.f32 %v1762, %v1634
        %v1827 = vmul.f32 %v1763, %v1635
        %v1828 = vmul.f32 %v1764, %v1636
        %v1829 = vmul.f32 %v1765, %v1637
        %v1830 = vmul.f32 %v1766, %v1638
        %v1831 = vmul.f32 %v1767, %v1639
        %v1832 = vmul.f32 %v1768, %v1640
        %v1833 = vmul.f32 %v1769, %v1641
        %v1834 = vmul.f32 %v1770, %v1642
        %v1835 = vmul.f32 %v1771, %v1643
        %v1836 = vmul.f32 %v1772, %v1644
        %v1837 = vmul.f32 %v1773, %v1645
        %v1838 = vmul.f32 %v1774, %v1646
        %v1839 = vmul.f32 %v1775, %v1647
        %v1840 = vmul.f32 %v1776, %v1648
        %v1841 = vmul.f32 %v1777, %v1649
        %v1842 = vmul.f32 %v1778, %v1650
        %v1843 = vmul.f32 %v1779, %v1651
        %v1844 = vadd.f32 %v1780, 1.4214138
        %v1845 = vadd.f32 %v1781, 1.4214138
        %v1846 = vadd.f32 %v1782, 1.4214138
        %v1847 = vadd.f32 %v1783, 1.4214138
        %v1848 = vadd.f32 %v1784, 1.4214138
        %v1849 = vadd.f32 %v1785, 1.4214138
        %v1850 = vadd.f32 %v1786, 1.4214138
        %v1851 = vadd.f32 %v1787, 1.4214138
        %v1852 = vadd.f32 %v1788, 1.4214138
        %v1853 = vadd.f32 %v1789, 1.4214138
        %v1854 = vadd.f32 %v1790, 1.4214138
        %v1855 = vadd.f32 %v1791, 1.4214138
        %v1856 = vadd.f32 %v1792, 1.4214138
        %v1857 = vadd.f32 %v1793, 1.4214138
        %v1858 = vadd.f32 %v1794, 1.4214138
        %v1859 = vadd.f32 %v1795, 1.4214138
        %v1860 = vadd.f32 %v1796, 1.4214138
        %v1861 = vadd.f32 %v1797, 1.4214138
        %v1862 = vadd.f32 %v1798, 1.4214138
        %v1863 = vadd.f32 %v1799, 1.4214138
        %v1864 = vadd.f32 %v1800, 1.4214138
        %v1865 = vadd.f32 %v1801, 1.4214138
        %v1866 = vadd.f32 %v1802, 1.4214138
        %v1867 = vadd.f32 %v1803, 1.4214138
        %v1868 = vadd.f32 %v1804, 1.4214138
        %v1869 = vadd.f32 %v1805, 1.4214138
        %v1870 = vadd.f32 %v1806, 1.4214138
        %v1871 = vadd.f32 %v1807, 1.4214138
        %v1872 = vadd.f32 %v1808, 1.4214138
        %v1873 = vadd.f32 %v1809, 1.4214138
        %v1874 = vadd.f32 %v1810, 1.4214138
        %v1875 = vadd.f32 %v1811, 1.4214138
        %v1876 = vadd.f32 %v1812, 1.4214138
        %v1877 = vadd.f32 %v1813, 1.4214138
        %v1878 = vadd.f32 %v1814, 1.4214138
        %v1879 = vadd.f32 %v1815, 1.4214138
        %v1880 = vadd.f32 %v1816, 1.4214138
        %v1881 = vadd.f32 %v1817, 1.4214138
        %v1882 = vadd.f32 %v1818, 1.4214138
        %v1883 = vadd.f32 %v1819, 1.4214138
        %v1884 = vadd.f32 %v1820, 1.4214138
        %v1885 = vadd.f32 %v1821, 1.4214138
        %v1886 = vadd.f32 %v1822, 1.4214138
        %v1887 = vadd.f32 %v1823, 1.4214138
        %v1888 = vadd.f32 %v1824, 1.4214138
        %v1889 = vadd.f32 %v1825, 1.4214138
        %v1890 = vadd.f32 %v1826, 1.4214138
        %v1891 = vadd.f32 %v1827, 1.4214138
        %v1892 = vadd.f32 %v1828, 1.4214138
        %v1893 = vadd.f32 %v1829, 1.4214138
        %v1894 = vadd.f32 %v1830, 1.4214138
        %v1895 = vadd.f32 %v1831, 1.4214138
        %v1896 = vadd.f32 %v1832, 1.4214138
        %v1897 = vadd.f32 %v1833, 1.4214138
        %v1898 = vadd.f32 %v1834, 1.4214138
        %v1899 = vadd.f32 %v1835, 1.4214138
        %v1900 = vadd.f32 %v1836, 1.4214138
        %v1901 = vadd.f32 %v1837, 1.4214138
        %v1902 = vadd.f32 %v1838, 1.4214138
        %v1903 = vadd.f32 %v1839, 1.4214138
        %v1904 = vadd.f32 %v1840, 1.4214138
        %v1905 = vadd.f32 %v1841, 1.4214138
        %v1906 = vadd.f32 %v1842, 1.4214138
        %v1907 = vadd.f32 %v1843, 1.4214138
        %v1908 = vmul.f32 %v1844, %v1588
        %v1909 = vmul.f32 %v1845, %v1589
        %v1910 = vmul.f32 %v1846, %v1590
        %v1911 = vmul.f32 %v1847, %v1591
        %v1912 = vmul.f32 %v1848, %v1592
        %v1913 = vmul.f32 %v1849, %v1593
        %v1914 = vmul.f32 %v1850, %v1594
        %v1915 = vmul.f32 %v1851, %v1595
        %v1916 = vmul.f32 %v1852, %v1596
        %v1917 = vmul.f32 %v1853, %v1597
        %v1918 = vmul.f32 %v1854, %v1598
        %v1919 = vmul.f32 %v1855, %v1599
        %v1920 = vmul.f32 %v1856, %v1600
        %v1921 = vmul.f32 %v1857, %v1601
        %v1922 = vmul.f32 %v1858, %v1602
        %v1923 = vmul.f32 %v1859, %v1603
        %v1924 = vmul.f32 %v1860, %v1604
        %v1925 = vmul.f32 %v1861, %v1605
        %v1926 = vmul.f32 %v1862, %v1606
        %v1927 = vmul.f32 %v1863, %v1607
        %v1928 = vmul.f32 %v1864, %v1608
        %v1929 = vmul.f32 %v1865, %v1609
        %v1930 = vmul.f32 %v1866, %v1610
        %v1931 = vmul.f32 %v1867, %v1611
        %v1932 = vmul.f32 %v1868, %v1612
        %v1933 = vmul.f32 %v1869, %v1613
        %v1934 = vmul.f32 %v1870, %v1614
        %v1935 = vmul.f32 %v1871, %v1615
        %v1936 = vmul.f32 %v1872, %v1616
        %v1937 = vmul.f32 %v1873, %v1617
        %v1938 = vmul.f32 %v1874, %v1618
        %v1939 = vmul.f32 %v1875, %v1619
        %v1940 = vmul.f32 %v1876, %v1620
        %v1941 = vmul.f32 %v1877, %v1621
        %v1942 = vmul.f32 %v1878, %v1622
        %v1943 = vmul.f32 %v1879, %v1623
        %v1944 = vmul.f32 %v1880, %v1624
        %v1945 = vmul.f32 %v1881, %v1625
        %v1946 = vmul.f32 %v1882, %v1626
        %v1947 = vmul.f32 %v1883, %v1627
        %v1948 = vmul.f32 %v1884, %v1628
        %v1949 = vmul.f32 %v1885, %v1629
        %v1950 = vmul.f32 %v1886, %v1630
        %v1951 = vmul.f32 %v1887, %v1631
        %v1952 = vmul.f32 %v1888, %v1632
        %v1953 = vmul.f32 %v1889, %v1633
        %v1954 = vmul.f32 %v1890, %v1634
        %v1955 = vmul.f32 %v1891, %v1635
        %v1956 = vmul.f32 %v1892, %v1636
        %v1957 = vmul.f32 %v1893, %v1637
        %v1958 = vmul.f32 %v1894, %v1638
        %v1959 = vmul.f32 %v1895, %v1639
        %v1960 = vmul.f32 %v1896, %v1640
        %v1961 = vmul.f32 %v1897, %v1641
        %v1962 = vmul.f32 %v1898, %v1642
        %v1963 = vmul.f32 %v1899, %v1643
        %v1964 = vmul.f32 %v1900, %v1644
        %v1965 = vmul.f32 %v1901, %v1645
        %v1966 = vmul.f32 %v1902, %v1646
        %v1967 = vmul.f32 %v1903, %v1647
        %v1968 = vmul.f32 %v1904, %v1648
        %v1969 = vmul.f32 %v1905, %v1649
        %v1970 = vmul.f32 %v1906, %v1650
        %v1971 = vmul.f32 %v1907, %v1651
        %v1972 = vadd.f32 %v1908, -0.28449672
        %v1973 = vadd.f32 %v1909, -0.28449672
        %v1974 = vadd.f32 %v1910, -0.28449672
        %v1975 = vadd.f32 %v1911, -0.28449672
        %v1976 = vadd.f32 %v1912, -0.28449672
        %v1977 = vadd.f32 %v1913, -0.28449672
        %v1978 = vadd.f32 %v1914, -0.28449672
        %v1979 = vadd.f32 %v1915, -0.28449672
        %v1980 = vadd.f32 %v1916, -0.28449672
        %v1981 = vadd.f32 %v1917, -0.28449672
        %v1982 = vadd.f32 %v1918, -0.28449672
        %v1983 = vadd.f32 %v1919, -0.28449672
        %v1984 = vadd.f32 %v1920, -0.28449672
        %v1985 = vadd.f32 %v1921, -0.28449672
        %v1986 = vadd.f32 %v1922, -0.28449672
        %v1987 = vadd.f32 %v1923, -0.28449672
        %v1988 = vadd.f32 %v1924, -0.28449672
        %v1989 = vadd.f32 %v1925, -0.28449672
        %v1990 = vadd.f32 %v1926, -0.28449672
        %v1991 = vadd.f32 %v1927, -0.28449672
        %v1992 = vadd.f32 %v1928, -0.28449672
        %v1993 = vadd.f32 %v1929, -0.28449672
        %v1994 = vadd.f32 %v1930, -0.28449672
        %v1995 = vadd.f32 %v1931, -0.28449672
        %v1996 = vadd.f32 %v1932, -0.28449672
        %v1997 = vadd.f32 %v1933, -0.28449672
        %v1998 = vadd.f32 %v1934, -0.28449672
        %v1999 = vadd.f32 %v1935, -0.28449672
        %v2000 = vadd.f32 %v1936, -0.28449672
        %v2001 = vadd.f32 %v1937, -0.28449672
        %v2002 = vadd.f32 %v1938, -0.28449672
        %v2003 = vadd.f32 %v1939, -0.28449672
        %v2004 = vadd.f32 %v1940, -0.28449672
        %v2005 = vadd.f32 %v1941, -0.28449672
        %v2006 = vadd.f32 %v1942, -0.28449672
        %v2007 = vadd.f32 %v1943, -0.28449672
        %v2008 = vadd.f32 %v1944, -0.28449672
        %v2009 = vadd.f32 %v1945, -0.28449672
        %v2010 = vadd.f32 %v1946, -0.28449672
        %v2011 = vadd.f32 %v1947, -0.28449672
        %v2012 = vadd.f32 %v1948, -0.28449672
        %v2013 = vadd.f32 %v1949, -0.28449672
        %v2014 = vadd.f32 %v1950, -0.28449672
        %v2015 = vadd.f32 %v1951, -0.28449672
        %v2016 = vadd.f32 %v1952, -0.28449672
        %v2017 = vadd.f32 %v1953, -0.28449672
        %v2018 = vadd.f32 %v1954, -0.28449672
        %v2019 = vadd.f32 %v1955, -0.28449672
        %v2020 = vadd.f32 %v1956, -0.28449672
        %v2021 = vadd.f32 %v1957, -0.28449672
        %v2022 = vadd.f32 %v1958, -0.28449672
        %v2023 = vadd.f32 %v1959, -0.28449672
        %v2024 = vadd.f32 %v1960, -0.28449672
        %v2025 = vadd.f32 %v1961, -0.28449672
        %v2026 = vadd.f32 %v1962, -0.28449672
        %v2027 = vadd.f32 %v1963, -0.28449672
        %v2028 = vadd.f32 %v1964, -0.28449672
        %v2029 = vadd.f32 %v1965, -0.28449672
        %v2030 = vadd.f32 %v1966, -0.28449672
        %v2031 = vadd.f32 %v1967, -0.28449672
        %v2032 = vadd.f32 %v1968, -0.28449672
        %v2033 = vadd.f32 %v1969, -0.28449672
        %v2034 = vadd.f32 %v1970, -0.28449672
        %v2035 = vadd.f32 %v1971, -0.28449672
        %v2036 = vmul.f32 %v1972, %v1588
        %v2037 = vmul.f32 %v1973, %v1589
        %v2038 = vmul.f32 %v1974, %v1590
        %v2039 = vmul.f32 %v1975, %v1591
        %v2040 = vmul.f32 %v1976, %v1592
        %v2041 = vmul.f32 %v1977, %v1593
        %v2042 = vmul.f32 %v1978, %v1594
        %v2043 = vmul.f32 %v1979, %v1595
        %v2044 = vmul.f32 %v1980, %v1596
        %v2045 = vmul.f32 %v1981, %v1597
        %v2046 = vmul.f32 %v1982, %v1598
        %v2047 = vmul.f32 %v1983, %v1599
        %v2048 = vmul.f32 %v1984, %v1600
        %v2049 = vmul.f32 %v1985, %v1601
        %v2050 = vmul.f32 %v1986, %v1602
        %v2051 = vmul.f32 %v1987, %v1603
        %v2052 = vmul.f32 %v1988, %v1604
        %v2053 = vmul.f32 %v1989, %v1605
        %v2054 = vmul.f32 %v1990, %v1606
        %v2055 = vmul.f32 %v1991, %v1607
        %v2056 = vmul.f32 %v1992, %v1608
        %v2057 = vmul.f32 %v1993, %v1609
        %v2058 = vmul.f32 %v1994, %v1610
        %v2059 = vmul.f32 %v1995, %v1611
        %v2060 = vmul.f32 %v1996, %v1612
        %v2061 = vmul.f32 %v1997, %v1613
        %v2062 = vmul.f32 %v1998, %v1614
        %v2063 = vmul.f32 %v1999, %v1615
        %v2064 = vmul.f32 %v2000, %v1616
        %v2065 = vmul.f32 %v2001, %v1617
        %v2066 = vmul.f32 %v2002, %v1618
        %v2067 = vmul.f32 %v2003, %v1619
        %v2068 = vmul.f32 %v2004, %v1620
        %v2069 = vmul.f32 %v2005, %v1621
        %v2070 = vmul.f32 %v2006, %v1622
        %v2071 = vmul.f32 %v2007, %v1623
        %v2072 = vmul.f32 %v2008, %v1624
        %v2073 = vmul.f32 %v2009, %v1625
        %v2074 = vmul.f32 %v2010, %v1626
        %v2075 = vmul.f32 %v2011, %v1627
        %v2076 = vmul.f32 %v2012, %v1628
        %v2077 = vmul.f32 %v2013, %v1629
        %v2078 = vmul.f32 %v2014, %v1630
        %v2079 = vmul.f32 %v2015, %v1631
        %v2080 = vmul.f32 %v2016, %v1632
        %v2081 = vmul.f32 %v2017, %v1633
        %v2082 = vmul.f32 %v2018, %v1634
        %v2083 = vmul.f32 %v2019, %v1635
        %v2084 = vmul.f32 %v2020, %v1636
        %v2085 = vmul.f32 %v2021, %v1637
        %v2086 = vmul.f32 %v2022, %v1638
        %v2087 = vmul.f32 %v2023, %v1639
        %v2088 = vmul.f32 %v2024, %v1640
        %v2089 = vmul.f32 %v2025, %v1641
        %v2090 = vmul.f32 %v2026, %v1642
        %v2091 = vmul.f32 %v2027, %v1643
        %v2092 = vmul.f32 %v2028, %v1644
        %v2093 = vmul.f32 %v2029, %v1645
        %v2094 = vmul.f32 %v2030, %v1646
        %v2095 = vmul.f32 %v2031, %v1647
        %v2096 = vmul.f32 %v2032, %v1648
        %v2097 = vmul.f32 %v2033, %v1649
        %v2098 = vmul.f32 %v2034, %v1650
        %v2099 = vmul.f32 %v2035, %v1651
        %v2100 = vadd.f32 %v2036, 0.2548296
        %v2101 = vadd.f32 %v2037, 0.2548296
        %v2102 = vadd.f32 %v2038, 0.2548296
        %v2103 = vadd.f32 %v2039, 0.2548296
        %v2104 = vadd.f32 %v2040, 0.2548296
        %v2105 = vadd.f32 %v2041, 0.2548296
        %v2106 = vadd.f32 %v2042, 0.2548296
        %v2107 = vadd.f32 %v2043, 0.2548296
        %v2108 = vadd.f32 %v2044, 0.2548296
        %v2109 = vadd.f32 %v2045, 0.2548296
        %v2110 = vadd.f32 %v2046, 0.2548296
        %v2111 = vadd.f32 %v2047, 0.2548296
        %v2112 = vadd.f32 %v2048, 0.2548296
        %v2113 = vadd.f32 %v2049, 0.2548296
        %v2114 = vadd.f32 %v2050, 0.2548296
        %v2115 = vadd.f32 %v2051, 0.2548296
        %v2116 = vadd.f32 %v2052, 0.2548296
        %v2117 = vadd.f32 %v2053, 0.2548296
        %v2118 = vadd.f32 %v2054, 0.2548296
        %v2119 = vadd.f32 %v2055, 0.2548296
        %v2120 = vadd.f32 %v2056, 0.2548296
        %v2121 = vadd.f32 %v2057, 0.2548296
        %v2122 = vadd.f32 %v2058, 0.2548296
        %v2123 = vadd.f32 %v2059, 0.2548296
        %v2124 = vadd.f32 %v2060, 0.2548296
        %v2125 = vadd.f32 %v2061, 0.2548296
        %v2126 = vadd.f32 %v2062, 0.2548296
        %v2127 = vadd.f32 %v2063, 0.2548296
        %v2128 = vadd.f32 %v2064, 0.2548296
        %v2129 = vadd.f32 %v2065, 0.2548296
        %v2130 = vadd.f32 %v2066, 0.2548296
        %v2131 = vadd.f32 %v2067, 0.2548296
        %v2132 = vadd.f32 %v2068, 0.2548296
        %v2133 = vadd.f32 %v2069, 0.2548296
        %v2134 = vadd.f32 %v2070, 0.2548296
        %v2135 = vadd.f32 %v2071, 0.2548296
        %v2136 = vadd.f32 %v2072, 0.2548296
        %v2137 = vadd.f32 %v2073, 0.2548296
        %v2138 = vadd.f32 %v2074, 0.2548296
        %v2139 = vadd.f32 %v2075, 0.2548296
        %v2140 = vadd.f32 %v2076, 0.2548296
        %v2141 = vadd.f32 %v2077, 0.2548296
        %v2142 = vadd.f32 %v2078, 0.2548296
        %v2143 = vadd.f32 %v2079, 0.2548296
        %v2144 = vadd.f32 %v2080, 0.2548296
        %v2145 = vadd.f32 %v2081, 0.2548296
        %v2146 = vadd.f32 %v2082, 0.2548296
        %v2147 = vadd.f32 %v2083, 0.2548296
        %v2148 = vadd.f32 %v2084, 0.2548296
        %v2149 = vadd.f32 %v2085, 0.2548296
        %v2150 = vadd.f32 %v2086, 0.2548296
        %v2151 = vadd.f32 %v2087, 0.2548296
        %v2152 = vadd.f32 %v2088, 0.2548296
        %v2153 = vadd.f32 %v2089, 0.2548296
        %v2154 = vadd.f32 %v2090, 0.2548296
        %v2155 = vadd.f32 %v2091, 0.2548296
        %v2156 = vadd.f32 %v2092, 0.2548296
        %v2157 = vadd.f32 %v2093, 0.2548296
        %v2158 = vadd.f32 %v2094, 0.2548296
        %v2159 = vadd.f32 %v2095, 0.2548296
        %v2160 = vadd.f32 %v2096, 0.2548296
        %v2161 = vadd.f32 %v2097, 0.2548296
        %v2162 = vadd.f32 %v2098, 0.2548296
        %v2163 = vadd.f32 %v2099, 0.2548296
        %v2164 = vmul.f32 %v2100, %v1588
        %v2165 = vmul.f32 %v2101, %v1589
        %v2166 = vmul.f32 %v2102, %v1590
        %v2167 = vmul.f32 %v2103, %v1591
        %v2168 = vmul.f32 %v2104, %v1592
        %v2169 = vmul.f32 %v2105, %v1593
        %v2170 = vmul.f32 %v2106, %v1594
        %v2171 = vmul.f32 %v2107, %v1595
        %v2172 = vmul.f32 %v2108, %v1596
        %v2173 = vmul.f32 %v2109, %v1597
        %v2174 = vmul.f32 %v2110, %v1598
        %v2175 = vmul.f32 %v2111, %v1599
        %v2176 = vmul.f32 %v2112, %v1600
        %v2177 = vmul.f32 %v2113, %v1601
        %v2178 = vmul.f32 %v2114, %v1602
        %v2179 = vmul.f32 %v2115, %v1603
        %v2180 = vmul.f32 %v2116, %v1604
        %v2181 = vmul.f32 %v2117, %v1605
        %v2182 = vmul.f32 %v2118, %v1606
        %v2183 = vmul.f32 %v2119, %v1607
        %v2184 = vmul.f32 %v2120, %v1608
        %v2185 = vmul.f32 %v2121, %v1609
        %v2186 = vmul.f32 %v2122, %v1610
        %v2187 = vmul.f32 %v2123, %v1611
        %v2188 = vmul.f32 %v2124, %v1612
        %v2189 = vmul.f32 %v2125, %v1613
        %v2190 = vmul.f32 %v2126, %v1614
        %v2191 = vmul.f32 %v2127, %v1615
        %v2192 = vmul.f32 %v2128, %v1616
        %v2193 = vmul.f32 %v2129, %v1617
        %v2194 = vmul.f32 %v2130, %v1618
        %v2195 = vmul.f32 %v2131, %v1619
        %v2196 = vmul.f32 %v2132, %v1620
        %v2197 = vmul.f32 %v2133, %v1621
        %v2198 = vmul.f32 %v2134, %v1622
        %v2199 = vmul.f32 %v2135, %v1623
        %v2200 = vmul.f32 %v2136, %v1624
        %v2201 = vmul.f32 %v2137, %v1625
        %v2202 = vmul.f32 %v2138, %v1626
        %v2203 = vmul.f32 %v2139, %v1627
        %v2204 = vmul.f32 %v2140, %v1628
        %v2205 = vmul.f32 %v2141, %v1629
        %v2206 = vmul.f32 %v2142, %v1630
        %v2207 = vmul.f32 %v2143, %v1631
        %v2208 = vmul.f32 %v2144, %v1632
        %v2209 = vmul.f32 %v2145, %v1633
        %v2210 = vmul.f32 %v2146, %v1634
        %v2211 = vmul.f32 %v2147, %v1635
        %v2212 = vmul.f32 %v2148, %v1636
        %v2213 = vmul.f32 %v2149, %v1637
        %v2214 = vmul.f32 %v2150, %v1638
        %v2215 = vmul.f32 %v2151, %v1639
        %v2216 = vmul.f32 %v2152, %v1640
        %v2217 = vmul.f32 %v2153, %v1641
        %v2218 = vmul.f32 %v2154, %v1642
        %v2219 = vmul.f32 %v2155, %v1643
        %v2220 = vmul.f32 %v2156, %v1644
        %v2221 = vmul.f32 %v2157, %v1645
        %v2222 = vmul.f32 %v2158, %v1646
        %v2223 = vmul.f32 %v2159, %v1647
        %v2224 = vmul.f32 %v2160, %v1648
        %v2225 = vmul.f32 %v2161, %v1649
        %v2226 = vmul.f32 %v2162, %v1650
        %v2227 = vmul.f32 %v2163, %v1651
        %v2228 = vsub.f32 0.0, %v1396
        %v2229 = vsub.f32 0.0, %v1397
        %v2230 = vsub.f32 0.0, %v1398
        %v2231 = vsub.f32 0.0, %v1399
        %v2232 = vsub.f32 0.0, %v1400
        %v2233 = vsub.f32 0.0, %v1401
        %v2234 = vsub.f32 0.0, %v1402
        %v2235 = vsub.f32 0.0, %v1403
        %v2236 = vsub.f32 0.0, %v1404
        %v2237 = vsub.f32 0.0, %v1405
        %v2238 = vsub.f32 0.0, %v1406
        %v2239 = vsub.f32 0.0, %v1407
        %v2240 = vsub.f32 0.0, %v1408
        %v2241 = vsub.f32 0.0, %v1409
        %v2242 = vsub.f32 0.0, %v1410
        %v2243 = vsub.f32 0.0, %v1411
        %v2244 = vsub.f32 0.0, %v1412
        %v2245 = vsub.f32 0.0, %v1413
        %v2246 = vsub.f32 0.0, %v1414
        %v2247 = vsub.f32 0.0, %v1415
        %v2248 = vsub.f32 0.0, %v1416
        %v2249 = vsub.f32 0.0, %v1417
        %v2250 = vsub.f32 0.0, %v1418
        %v2251 = vsub.f32 0.0, %v1419
        %v2252 = vsub.f32 0.0, %v1420
        %v2253 = vsub.f32 0.0, %v1421
        %v2254 = vsub.f32 0.0, %v1422
        %v2255 = vsub.f32 0.0, %v1423
        %v2256 = vsub.f32 0.0, %v1424
        %v2257 = vsub.f32 0.0, %v1425
        %v2258 = vsub.f32 0.0, %v1426
        %v2259 = vsub.f32 0.0, %v1427
        %v2260 = vsub.f32 0.0, %v1428
        %v2261 = vsub.f32 0.0, %v1429
        %v2262 = vsub.f32 0.0, %v1430
        %v2263 = vsub.f32 0.0, %v1431
        %v2264 = vsub.f32 0.0, %v1432
        %v2265 = vsub.f32 0.0, %v1433
        %v2266 = vsub.f32 0.0, %v1434
        %v2267 = vsub.f32 0.0, %v1435
        %v2268 = vsub.f32 0.0, %v1436
        %v2269 = vsub.f32 0.0, %v1437
        %v2270 = vsub.f32 0.0, %v1438
        %v2271 = vsub.f32 0.0, %v1439
        %v2272 = vsub.f32 0.0, %v1440
        %v2273 = vsub.f32 0.0, %v1441
        %v2274 = vsub.f32 0.0, %v1442
        %v2275 = vsub.f32 0.0, %v1443
        %v2276 = vsub.f32 0.0, %v1444
        %v2277 = vsub.f32 0.0, %v1445
        %v2278 = vsub.f32 0.0, %v1446
        %v2279 = vsub.f32 0.0, %v1447
        %v2280 = vsub.f32 0.0, %v1448
        %v2281 = vsub.f32 0.0, %v1449
        %v2282 = vsub.f32 0.0, %v1450
        %v2283 = vsub.f32 0.0, %v1451
        %v2284 = vsub.f32 0.0, %v1452
        %v2285 = vsub.f32 0.0, %v1453
        %v2286 = vsub.f32 0.0, %v1454
        %v2287 = vsub.f32 0.0, %v1455
        %v2288 = vsub.f32 0.0, %v1456
        %v2289 = vsub.f32 0.0, %v1457
        %v2290 = vsub.f32 0.0, %v1458
        %v2291 = vsub.f32 0.0, %v1459
        %v2292 = vmul.f32 %v2228, %v1396
        %v2293 = vmul.f32 %v2229, %v1397
        %v2294 = vmul.f32 %v2230, %v1398
        %v2295 = vmul.f32 %v2231, %v1399
        %v2296 = vmul.f32 %v2232, %v1400
        %v2297 = vmul.f32 %v2233, %v1401
        %v2298 = vmul.f32 %v2234, %v1402
        %v2299 = vmul.f32 %v2235, %v1403
        %v2300 = vmul.f32 %v2236, %v1404
        %v2301 = vmul.f32 %v2237, %v1405
        %v2302 = vmul.f32 %v2238, %v1406
        %v2303 = vmul.f32 %v2239, %v1407
        %v2304 = vmul.f32 %v2240, %v1408
        %v2305 = vmul.f32 %v2241, %v1409
        %v2306 = vmul.f32 %v2242, %v1410
        %v2307 = vmul.f32 %v2243, %v1411
        %v2308 = vmul.f32 %v2244, %v1412
        %v2309 = vmul.f32 %v2245, %v1413
        %v2310 = vmul.f32 %v2246, %v1414
        %v2311 = vmul.f32 %v2247, %v1415
        %v2312 = vmul.f32 %v2248, %v1416
        %v2313 = vmul.f32 %v2249, %v1417
        %v2314 = vmul.f32 %v2250, %v1418
        %v2315 = vmul.f32 %v2251, %v1419
        %v2316 = vmul.f32 %v2252, %v1420
        %v2317 = vmul.f32 %v2253, %v1421
        %v2318 = vmul.f32 %v2254, %v1422
        %v2319 = vmul.f32 %v2255, %v1423
        %v2320 = vmul.f32 %v2256, %v1424
        %v2321 = vmul.f32 %v2257, %v1425
        %v2322 = vmul.f32 %v2258, %v1426
        %v2323 = vmul.f32 %v2259, %v1427
        %v2324 = vmul.f32 %v2260, %v1428
        %v2325 = vmul.f32 %v2261, %v1429
        %v2326 = vmul.f32 %v2262, %v1430
        %v2327 = vmul.f32 %v2263, %v1431
        %v2328 = vmul.f32 %v2264, %v1432
        %v2329 = vmul.f32 %v2265, %v1433
        %v2330 = vmul.f32 %v2266, %v1434
        %v2331 = vmul.f32 %v2267, %v1435
        %v2332 = vmul.f32 %v2268, %v1436
        %v2333 = vmul.f32 %v2269, %v1437
        %v2334 = vmul.f32 %v2270, %v1438
        %v2335 = vmul.f32 %v2271, %v1439
        %v2336 = vmul.f32 %v2272, %v1440
        %v2337 = vmul.f32 %v2273, %v1441
        %v2338 = vmul.f32 %v2274, %v1442
        %v2339 = vmul.f32 %v2275, %v1443
        %v2340 = vmul.f32 %v2276, %v1444
        %v2341 = vmul.f32 %v2277, %v1445
        %v2342 = vmul.f32 %v2278, %v1446
        %v2343 = vmul.f32 %v2279, %v1447
        %v2344 = vmul.f32 %v2280, %v1448
        %v2345 = vmul.f32 %v2281, %v1449
        %v2346 = vmul.f32 %v2282, %v1450
        %v2347 = vmul.f32 %v2283, %v1451
        %v2348 = vmul.f32 %v2284, %v1452
        %v2349 = vmul.f32 %v2285, %v1453
        %v2350 = vmul.f32 %v2286, %v1454
        %v2351 = vmul.f32 %v2287, %v1455
        %v2352 = vmul.f32 %v2288, %v1456
        %v2353 = vmul.f32 %v2289, %v1457
        %v2354 = vmul.f32 %v2290, %v1458
        %v2355 = vmul.f32 %v2291, %v1459
        %v2356 = vmul.f32 %v2292, 1.442695
        %v2357 = vpow.pop %v2356
        %v2358 = vmul.f32 %v2293, 1.442695
        %v2359 = vpow.pop %v2358
        %v2360 = vmul.f32 %v2294, 1.442695
        %v2361 = vpow.pop %v2360
        %v2362 = vmul.f32 %v2295, 1.442695
        %v2363 = vpow.pop %v2362
        %v2364 = vmul.f32 %v2296, 1.442695
        %v2365 = vpow.pop %v2364
        %v2366 = vmul.f32 %v2297, 1.442695
        %v2367 = vpow.pop %v2366
        %v2368 = vmul.f32 %v2298, 1.442695
        %v2369 = vpow.pop %v2368
        %v2370 = vmul.f32 %v2299, 1.442695
        %v2371 = vpow.pop %v2370
        %v2372 = vmul.f32 %v2300, 1.442695
        %v2373 = vpow.pop %v2372
        %v2374 = vmul.f32 %v2301, 1.442695
        %v2375 = vpow.pop %v2374
        %v2376 = vmul.f32 %v2302, 1.442695
        %v2377 = vpow.pop %v2376
        %v2378 = vmul.f32 %v2303, 1.442695
        %v2379 = vpow.pop %v2378
        %v2380 = vmul.f32 %v2304, 1.442695
        %v2381 = vpow.pop %v2380
        %v2382 = vmul.f32 %v2305, 1.442695
        %v2383 = vpow.pop %v2382
        %v2384 = vmul.f32 %v2306, 1.442695
        %v2385 = vpow.pop %v2384
        %v2386 = vmul.f32 %v2307, 1.442695
        %v2387 = vpow.pop %v2386
        %v2388 = vmul.f32 %v2308, 1.442695
        %v2389 = vpow.pop %v2388
        %v2390 = vmul.f32 %v2309, 1.442695
        %v2391 = vpow.pop %v2390
        %v2392 = vmul.f32 %v2310, 1.442695
        %v2393 = vpow.pop %v2392
        %v2394 = vmul.f32 %v2311, 1.442695
        %v2395 = vpow.pop %v2394
        %v2396 = vmul.f32 %v2312, 1.442695
        %v2397 = vpow.pop %v2396
        %v2398 = vmul.f32 %v2313, 1.442695
        %v2399 = vpow.pop %v2398
        %v2400 = vmul.f32 %v2314, 1.442695
        %v2401 = vpow.pop %v2400
        %v2402 = vmul.f32 %v2315, 1.442695
        %v2403 = vpow.pop %v2402
        %v2404 = vmul.f32 %v2316, 1.442695
        %v2405 = vpow.pop %v2404
        %v2406 = vmul.f32 %v2317, 1.442695
        %v2407 = vpow.pop %v2406
        %v2408 = vmul.f32 %v2318, 1.442695
        %v2409 = vpow.pop %v2408
        %v2410 = vmul.f32 %v2319, 1.442695
        %v2411 = vpow.pop %v2410
        %v2412 = vmul.f32 %v2320, 1.442695
        %v2413 = vpow.pop %v2412
        %v2414 = vmul.f32 %v2321, 1.442695
        %v2415 = vpow.pop %v2414
        %v2416 = vmul.f32 %v2322, 1.442695
        %v2417 = vpow.pop %v2416
        %v2418 = vmul.f32 %v2323, 1.442695
        %v2419 = vpow.pop %v2418
        %v2420 = vmul.f32 %v2324, 1.442695
        %v2421 = vpow.pop %v2420
        %v2422 = vmul.f32 %v2325, 1.442695
        %v2423 = vpow.pop %v2422
        %v2424 = vmul.f32 %v2326, 1.442695
        %v2425 = vpow.pop %v2424
        %v2426 = vmul.f32 %v2327, 1.442695
        %v2427 = vpow.pop %v2426
        %v2428 = vmul.f32 %v2328, 1.442695
        %v2429 = vpow.pop %v2428
        %v2430 = vmul.f32 %v2329, 1.442695
        %v2431 = vpow.pop %v2430
        %v2432 = vmul.f32 %v2330, 1.442695
        %v2433 = vpow.pop %v2432
        %v2434 = vmul.f32 %v2331, 1.442695
        %v2435 = vpow.pop %v2434
        %v2436 = vmul.f32 %v2332, 1.442695
        %v2437 = vpow.pop %v2436
        %v2438 = vmul.f32 %v2333, 1.442695
        %v2439 = vpow.pop %v2438
        %v2440 = vmul.f32 %v2334, 1.442695
        %v2441 = vpow.pop %v2440
        %v2442 = vmul.f32 %v2335, 1.442695
        %v2443 = vpow.pop %v2442
        %v2444 = vmul.f32 %v2336, 1.442695
        %v2445 = vpow.pop %v2444
        %v2446 = vmul.f32 %v2337, 1.442695
        %v2447 = vpow.pop %v2446
        %v2448 = vmul.f32 %v2338, 1.442695
        %v2449 = vpow.pop %v2448
        %v2450 = vmul.f32 %v2339, 1.442695
        %v2451 = vpow.pop %v2450
        %v2452 = vmul.f32 %v2340, 1.442695
        %v2453 = vpow.pop %v2452
        %v2454 = vmul.f32 %v2341, 1.442695
        %v2455 = vpow.pop %v2454
        %v2456 = vmul.f32 %v2342, 1.442695
        %v2457 = vpow.pop %v2456
        %v2458 = vmul.f32 %v2343, 1.442695
        %v2459 = vpow.pop %v2458
        %v2460 = vmul.f32 %v2344, 1.442695
        %v2461 = vpow.pop %v2460
        %v2462 = vmul.f32 %v2345, 1.442695
        %v2463 = vpow.pop %v2462
        %v2464 = vmul.f32 %v2346, 1.442695
        %v2465 = vpow.pop %v2464
        %v2466 = vmul.f32 %v2347, 1.442695
        %v2467 = vpow.pop %v2466
        %v2468 = vmul.f32 %v2348, 1.442695
        %v2469 = vpow.pop %v2468
        %v2470 = vmul.f32 %v2349, 1.442695
        %v2471 = vpow.pop %v2470
        %v2472 = vmul.f32 %v2350, 1.442695
        %v2473 = vpow.pop %v2472
        %v2474 = vmul.f32 %v2351, 1.442695
        %v2475 = vpow.pop %v2474
        %v2476 = vmul.f32 %v2352, 1.442695
        %v2477 = vpow.pop %v2476
        %v2478 = vmul.f32 %v2353, 1.442695
        %v2479 = vpow.pop %v2478
        %v2480 = vmul.f32 %v2354, 1.442695
        %v2481 = vpow.pop %v2480
        %v2482 = vmul.f32 %v2355, 1.442695
        %v2483 = vpow.pop %v2482
        %v2484 = vmul.f32 %v2164, %v2357
        %v2485 = vmul.f32 %v2165, %v2359
        %v2486 = vmul.f32 %v2166, %v2361
        %v2487 = vmul.f32 %v2167, %v2363
        %v2488 = vmul.f32 %v2168, %v2365
        %v2489 = vmul.f32 %v2169, %v2367
        %v2490 = vmul.f32 %v2170, %v2369
        %v2491 = vmul.f32 %v2171, %v2371
        %v2492 = vmul.f32 %v2172, %v2373
        %v2493 = vmul.f32 %v2173, %v2375
        %v2494 = vmul.f32 %v2174, %v2377
        %v2495 = vmul.f32 %v2175, %v2379
        %v2496 = vmul.f32 %v2176, %v2381
        %v2497 = vmul.f32 %v2177, %v2383
        %v2498 = vmul.f32 %v2178, %v2385
        %v2499 = vmul.f32 %v2179, %v2387
        %v2500 = vmul.f32 %v2180, %v2389
        %v2501 = vmul.f32 %v2181, %v2391
        %v2502 = vmul.f32 %v2182, %v2393
        %v2503 = vmul.f32 %v2183, %v2395
        %v2504 = vmul.f32 %v2184, %v2397
        %v2505 = vmul.f32 %v2185, %v2399
        %v2506 = vmul.f32 %v2186, %v2401
        %v2507 = vmul.f32 %v2187, %v2403
        %v2508 = vmul.f32 %v2188, %v2405
        %v2509 = vmul.f32 %v2189, %v2407
        %v2510 = vmul.f32 %v2190, %v2409
        %v2511 = vmul.f32 %v2191, %v2411
        %v2512 = vmul.f32 %v2192, %v2413
        %v2513 = vmul.f32 %v2193, %v2415
        %v2514 = vmul.f32 %v2194, %v2417
        %v2515 = vmul.f32 %v2195, %v2419
        %v2516 = vmul.f32 %v2196, %v2421
        %v2517 = vmul.f32 %v2197, %v2423
        %v2518 = vmul.f32 %v2198, %v2425
        %v2519 = vmul.f32 %v2199, %v2427
        %v2520 = vmul.f32 %v2200, %v2429
        %v2521 = vmul.f32 %v2201, %v2431
        %v2522 = vmul.f32 %v2202, %v2433
        %v2523 = vmul.f32 %v2203, %v2435
        %v2524 = vmul.f32 %v2204, %v2437
        %v2525 = vmul.f32 %v2205, %v2439
        %v2526 = vmul.f32 %v2206, %v2441
        %v2527 = vmul.f32 %v2207, %v2443
        %v2528 = vmul.f32 %v2208, %v2445
        %v2529 = vmul.f32 %v2209, %v2447
        %v2530 = vmul.f32 %v2210, %v2449
        %v2531 = vmul.f32 %v2211, %v2451
        %v2532 = vmul.f32 %v2212, %v2453
        %v2533 = vmul.f32 %v2213, %v2455
        %v2534 = vmul.f32 %v2214, %v2457
        %v2535 = vmul.f32 %v2215, %v2459
        %v2536 = vmul.f32 %v2216, %v2461
        %v2537 = vmul.f32 %v2217, %v2463
        %v2538 = vmul.f32 %v2218, %v2465
        %v2539 = vmul.f32 %v2219, %v2467
        %v2540 = vmul.f32 %v2220, %v2469
        %v2541 = vmul.f32 %v2221, %v2471
        %v2542 = vmul.f32 %v2222, %v2473
        %v2543 = vmul.f32 %v2223, %v2475
        %v2544 = vmul.f32 %v2224, %v2477
        %v2545 = vmul.f32 %v2225, %v2479
        %v2546 = vmul.f32 %v2226, %v2481
        %v2547 = vmul.f32 %v2227, %v2483
        %v2548 = vsub.f32 1.0, %v2484
        %v2549 = vsub.f32 1.0, %v2485
        %v2550 = vsub.f32 1.0, %v2486
        %v2551 = vsub.f32 1.0, %v2487
        %v2552 = vsub.f32 1.0, %v2488
        %v2553 = vsub.f32 1.0, %v2489
        %v2554 = vsub.f32 1.0, %v2490
        %v2555 = vsub.f32 1.0, %v2491
        %v2556 = vsub.f32 1.0, %v2492
        %v2557 = vsub.f32 1.0, %v2493
        %v2558 = vsub.f32 1.0, %v2494
        %v2559 = vsub.f32 1.0, %v2495
        %v2560 = vsub.f32 1.0, %v2496
        %v2561 = vsub.f32 1.0, %v2497
        %v2562 = vsub.f32 1.0, %v2498
        %v2563 = vsub.f32 1.0, %v2499
        %v2564 = vsub.f32 1.0, %v2500
        %v2565 = vsub.f32 1.0, %v2501
        %v2566 = vsub.f32 1.0, %v2502
        %v2567 = vsub.f32 1.0, %v2503
        %v2568 = vsub.f32 1.0, %v2504
        %v2569 = vsub.f32 1.0, %v2505
        %v2570 = vsub.f32 1.0, %v2506
        %v2571 = vsub.f32 1.0, %v2507
        %v2572 = vsub.f32 1.0, %v2508
        %v2573 = vsub.f32 1.0, %v2509
        %v2574 = vsub.f32 1.0, %v2510
        %v2575 = vsub.f32 1.0, %v2511
        %v2576 = vsub.f32 1.0, %v2512
        %v2577 = vsub.f32 1.0, %v2513
        %v2578 = vsub.f32 1.0, %v2514
        %v2579 = vsub.f32 1.0, %v2515
        %v2580 = vsub.f32 1.0, %v2516
        %v2581 = vsub.f32 1.0, %v2517
        %v2582 = vsub.f32 1.0, %v2518
        %v2583 = vsub.f32 1.0, %v2519
        %v2584 = vsub.f32 1.0, %v2520
        %v2585 = vsub.f32 1.0, %v2521
        %v2586 = vsub.f32 1.0, %v2522
        %v2587 = vsub.f32 1.0, %v2523
        %v2588 = vsub.f32 1.0, %v2524
        %v2589 = vsub.f32 1.0, %v2525
        %v2590 = vsub.f32 1.0, %v2526
        %v2591 = vsub.f32 1.0, %v2527
        %v2592 = vsub.f32 1.0, %v2528
        %v2593 = vsub.f32 1.0, %v2529
        %v2594 = vsub.f32 1.0, %v2530
        %v2595 = vsub.f32 1.0, %v2531
        %v2596 = vsub.f32 1.0, %v2532
        %v2597 = vsub.f32 1.0, %v2533
        %v2598 = vsub.f32 1.0, %v2534
        %v2599 = vsub.f32 1.0, %v2535
        %v2600 = vsub.f32 1.0, %v2536
        %v2601 = vsub.f32 1.0, %v2537
        %v2602 = vsub.f32 1.0, %v2538
        %v2603 = vsub.f32 1.0, %v2539
        %v2604 = vsub.f32 1.0, %v2540
        %v2605 = vsub.f32 1.0, %v2541
        %v2606 = vsub.f32 1.0, %v2542
        %v2607 = vsub.f32 1.0, %v2543
        %v2608 = vsub.f32 1.0, %v2544
        %v2609 = vsub.f32 1.0, %v2545
        %v2610 = vsub.f32 1.0, %v2546
        %v2611 = vsub.f32 1.0, %v2547
        %vm2612 = vcmp.lt.f32.partialorder %v1332, 0.0
        %vm2613 = vcmp.lt.f32.partialorder %v1333, 0.0
        %vm2614 = vcmp.lt.f32.partialorder %v1334, 0.0
        %vm2615 = vcmp.lt.f32.partialorder %v1335, 0.0
        %vm2616 = vcmp.lt.f32.partialorder %v1336, 0.0
        %vm2617 = vcmp.lt.f32.partialorder %v1337, 0.0
        %vm2618 = vcmp.lt.f32.partialorder %v1338, 0.0
        %vm2619 = vcmp.lt.f32.partialorder %v1339, 0.0
        %vm2620 = vcmp.lt.f32.partialorder %v1340, 0.0
        %vm2621 = vcmp.lt.f32.partialorder %v1341, 0.0
        %vm2622 = vcmp.lt.f32.partialorder %v1342, 0.0
        %vm2623 = vcmp.lt.f32.partialorder %v1343, 0.0
        %vm2624 = vcmp.lt.f32.partialorder %v1344, 0.0
        %vm2625 = vcmp.lt.f32.partialorder %v1345, 0.0
        %vm2626 = vcmp.lt.f32.partialorder %v1346, 0.0
        %vm2627 = vcmp.lt.f32.partialorder %v1347, 0.0
        %vm2628 = vcmp.lt.f32.partialorder %v1348, 0.0
        %vm2629 = vcmp.lt.f32.partialorder %v1349, 0.0
        %vm2630 = vcmp.lt.f32.partialorder %v1350, 0.0
        %vm2631 = vcmp.lt.f32.partialorder %v1351, 0.0
        %vm2632 = vcmp.lt.f32.partialorder %v1352, 0.0
        %vm2633 = vcmp.lt.f32.partialorder %v1353, 0.0
        %vm2634 = vcmp.lt.f32.partialorder %v1354, 0.0
        %vm2635 = vcmp.lt.f32.partialorder %v1355, 0.0
        %vm2636 = vcmp.lt.f32.partialorder %v1356, 0.0
        %vm2637 = vcmp.lt.f32.partialorder %v1357, 0.0
        %vm2638 = vcmp.lt.f32.partialorder %v1358, 0.0
        %vm2639 = vcmp.lt.f32.partialorder %v1359, 0.0
        %vm2640 = vcmp.lt.f32.partialorder %v1360, 0.0
        %vm2641 = vcmp.lt.f32.partialorder %v1361, 0.0
        %vm2642 = vcmp.lt.f32.partialorder %v1362, 0.0
        %vm2643 = vcmp.lt.f32.partialorder %v1363, 0.0
        %vm2644 = vcmp.lt.f32.partialorder %v1364, 0.0
        %vm2645 = vcmp.lt.f32.partialorder %v1365, 0.0
        %vm2646 = vcmp.lt.f32.partialorder %v1366, 0.0
        %vm2647 = vcmp.lt.f32.partialorder %v1367, 0.0
        %vm2648 = vcmp.lt.f32.partialorder %v1368, 0.0
        %vm2649 = vcmp.lt.f32.partialorder %v1369, 0.0
        %vm2650 = vcmp.lt.f32.partialorder %v1370, 0.0
        %vm2651 = vcmp.lt.f32.partialorder %v1371, 0.0
        %vm2652 = vcmp.lt.f32.partialorder %v1372, 0.0
        %vm2653 = vcmp.lt.f32.partialorder %v1373, 0.0
        %vm2654 = vcmp.lt.f32.partialorder %v1374, 0.0
        %vm2655 = vcmp.lt.f32.partialorder %v1375, 0.0
        %vm2656 = vcmp.lt.f32.partialorder %v1376, 0.0
        %vm2657 = vcmp.lt.f32.partialorder %v1377, 0.0
        %vm2658 = vcmp.lt.f32.partialorder %v1378, 0.0
        %vm2659 = vcmp.lt.f32.partialorder %v1379, 0.0
        %vm2660 = vcmp.lt.f32.partialorder %v1380, 0.0
        %vm2661 = vcmp.lt.f32.partialorder %v1381, 0.0
        %vm2662 = vcmp.lt.f32.partialorder %v1382, 0.0
        %vm2663 = vcmp.lt.f32.partialorder %v1383, 0.0
        %vm2664 = vcmp.lt.f32.partialorder %v1384, 0.0
        %vm2665 = vcmp.lt.f32.partialorder %v1385, 0.0
        %vm2666 = vcmp.lt.f32.partialorder %v1386, 0.0
        %vm2667 = vcmp.lt.f32.partialorder %v1387, 0.0
        %vm2668 = vcmp.lt.f32.partialorder %v1388, 0.0
        %vm2669 = vcmp.lt.f32.partialorder %v1389, 0.0
        %vm2670 = vcmp.lt.f32.partialorder %v1390, 0.0
        %vm2671 = vcmp.lt.f32.partialorder %v1391, 0.0
        %vm2672 = vcmp.lt.f32.partialorder %v1392, 0.0
        %vm2673 = vcmp.lt.f32.partialorder %v1393, 0.0
        %vm2674 = vcmp.lt.f32.partialorder %v1394, 0.0
        %vm2675 = vcmp.lt.f32.partialorder %v1395, 0.0
        %v2676 = vsub.f32 0.0, %v2548
        %v2677 = vsub.f32 0.0, %v2549
        %v2678 = vsub.f32 0.0, %v2550
        %v2679 = vsub.f32 0.0, %v2551
        %v2680 = vsub.f32 0.0, %v2552
        %v2681 = vsub.f32 0.0, %v2553
        %v2682 = vsub.f32 0.0, %v2554
        %v2683 = vsub.f32 0.0, %v2555
        %v2684 = vsub.f32 0.0, %v2556
        %v2685 = vsub.f32 0.0, %v2557
        %v2686 = vsub.f32 0.0, %v2558
        %v2687 = vsub.f32 0.0, %v2559
        %v2688 = vsub.f32 0.0, %v2560
        %v2689 = vsub.f32 0.0, %v2561
        %v2690 = vsub.f32 0.0, %v2562
        %v2691 = vsub.f32 0.0, %v2563
        %v2692 = vsub.f32 0.0, %v2564
        %v2693 = vsub.f32 0.0, %v2565
        %v2694 = vsub.f32 0.0, %v2566
        %v2695 = vsub.f32 0.0, %v2567
        %v2696 = vsub.f32 0.0, %v2568
        %v2697 = vsub.f32 0.0, %v2569
        %v2698 = vsub.f32 0.0, %v2570
        %v2699 = vsub.f32 0.0, %v2571
        %v2700 = vsub.f32 0.0, %v2572
        %v2701 = vsub.f32 0.0, %v2573
        %v2702 = vsub.f32 0.0, %v2574
        %v2703 = vsub.f32 0.0, %v2575
        %v2704 = vsub.f32 0.0, %v2576
        %v2705 = vsub.f32 0.0, %v2577
        %v2706 = vsub.f32 0.0, %v2578
        %v2707 = vsub.f32 0.0, %v2579
        %v2708 = vsub.f32 0.0, %v2580
        %v2709 = vsub.f32 0.0, %v2581
        %v2710 = vsub.f32 0.0, %v2582
        %v2711 = vsub.f32 0.0, %v2583
        %v2712 = vsub.f32 0.0, %v2584
        %v2713 = vsub.f32 0.0, %v2585
        %v2714 = vsub.f32 0.0, %v2586
        %v2715 = vsub.f32 0.0, %v2587
        %v2716 = vsub.f32 0.0, %v2588
        %v2717 = vsub.f32 0.0, %v2589
        %v2718 = vsub.f32 0.0, %v2590
        %v2719 = vsub.f32 0.0, %v2591
        %v2720 = vsub.f32 0.0, %v2592
        %v2721 = vsub.f32 0.0, %v2593
        %v2722 = vsub.f32 0.0, %v2594
        %v2723 = vsub.f32 0.0, %v2595
        %v2724 = vsub.f32 0.0, %v2596
        %v2725 = vsub.f32 0.0, %v2597
        %v2726 = vsub.f32 0.0, %v2598
        %v2727 = vsub.f32 0.0, %v2599
        %v2728 = vsub.f32 0.0, %v2600
        %v2729 = vsub.f32 0.0, %v2601
        %v2730 = vsub.f32 0.0, %v2602
        %v2731 = vsub.f32 0.0, %v2603
        %v2732 = vsub.f32 0.0, %v2604
        %v2733 = vsub.f32 0.0, %v2605
        %v2734 = vsub.f32 0.0, %v2606
        %v2735 = vsub.f32 0.0, %v2607
        %v2736 = vsub.f32 0.0, %v2608
        %v2737 = vsub.f32 0.0, %v2609
        %v2738 = vsub.f32 0.0, %v2610
        %v2739 = vsub.f32 0.0, %v2611
        %v2740 = vsel %vm2612, %v2676, %v2548
        %v2741 = vsel %vm2613, %v2677, %v2549
        %v2742 = vsel %vm2614, %v2678, %v2550
        %v2743 = vsel %vm2615, %v2679, %v2551
        %v2744 = vsel %vm2616, %v2680, %v2552
        %v2745 = vsel %vm2617, %v2681, %v2553
        %v2746 = vsel %vm2618, %v2682, %v2554
        %v2747 = vsel %vm2619, %v2683, %v2555
        %v2748 = vsel %vm2620, %v2684, %v2556
        %v2749 = vsel %vm2621, %v2685, %v2557
        %v2750 = vsel %vm2622, %v2686, %v2558
        %v2751 = vsel %vm2623, %v2687, %v2559
        %v2752 = vsel %vm2624, %v2688, %v2560
        %v2753 = vsel %vm2625, %v2689, %v2561
        %v2754 = vsel %vm2626, %v2690, %v2562
        %v2755 = vsel %vm2627, %v2691, %v2563
        %v2756 = vsel %vm2628, %v2692, %v2564
        %v2757 = vsel %vm2629, %v2693, %v2565
        %v2758 = vsel %vm2630, %v2694, %v2566
        %v2759 = vsel %vm2631, %v2695, %v2567
        %v2760 = vsel %vm2632, %v2696, %v2568
        %v2761 = vsel %vm2633, %v2697, %v2569
        %v2762 = vsel %vm2634, %v2698, %v2570
        %v2763 = vsel %vm2635, %v2699, %v2571
        %v2764 = vsel %vm2636, %v2700, %v2572
        %v2765 = vsel %vm2637, %v2701, %v2573
        %v2766 = vsel %vm2638, %v2702, %v2574
        %v2767 = vsel %vm2639, %v2703, %v2575
        %v2768 = vsel %vm2640, %v2704, %v2576
        %v2769 = vsel %vm2641, %v2705, %v2577
        %v2770 = vsel %vm2642, %v2706, %v2578
        %v2771 = vsel %vm2643, %v2707, %v2579
        %v2772 = vsel %vm2644, %v2708, %v2580
        %v2773 = vsel %vm2645, %v2709, %v2581
        %v2774 = vsel %vm2646, %v2710, %v2582
        %v2775 = vsel %vm2647, %v2711, %v2583
        %v2776 = vsel %vm2648, %v2712, %v2584
        %v2777 = vsel %vm2649, %v2713, %v2585
        %v2778 = vsel %vm2650, %v2714, %v2586
        %v2779 = vsel %vm2651, %v2715, %v2587
        %v2780 = vsel %vm2652, %v2716, %v2588
        %v2781 = vsel %vm2653, %v2717, %v2589
        %v2782 = vsel %vm2654, %v2718, %v2590
        %v2783 = vsel %vm2655, %v2719, %v2591
        %v2784 = vsel %vm2656, %v2720, %v2592
        %v2785 = vsel %vm2657, %v2721, %v2593
        %v2786 = vsel %vm2658, %v2722, %v2594
        %v2787 = vsel %vm2659, %v2723, %v2595
        %v2788 = vsel %vm2660, %v2724, %v2596
        %v2789 = vsel %vm2661, %v2725, %v2597
        %v2790 = vsel %vm2662, %v2726, %v2598
        %v2791 = vsel %vm2663, %v2727, %v2599
        %v2792 = vsel %vm2664, %v2728, %v2600
        %v2793 = vsel %vm2665, %v2729, %v2601
        %v2794 = vsel %vm2666, %v2730, %v2602
        %v2795 = vsel %vm2667, %v2731, %v2603
        %v2796 = vsel %vm2668, %v2732, %v2604
        %v2797 = vsel %vm2669, %v2733, %v2605
        %v2798 = vsel %vm2670, %v2734, %v2606
        %v2799 = vsel %vm2671, %v2735, %v2607
        %v2800 = vsel %vm2672, %v2736, %v2608
        %v2801 = vsel %vm2673, %v2737, %v2609
        %v2802 = vsel %vm2674, %v2738, %v2610
        %v2803 = vsel %vm2675, %v2739, %v2611
        %v2804 = vadd.f32 %v2740, 1.0
        %v2805 = vadd.f32 %v2741, 1.0
        %v2806 = vadd.f32 %v2742, 1.0
        %v2807 = vadd.f32 %v2743, 1.0
        %v2808 = vadd.f32 %v2744, 1.0
        %v2809 = vadd.f32 %v2745, 1.0
        %v2810 = vadd.f32 %v2746, 1.0
        %v2811 = vadd.f32 %v2747, 1.0
        %v2812 = vadd.f32 %v2748, 1.0
        %v2813 = vadd.f32 %v2749, 1.0
        %v2814 = vadd.f32 %v2750, 1.0
        %v2815 = vadd.f32 %v2751, 1.0
        %v2816 = vadd.f32 %v2752, 1.0
        %v2817 = vadd.f32 %v2753, 1.0
        %v2818 = vadd.f32 %v2754, 1.0
        %v2819 = vadd.f32 %v2755, 1.0
        %v2820 = vadd.f32 %v2756, 1.0
        %v2821 = vadd.f32 %v2757, 1.0
        %v2822 = vadd.f32 %v2758, 1.0
        %v2823 = vadd.f32 %v2759, 1.0
        %v2824 = vadd.f32 %v2760, 1.0
        %v2825 = vadd.f32 %v2761, 1.0
        %v2826 = vadd.f32 %v2762, 1.0
        %v2827 = vadd.f32 %v2763, 1.0
        %v2828 = vadd.f32 %v2764, 1.0
        %v2829 = vadd.f32 %v2765, 1.0
        %v2830 = vadd.f32 %v2766, 1.0
        %v2831 = vadd.f32 %v2767, 1.0
        %v2832 = vadd.f32 %v2768, 1.0
        %v2833 = vadd.f32 %v2769, 1.0
        %v2834 = vadd.f32 %v2770, 1.0
        %v2835 = vadd.f32 %v2771, 1.0
        %v2836 = vadd.f32 %v2772, 1.0
        %v2837 = vadd.f32 %v2773, 1.0
        %v2838 = vadd.f32 %v2774, 1.0
        %v2839 = vadd.f32 %v2775, 1.0
        %v2840 = vadd.f32 %v2776, 1.0
        %v2841 = vadd.f32 %v2777, 1.0
        %v2842 = vadd.f32 %v2778, 1.0
        %v2843 = vadd.f32 %v2779, 1.0
        %v2844 = vadd.f32 %v2780, 1.0
        %v2845 = vadd.f32 %v2781, 1.0
        %v2846 = vadd.f32 %v2782, 1.0
        %v2847 = vadd.f32 %v2783, 1.0
        %v2848 = vadd.f32 %v2784, 1.0
        %v2849 = vadd.f32 %v2785, 1.0
        %v2850 = vadd.f32 %v2786, 1.0
        %v2851 = vadd.f32 %v2787, 1.0
        %v2852 = vadd.f32 %v2788, 1.0
        %v2853 = vadd.f32 %v2789, 1.0
        %v2854 = vadd.f32 %v2790, 1.0
        %v2855 = vadd.f32 %v2791, 1.0
        %v2856 = vadd.f32 %v2792, 1.0
        %v2857 = vadd.f32 %v2793, 1.0
        %v2858 = vadd.f32 %v2794, 1.0
        %v2859 = vadd.f32 %v2795, 1.0
        %v2860 = vadd.f32 %v2796, 1.0
        %v2861 = vadd.f32 %v2797, 1.0
        %v2862 = vadd.f32 %v2798, 1.0
        %v2863 = vadd.f32 %v2799, 1.0
        %v2864 = vadd.f32 %v2800, 1.0
        %v2865 = vadd.f32 %v2801, 1.0
        %v2866 = vadd.f32 %v2802, 1.0
        %v2867 = vadd.f32 %v2803, 1.0
        %v2868 = vmul.f32 %v1268, %v2804
        %v2869 = vmul.f32 %v1269, %v2805
        %v2870 = vmul.f32 %v1270, %v2806
        %v2871 = vmul.f32 %v1271, %v2807
        %v2872 = vmul.f32 %v1272, %v2808
        %v2873 = vmul.f32 %v1273, %v2809
        %v2874 = vmul.f32 %v1274, %v2810
        %v2875 = vmul.f32 %v1275, %v2811
        %v2876 = vmul.f32 %v1276, %v2812
        %v2877 = vmul.f32 %v1277, %v2813
        %v2878 = vmul.f32 %v1278, %v2814
        %v2879 = vmul.f32 %v1279, %v2815
        %v2880 = vmul.f32 %v1280, %v2816
        %v2881 = vmul.f32 %v1281, %v2817
        %v2882 = vmul.f32 %v1282, %v2818
        %v2883 = vmul.f32 %v1283, %v2819
        %v2884 = vmul.f32 %v1284, %v2820
        %v2885 = vmul.f32 %v1285, %v2821
        %v2886 = vmul.f32 %v1286, %v2822
        %v2887 = vmul.f32 %v1287, %v2823
        %v2888 = vmul.f32 %v1288, %v2824
        %v2889 = vmul.f32 %v1289, %v2825
        %v2890 = vmul.f32 %v1290, %v2826
        %v2891 = vmul.f32 %v1291, %v2827
        %v2892 = vmul.f32 %v1292, %v2828
        %v2893 = vmul.f32 %v1293, %v2829
        %v2894 = vmul.f32 %v1294, %v2830
        %v2895 = vmul.f32 %v1295, %v2831
        %v2896 = vmul.f32 %v1296, %v2832
        %v2897 = vmul.f32 %v1297, %v2833
        %v2898 = vmul.f32 %v1298, %v2834
        %v2899 = vmul.f32 %v1299, %v2835
        %v2900 = vmul.f32 %v1300, %v2836
        %v2901 = vmul.f32 %v1301, %v2837
        %v2902 = vmul.f32 %v1302, %v2838
        %v2903 = vmul.f32 %v1303, %v2839
        %v2904 = vmul.f32 %v1304, %v2840
        %v2905 = vmul.f32 %v1305, %v2841
        %v2906 = vmul.f32 %v1306, %v2842
        %v2907 = vmul.f32 %v1307, %v2843
        %v2908 = vmul.f32 %v1308, %v2844
        %v2909 = vmul.f32 %v1309, %v2845
        %v2910 = vmul.f32 %v1310, %v2846
        %v2911 = vmul.f32 %v1311, %v2847
        %v2912 = vmul.f32 %v1312, %v2848
        %v2913 = vmul.f32 %v1313, %v2849
        %v2914 = vmul.f32 %v1314, %v2850
        %v2915 = vmul.f32 %v1315, %v2851
        %v2916 = vmul.f32 %v1316, %v2852
        %v2917 = vmul.f32 %v1317, %v2853
        %v2918 = vmul.f32 %v1318, %v2854
        %v2919 = vmul.f32 %v1319, %v2855
        %v2920 = vmul.f32 %v1320, %v2856
        %v2921 = vmul.f32 %v1321, %v2857
        %v2922 = vmul.f32 %v1322, %v2858
        %v2923 = vmul.f32 %v1323, %v2859
        %v2924 = vmul.f32 %v1324, %v2860
        %v2925 = vmul.f32 %v1325, %v2861
        %v2926 = vmul.f32 %v1326, %v2862
        %v2927 = vmul.f32 %v1327, %v2863
        %v2928 = vmul.f32 %v1328, %v2864
        %v2929 = vmul.f32 %v1329, %v2865
        %v2930 = vmul.f32 %v1330, %v2866
        %v2931 = vmul.f32 %v1331, %v2867
        %v2932 = vpack.c.bf16 %v2872, %v2868
        %v2933 = vpack.c.bf16 %v2873, %v2869
        %v2934 = vpack.c.bf16 %v2874, %v2870
        %v2935 = vpack.c.bf16 %v2875, %v2871
        %v2936 = vpack.c.bf16 %v2880, %v2876
        %v2937 = vpack.c.bf16 %v2881, %v2877
        %v2938 = vpack.c.bf16 %v2882, %v2878
        %v2939 = vpack.c.bf16 %v2883, %v2879
        %v2940 = vpack.c.bf16 %v2888, %v2884
        %v2941 = vpack.c.bf16 %v2889, %v2885
        %v2942 = vpack.c.bf16 %v2890, %v2886
        %v2943 = vpack.c.bf16 %v2891, %v2887
        %v2944 = vpack.c.bf16 %v2896, %v2892
        %v2945 = vpack.c.bf16 %v2897, %v2893
        %v2946 = vpack.c.bf16 %v2898, %v2894
        %v2947 = vpack.c.bf16 %v2899, %v2895
        %v2948 = vpack.c.bf16 %v2904, %v2900
        %v2949 = vpack.c.bf16 %v2905, %v2901
        %v2950 = vpack.c.bf16 %v2906, %v2902
        %v2951 = vpack.c.bf16 %v2907, %v2903
        %v2952 = vpack.c.bf16 %v2912, %v2908
        %v2953 = vpack.c.bf16 %v2913, %v2909
        %v2954 = vpack.c.bf16 %v2914, %v2910
        %v2955 = vpack.c.bf16 %v2915, %v2911
        %v2956 = vpack.c.bf16 %v2920, %v2916
        %v2957 = vpack.c.bf16 %v2921, %v2917
        %v2958 = vpack.c.bf16 %v2922, %v2918
        %v2959 = vpack.c.bf16 %v2923, %v2919
        %v2960 = vpack.c.bf16 %v2928, %v2924
        %v2961 = vpack.c.bf16 %v2929, %v2925
        %v2962 = vpack.c.bf16 %v2930, %v2926
        %v2963 = vpack.c.bf16 %v2931, %v2927
        %v2964 = vld [vmem:[%s325] sm:$0xff]
        %v2965 = vld [vmem:[%s325 + $0x8] sm:$0xff]
        %v2966 = vld [vmem:[%s325 + $0x10] sm:$0xff]
        %v2967 = vld [vmem:[%s325 + $0x18] sm:$0xff]
        %v2968 = vld [vmem:[%s325 + $0x20] sm:$0xff]
        %v2969 = vld [vmem:[%s325 + $0x28] sm:$0xff]
        %v2970 = vld [vmem:[%s325 + $0x30] sm:$0xff]
        %v2971 = vld [vmem:[%s325 + $0x38] sm:$0xff]
        %v2972 = vld [vmem:[%s325 + $0x40] sm:$0xff]
        %v2973 = vld [vmem:[%s325 + $0x48] sm:$0xff]
        %v2974 = vld [vmem:[%s325 + $0x50] sm:$0xff]
        %v2975 = vld [vmem:[%s325 + $0x58] sm:$0xff]
        %v2976 = vld [vmem:[%s325 + $0x60] sm:$0xff]
        %v2977 = vld [vmem:[%s325 + $0x68] sm:$0xff]
        %v2978 = vld [vmem:[%s325 + $0x70] sm:$0xff]
        %v2979 = vld [vmem:[%s325 + $0x78] sm:$0xff]
        %v2980 = vld [vmem:[%s325 + $0x80] sm:$0xff]
        %v2981 = vld [vmem:[%s325 + $0x88] sm:$0xff]
        %v2982 = vld [vmem:[%s325 + $0x90] sm:$0xff]
        %v2983 = vld [vmem:[%s325 + $0x98] sm:$0xff]
        %v2984 = vld [vmem:[%s325 + $0xa0] sm:$0xff]
        %v2985 = vld [vmem:[%s325 + $0xa8] sm:$0xff]
        %v2986 = vld [vmem:[%s325 + $0xb0] sm:$0xff]
        %v2987 = vld [vmem:[%s325 + $0xb8] sm:$0xff]
        %v2988 = vld [vmem:[%s325 + $0xc0] sm:$0xff]
        %v2989 = vld [vmem:[%s325 + $0xc8] sm:$0xff]
        %v2990 = vld [vmem:[%s325 + $0xd0] sm:$0xff]
        %v2991 = vld [vmem:[%s325 + $0xd8] sm:$0xff]
        %v2992 = vld [vmem:[%s325 + $0xe0] sm:$0xff]
        %v2993 = vld [vmem:[%s325 + $0xe8] sm:$0xff]
        %v2994 = vld [vmem:[%s325 + $0xf0] sm:$0xff]
        %v2995 = vld [vmem:[%s325 + $0xf8] sm:$0xff]
        %v2996 = vld [vmem:[%s325 + $0x100] sm:$0xff]
        %v2997 = vld [vmem:[%s325 + $0x108] sm:$0xff]
        %v2998 = vld [vmem:[%s325 + $0x110] sm:$0xff]
        %v2999 = vld [vmem:[%s325 + $0x118] sm:$0xff]
        %v3000 = vld [vmem:[%s325 + $0x120] sm:$0xff]
        %v3001 = vld [vmem:[%s325 + $0x128] sm:$0xff]
        %v3002 = vld [vmem:[%s325 + $0x130] sm:$0xff]
        %v3003 = vld [vmem:[%s325 + $0x138] sm:$0xff]
        %v3004 = vld [vmem:[%s325 + $0x140] sm:$0xff]
        %v3005 = vld [vmem:[%s325 + $0x148] sm:$0xff]
        %v3006 = vld [vmem:[%s325 + $0x150] sm:$0xff]
        %v3007 = vld [vmem:[%s325 + $0x158] sm:$0xff]
        %v3008 = vld [vmem:[%s325 + $0x160] sm:$0xff]
        %v3009 = vld [vmem:[%s325 + $0x168] sm:$0xff]
        %v3010 = vld [vmem:[%s325 + $0x170] sm:$0xff]
        %v3011 = vld [vmem:[%s325 + $0x178] sm:$0xff]
        %v3012 = vld [vmem:[%s325 + $0x180] sm:$0xff]
        %v3013 = vld [vmem:[%s325 + $0x188] sm:$0xff]
        %v3014 = vld [vmem:[%s325 + $0x190] sm:$0xff]
        %v3015 = vld [vmem:[%s325 + $0x198] sm:$0xff]
        %v3016 = vld [vmem:[%s325 + $0x1a0] sm:$0xff]
        %v3017 = vld [vmem:[%s325 + $0x1a8] sm:$0xff]
        %v3018 = vld [vmem:[%s325 + $0x1b0] sm:$0xff]
        %v3019 = vld [vmem:[%s325 + $0x1b8] sm:$0xff]
        %v3020 = vld [vmem:[%s325 + $0x1c0] sm:$0xff]
        %v3021 = vld [vmem:[%s325 + $0x1c8] sm:$0xff]
        %v3022 = vld [vmem:[%s325 + $0x1d0] sm:$0xff]
        %v3023 = vld [vmem:[%s325 + $0x1d8] sm:$0xff]
        %v3024 = vld [vmem:[%s325 + $0x1e0] sm:$0xff]
        %v3025 = vld [vmem:[%s325 + $0x1e8] sm:$0xff]
        %v3026 = vld [vmem:[%s325 + $0x1f0] sm:$0xff]
        %v3027 = vld [vmem:[%s325 + $0x1f8] sm:$0xff]
        %v3028 = vld [vmem:[%s379] sm:$0x3]
        %v3029 = vunpack.c.l.bf16 %v3028
        %v3031 = vperm.slane %v3029, 0
        %v3032 = vperm.slane %v3029, 2
        %v3035 = vperm.slane %v3031, 0
        %v3036 = vperm.slane %v3032, 0
        %v3101 = vunpack.c.l.b16 %v2964
        %v3102 = vunpack.c.h.b16 %v2964
        %v3103 = vunpack.c.l.b16 %v2965
        %v3104 = vunpack.c.h.b16 %v2965
        %v3105 = vunpack.c.l.b16 %v2966
        %v3106 = vunpack.c.h.b16 %v2966
        %v3107 = vunpack.c.l.b16 %v2967
        %v3108 = vunpack.c.h.b16 %v2967
        %v3109 = vunpack.c.l.b16 %v2968
        %v3110 = vunpack.c.h.b16 %v2968
        %v3111 = vunpack.c.l.b16 %v2969
        %v3112 = vunpack.c.h.b16 %v2969
        %v3113 = vunpack.c.l.b16 %v2970
        %v3114 = vunpack.c.h.b16 %v2970
        %v3115 = vunpack.c.l.b16 %v2971
        %v3116 = vunpack.c.h.b16 %v2971
        %v3117 = vunpack.c.l.b16 %v2972
        %v3118 = vunpack.c.h.b16 %v2972
        %v3119 = vunpack.c.l.b16 %v2973
        %v3120 = vunpack.c.h.b16 %v2973
        %v3121 = vunpack.c.l.b16 %v2974
        %v3122 = vunpack.c.h.b16 %v2974
        %v3123 = vunpack.c.l.b16 %v2975
        %v3124 = vunpack.c.h.b16 %v2975
        %v3125 = vunpack.c.l.b16 %v2976
        %v3126 = vunpack.c.h.b16 %v2976
        %v3127 = vunpack.c.l.b16 %v2977
        %v3128 = vunpack.c.h.b16 %v2977
        %v3129 = vunpack.c.l.b16 %v2978
        %v3130 = vunpack.c.h.b16 %v2978
        %v3131 = vunpack.c.l.b16 %v2979
        %v3132 = vunpack.c.h.b16 %v2979
        %v3133 = vunpack.c.l.b16 %v2980
        %v3134 = vunpack.c.h.b16 %v2980
        %v3135 = vunpack.c.l.b16 %v2981
        %v3136 = vunpack.c.h.b16 %v2981
        %v3137 = vunpack.c.l.b16 %v2982
        %v3138 = vunpack.c.h.b16 %v2982
        %v3139 = vunpack.c.l.b16 %v2983
        %v3140 = vunpack.c.h.b16 %v2983
        %v3141 = vunpack.c.l.b16 %v2984
        %v3142 = vunpack.c.h.b16 %v2984
        %v3143 = vunpack.c.l.b16 %v2985
        %v3144 = vunpack.c.h.b16 %v2985
        %v3145 = vunpack.c.l.b16 %v2986
        %v3146 = vunpack.c.h.b16 %v2986
        %v3147 = vunpack.c.l.b16 %v2987
        %v3148 = vunpack.c.h.b16 %v2987
        %v3149 = vunpack.c.l.b16 %v2988
        %v3150 = vunpack.c.h.b16 %v2988
        %v3151 = vunpack.c.l.b16 %v2989
        %v3152 = vunpack.c.h.b16 %v2989
        %v3153 = vunpack.c.l.b16 %v2990
        %v3154 = vunpack.c.h.b16 %v2990
        %v3155 = vunpack.c.l.b16 %v2991
        %v3156 = vunpack.c.h.b16 %v2991
        %v3157 = vunpack.c.l.b16 %v2992
        %v3158 = vunpack.c.h.b16 %v2992
        %v3159 = vunpack.c.l.b16 %v2993
        %v3160 = vunpack.c.h.b16 %v2993
        %v3161 = vunpack.c.l.b16 %v2994
        %v3162 = vunpack.c.h.b16 %v2994
        %v3163 = vunpack.c.l.b16 %v2995
        %v3164 = vunpack.c.h.b16 %v2995
        %v3165 = vunpack.c.l.b16 %v2996
        %v3166 = vunpack.c.h.b16 %v2996
        %v3167 = vunpack.c.l.b16 %v2997
        %v3168 = vunpack.c.h.b16 %v2997
        %v3169 = vunpack.c.l.b16 %v2998
        %v3170 = vunpack.c.h.b16 %v2998
        %v3171 = vunpack.c.l.b16 %v2999
        %v3172 = vunpack.c.h.b16 %v2999
        %v3173 = vunpack.c.l.b16 %v3000
        %v3174 = vunpack.c.h.b16 %v3000
        %v3175 = vunpack.c.l.b16 %v3001
        %v3176 = vunpack.c.h.b16 %v3001
        %v3177 = vunpack.c.l.b16 %v3002
        %v3178 = vunpack.c.h.b16 %v3002
        %v3179 = vunpack.c.l.b16 %v3003
        %v3180 = vunpack.c.h.b16 %v3003
        %v3181 = vunpack.c.l.b16 %v3004
        %v3182 = vunpack.c.h.b16 %v3004
        %v3183 = vunpack.c.l.b16 %v3005
        %v3184 = vunpack.c.h.b16 %v3005
        %v3185 = vunpack.c.l.b16 %v3006
        %v3186 = vunpack.c.h.b16 %v3006
        %v3187 = vunpack.c.l.b16 %v3007
        %v3188 = vunpack.c.h.b16 %v3007
        %v3189 = vunpack.c.l.b16 %v3008
        %v3190 = vunpack.c.h.b16 %v3008
        %v3191 = vunpack.c.l.b16 %v3009
        %v3192 = vunpack.c.h.b16 %v3009
        %v3193 = vunpack.c.l.b16 %v3010
        %v3194 = vunpack.c.h.b16 %v3010
        %v3195 = vunpack.c.l.b16 %v3011
        %v3196 = vunpack.c.h.b16 %v3011
        %v3197 = vunpack.c.l.b16 %v3012
        %v3198 = vunpack.c.h.b16 %v3012
        %v3199 = vunpack.c.l.b16 %v3013
        %v3200 = vunpack.c.h.b16 %v3013
        %v3201 = vunpack.c.l.b16 %v3014
        %v3202 = vunpack.c.h.b16 %v3014
        %v3203 = vunpack.c.l.b16 %v3015
        %v3204 = vunpack.c.h.b16 %v3015
        %v3205 = vunpack.c.l.b16 %v3016
        %v3206 = vunpack.c.h.b16 %v3016
        %v3207 = vunpack.c.l.b16 %v3017
        %v3208 = vunpack.c.h.b16 %v3017
        %v3209 = vunpack.c.l.b16 %v3018
        %v3210 = vunpack.c.h.b16 %v3018
        %v3211 = vunpack.c.l.b16 %v3019
        %v3212 = vunpack.c.h.b16 %v3019
        %v3213 = vunpack.c.l.b16 %v3020
        %v3214 = vunpack.c.h.b16 %v3020
        %v3215 = vunpack.c.l.b16 %v3021
        %v3216 = vunpack.c.h.b16 %v3021
        %v3217 = vunpack.c.l.b16 %v3022
        %v3218 = vunpack.c.h.b16 %v3022
        %v3219 = vunpack.c.l.b16 %v3023
        %v3220 = vunpack.c.h.b16 %v3023
        %v3221 = vunpack.c.l.b16 %v3024
        %v3222 = vunpack.c.h.b16 %v3024
        %v3223 = vunpack.c.l.b16 %v3025
        %v3224 = vunpack.c.h.b16 %v3025
        %v3225 = vunpack.c.l.b16 %v3026
        %v3226 = vunpack.c.h.b16 %v3026
        %v3227 = vunpack.c.l.b16 %v3027
        %v3228 = vunpack.c.h.b16 %v3027
        %v3229 = vpack.c.b16 %v3103, %v3101
        %v3230 = vpack.c.b16 %v3104, %v3102
        %v3231 = vpack.c.b16 %v3107, %v3105
        %v3232 = vpack.c.b16 %v3108, %v3106
        %v3233 = vpack.c.b16 %v3111, %v3109
        %v3234 = vpack.c.b16 %v3112, %v3110
        %v3235 = vpack.c.b16 %v3115, %v3113
        %v3236 = vpack.c.b16 %v3116, %v3114
        %v3237 = vpack.c.b16 %v3119, %v3117
        %v3238 = vpack.c.b16 %v3120, %v3118
        %v3239 = vpack.c.b16 %v3123, %v3121
        %v3240 = vpack.c.b16 %v3124, %v3122
        %v3241 = vpack.c.b16 %v3127, %v3125
        %v3242 = vpack.c.b16 %v3128, %v3126
        %v3243 = vpack.c.b16 %v3131, %v3129
        %v3244 = vpack.c.b16 %v3132, %v3130
        %v3245 = vpack.c.b16 %v3135, %v3133
        %v3246 = vpack.c.b16 %v3136, %v3134
        %v3247 = vpack.c.b16 %v3139, %v3137
        %v3248 = vpack.c.b16 %v3140, %v3138
        %v3249 = vpack.c.b16 %v3143, %v3141
        %v3250 = vpack.c.b16 %v3144, %v3142
        %v3251 = vpack.c.b16 %v3147, %v3145
        %v3252 = vpack.c.b16 %v3148, %v3146
        %v3253 = vpack.c.b16 %v3151, %v3149
        %v3254 = vpack.c.b16 %v3152, %v3150
        %v3255 = vpack.c.b16 %v3155, %v3153
        %v3256 = vpack.c.b16 %v3156, %v3154
        %v3257 = vpack.c.b16 %v3159, %v3157
        %v3258 = vpack.c.b16 %v3160, %v3158
        %v3259 = vpack.c.b16 %v3163, %v3161
        %v3260 = vpack.c.b16 %v3164, %v3162
        %v3261 = vpack.c.b16 %v3167, %v3165
        %v3262 = vpack.c.b16 %v3168, %v3166
        %v3263 = vpack.c.b16 %v3171, %v3169
        %v3264 = vpack.c.b16 %v3172, %v3170
        %v3265 = vpack.c.b16 %v3175, %v3173
        %v3266 = vpack.c.b16 %v3176, %v3174
        %v3267 = vpack.c.b16 %v3179, %v3177
        %v3268 = vpack.c.b16 %v3180, %v3178
        %v3269 = vpack.c.b16 %v3183, %v3181
        %v3270 = vpack.c.b16 %v3184, %v3182
        %v3271 = vpack.c.b16 %v3187, %v3185
        %v3272 = vpack.c.b16 %v3188, %v3186
        %v3273 = vpack.c.b16 %v3191, %v3189
        %v3274 = vpack.c.b16 %v3192, %v3190
        %v3275 = vpack.c.b16 %v3195, %v3193
        %v3276 = vpack.c.b16 %v3196, %v3194
        %v3277 = vpack.c.b16 %v3199, %v3197
        %v3278 = vpack.c.b16 %v3200, %v3198
        %v3279 = vpack.c.b16 %v3203, %v3201
        %v3280 = vpack.c.b16 %v3204, %v3202
        %v3281 = vpack.c.b16 %v3207, %v3205
        %v3282 = vpack.c.b16 %v3208, %v3206
        %v3283 = vpack.c.b16 %v3211, %v3209
        %v3284 = vpack.c.b16 %v3212, %v3210
        %v3285 = vpack.c.b16 %v3215, %v3213
        %v3286 = vpack.c.b16 %v3216, %v3214
        %v3287 = vpack.c.b16 %v3219, %v3217
        %v3288 = vpack.c.b16 %v3220, %v3218
        %v3289 = vpack.c.b16 %v3223, %v3221
        %v3290 = vpack.c.b16 %v3224, %v3222
        %v3291 = vpack.c.b16 %v3227, %v3225
        %v3292 = vpack.c.b16 %v3228, %v3226
        %3357 = vmatpush.bf16.msra.mxu0 %v3243
        %3358 = vmatpush.bf16.msra.mxu0 %v3241
        %3359 = vmatpush.bf16.msra.mxu0 %v3239
        %3360 = vmatpush.bf16.msra.mxu0 %v3237
        %3361 = vmatpush.bf16.msra.mxu0 %v3235
        %3362 = vmatpush.bf16.msra.mxu0 %v3233
        %3363 = vmatpush.bf16.msra.mxu0 %v3231
        %3364 = vmatpush.bf16.msra.mxu0 %v3229
        %3365 = vmatmul.bf16.gmra.mxu0 %v2932
        %v3366 = vpop.f32.mrf.mxu0
        %v3367 = vadd.f32 %v3035, %v3366
        %v3368 = vpop.f32.mrf.mxu0
        %v3369 = vadd.f32 %v3035, %v3368
        %3370 = vmatmul.bf16.gmra.mxu0 %v2936
        %v3371 = vpop.f32.mrf.mxu0
        %v3372 = vadd.f32 %v3035, %v3371
        %v3373 = vpop.f32.mrf.mxu0
        %v3374 = vadd.f32 %v3035, %v3373
        %3375 = vmatmul.bf16.gmra.mxu0 %v2940
        %v3376 = vpop.f32.mrf.mxu0
        %v3377 = vadd.f32 %v3035, %v3376
        %v3378 = vpop.f32.mrf.mxu0
        %v3379 = vadd.f32 %v3035, %v3378
        %3380 = vmatmul.bf16.gmra.mxu0 %v2944
        %v3381 = vpop.f32.mrf.mxu0
        %v3382 = vadd.f32 %v3035, %v3381
        %v3383 = vpop.f32.mrf.mxu0
        %v3384 = vadd.f32 %v3035, %v3383
        %3385 = vmatmul.bf16.gmra.mxu0 %v2948
        %v3386 = vpop.f32.mrf.mxu0
        %v3387 = vadd.f32 %v3035, %v3386
        %v3388 = vpop.f32.mrf.mxu0
        %v3389 = vadd.f32 %v3035, %v3388
        %3390 = vmatmul.bf16.gmra.mxu0 %v2952
        %v3391 = vpop.f32.mrf.mxu0
        %v3392 = vadd.f32 %v3035, %v3391
        %v3393 = vpop.f32.mrf.mxu0
        %v3394 = vadd.f32 %v3035, %v3393
        %3395 = vmatmul.bf16.gmra.mxu0 %v2956
        %v3396 = vpop.f32.mrf.mxu0
        %v3397 = vadd.f32 %v3035, %v3396
        %v3398 = vpop.f32.mrf.mxu0
        %v3399 = vadd.f32 %v3035, %v3398
        %3400 = vmatmul.bf16.gmra.mxu0 %v2960
        %v3401 = vpop.f32.mrf.mxu0
        %v3402 = vadd.f32 %v3035, %v3401
        %v3403 = vpop.f32.mrf.mxu0
        %v3404 = vadd.f32 %v3035, %v3403
        %3405 = vdwg.mxu0
        %3406 = vmatpush.bf16.msra.mxu0 %v3259
        %3407 = vmatpush.bf16.msra.mxu0 %v3257
        %3408 = vmatpush.bf16.msra.mxu0 %v3255
        %3409 = vmatpush.bf16.msra.mxu0 %v3253
        %3410 = vmatpush.bf16.msra.mxu0 %v3251
        %3411 = vmatpush.bf16.msra.mxu0 %v3249
        %3412 = vmatpush.bf16.msra.mxu0 %v3247
        %3413 = vmatpush.bf16.msra.mxu0 %v3245
        %3414 = vmatmul.bf16.gmra.mxu0 %v2933
        %v3415 = vpop.f32.mrf.mxu0
        %v3416 = vadd.f32 %v3367, %v3415
        %v3417 = vpop.f32.mrf.mxu0
        %v3418 = vadd.f32 %v3369, %v3417
        %3419 = vmatmul.bf16.gmra.mxu0 %v2937
        %v3420 = vpop.f32.mrf.mxu0
        %v3421 = vadd.f32 %v3372, %v3420
        %v3422 = vpop.f32.mrf.mxu0
        %v3423 = vadd.f32 %v3374, %v3422
        %3424 = vmatmul.bf16.gmra.mxu0 %v2941
        %v3425 = vpop.f32.mrf.mxu0
        %v3426 = vadd.f32 %v3377, %v3425
        %v3427 = vpop.f32.mrf.mxu0
        %v3428 = vadd.f32 %v3379, %v3427
        %3429 = vmatmul.bf16.gmra.mxu0 %v2945
        %v3430 = vpop.f32.mrf.mxu0
        %v3431 = vadd.f32 %v3382, %v3430
        %v3432 = vpop.f32.mrf.mxu0
        %v3433 = vadd.f32 %v3384, %v3432
        %3434 = vmatmul.bf16.gmra.mxu0 %v2949
        %v3435 = vpop.f32.mrf.mxu0
        %v3436 = vadd.f32 %v3387, %v3435
        %v3437 = vpop.f32.mrf.mxu0
        %v3438 = vadd.f32 %v3389, %v3437
        %3439 = vmatmul.bf16.gmra.mxu0 %v2953
        %v3440 = vpop.f32.mrf.mxu0
        %v3441 = vadd.f32 %v3392, %v3440
        %v3442 = vpop.f32.mrf.mxu0
        %v3443 = vadd.f32 %v3394, %v3442
        %3444 = vmatmul.bf16.gmra.mxu0 %v2957
        %v3445 = vpop.f32.mrf.mxu0
        %v3446 = vadd.f32 %v3397, %v3445
        %v3447 = vpop.f32.mrf.mxu0
        %v3448 = vadd.f32 %v3399, %v3447
        %3449 = vmatmul.bf16.gmra.mxu0 %v2961
        %v3450 = vpop.f32.mrf.mxu0
        %v3451 = vadd.f32 %v3402, %v3450
        %v3452 = vpop.f32.mrf.mxu0
        %v3453 = vadd.f32 %v3404, %v3452
        %3454 = vdwg.mxu0
        %3455 = vmatpush.bf16.msra.mxu0 %v3275
        %3456 = vmatpush.bf16.msra.mxu0 %v3273
        %3457 = vmatpush.bf16.msra.mxu0 %v3271
        %3458 = vmatpush.bf16.msra.mxu0 %v3269
        %3459 = vmatpush.bf16.msra.mxu0 %v3267
        %3460 = vmatpush.bf16.msra.mxu0 %v3265
        %3461 = vmatpush.bf16.msra.mxu0 %v3263
        %3462 = vmatpush.bf16.msra.mxu0 %v3261
        %3463 = vmatmul.bf16.gmra.mxu0 %v2934
        %v3464 = vpop.f32.mrf.mxu0
        %v3465 = vadd.f32 %v3416, %v3464
        %v3466 = vpop.f32.mrf.mxu0
        %v3467 = vadd.f32 %v3418, %v3466
        %3468 = vmatmul.bf16.gmra.mxu0 %v2938
        %v3469 = vpop.f32.mrf.mxu0
        %v3470 = vadd.f32 %v3421, %v3469
        %v3471 = vpop.f32.mrf.mxu0
        %v3472 = vadd.f32 %v3423, %v3471
        %3473 = vmatmul.bf16.gmra.mxu0 %v2942
        %v3474 = vpop.f32.mrf.mxu0
        %v3475 = vadd.f32 %v3426, %v3474
        %v3476 = vpop.f32.mrf.mxu0
        %v3477 = vadd.f32 %v3428, %v3476
        %3478 = vmatmul.bf16.gmra.mxu0 %v2946
        %v3479 = vpop.f32.mrf.mxu0
        %v3480 = vadd.f32 %v3431, %v3479
        %v3481 = vpop.f32.mrf.mxu0
        %v3482 = vadd.f32 %v3433, %v3481
        %3483 = vmatmul.bf16.gmra.mxu0 %v2950
        %v3484 = vpop.f32.mrf.mxu0
        %v3485 = vadd.f32 %v3436, %v3484
        %v3486 = vpop.f32.mrf.mxu0
        %v3487 = vadd.f32 %v3438, %v3486
        %3488 = vmatmul.bf16.gmra.mxu0 %v2954
        %v3489 = vpop.f32.mrf.mxu0
        %v3490 = vadd.f32 %v3441, %v3489
        %v3491 = vpop.f32.mrf.mxu0
        %v3492 = vadd.f32 %v3443, %v3491
        %3493 = vmatmul.bf16.gmra.mxu0 %v2958
        %v3494 = vpop.f32.mrf.mxu0
        %v3495 = vadd.f32 %v3446, %v3494
        %v3496 = vpop.f32.mrf.mxu0
        %v3497 = vadd.f32 %v3448, %v3496
        %3498 = vmatmul.bf16.gmra.mxu0 %v2962
        %v3499 = vpop.f32.mrf.mxu0
        %v3500 = vadd.f32 %v3451, %v3499
        %v3501 = vpop.f32.mrf.mxu0
        %v3502 = vadd.f32 %v3453, %v3501
        %3503 = vdwg.mxu0
        %3504 = vmatpush.bf16.msra.mxu0 %v3291
        %3505 = vmatpush.bf16.msra.mxu0 %v3289
        %3506 = vmatpush.bf16.msra.mxu0 %v3287
        %3507 = vmatpush.bf16.msra.mxu0 %v3285
        %3508 = vmatpush.bf16.msra.mxu0 %v3283
        %3509 = vmatpush.bf16.msra.mxu0 %v3281
        %3510 = vmatpush.bf16.msra.mxu0 %v3279
        %3511 = vmatpush.bf16.msra.mxu0 %v3277
        %3512 = vmatmul.bf16.gmra.mxu0 %v2935
        %v3513 = vpop.f32.mrf.mxu0
        %v3514 = vadd.f32 %v3465, %v3513
        %v3515 = vpop.f32.mrf.mxu0
        %v3516 = vadd.f32 %v3467, %v3515
        %3517 = vmatmul.bf16.gmra.mxu0 %v2939
        %v3518 = vpop.f32.mrf.mxu0
        %v3519 = vadd.f32 %v3470, %v3518
        %v3520 = vpop.f32.mrf.mxu0
        %v3521 = vadd.f32 %v3472, %v3520
        %3522 = vmatmul.bf16.gmra.mxu0 %v2943
        %v3523 = vpop.f32.mrf.mxu0
        %v3524 = vadd.f32 %v3475, %v3523
        %v3525 = vpop.f32.mrf.mxu0
        %v3526 = vadd.f32 %v3477, %v3525
        %3527 = vmatmul.bf16.gmra.mxu0 %v2947
        %v3528 = vpop.f32.mrf.mxu0
        %v3529 = vadd.f32 %v3480, %v3528
        %v3530 = vpop.f32.mrf.mxu0
        %v3531 = vadd.f32 %v3482, %v3530
        %3532 = vmatmul.bf16.gmra.mxu0 %v2951
        %v3533 = vpop.f32.mrf.mxu0
        %v3534 = vadd.f32 %v3485, %v3533
        %v3535 = vpop.f32.mrf.mxu0
        %v3536 = vadd.f32 %v3487, %v3535
        %3537 = vmatmul.bf16.gmra.mxu0 %v2955
        %v3538 = vpop.f32.mrf.mxu0
        %v3539 = vadd.f32 %v3490, %v3538
        %v3540 = vpop.f32.mrf.mxu0
        %v3541 = vadd.f32 %v3492, %v3540
        %3542 = vmatmul.bf16.gmra.mxu0 %v2959
        %v3543 = vpop.f32.mrf.mxu0
        %v3544 = vadd.f32 %v3495, %v3543
        %v3545 = vpop.f32.mrf.mxu0
        %v3546 = vadd.f32 %v3497, %v3545
        %3547 = vmatmul.bf16.gmra.mxu0 %v2963
        %v3548 = vpop.f32.mrf.mxu0
        %v3549 = vadd.f32 %v3500, %v3548
        %v3550 = vpop.f32.mrf.mxu0
        %v3551 = vadd.f32 %v3502, %v3550
        %3552 = vdwg.mxu0
        %3553 = vmatpush.bf16.msra.mxu0 %v3244
        %3554 = vmatpush.bf16.msra.mxu0 %v3242
        %3555 = vmatpush.bf16.msra.mxu0 %v3240
        %3556 = vmatpush.bf16.msra.mxu0 %v3238
        %3557 = vmatpush.bf16.msra.mxu0 %v3236
        %3558 = vmatpush.bf16.msra.mxu0 %v3234
        %3559 = vmatpush.bf16.msra.mxu0 %v3232
        %3560 = vmatpush.bf16.msra.mxu0 %v3230
        %3561 = vmatmul.bf16.gmra.mxu0 %v2932
        %v3562 = vpop.f32.mrf.mxu0
        %v3563 = vadd.f32 %v3036, %v3562
        %v3564 = vpop.f32.mrf.mxu0
        %v3565 = vadd.f32 %v3036, %v3564
        %3566 = vmatmul.bf16.gmra.mxu0 %v2936
        %v3567 = vpop.f32.mrf.mxu0
        %v3568 = vadd.f32 %v3036, %v3567
        %v3569 = vpop.f32.mrf.mxu0
        %v3570 = vadd.f32 %v3036, %v3569
        %3571 = vmatmul.bf16.gmra.mxu0 %v2940
        %v3572 = vpop.f32.mrf.mxu0
        %v3573 = vadd.f32 %v3036, %v3572
        %v3574 = vpop.f32.mrf.mxu0
        %v3575 = vadd.f32 %v3036, %v3574
        %3576 = vmatmul.bf16.gmra.mxu0 %v2944
        %v3577 = vpop.f32.mrf.mxu0
        %v3578 = vadd.f32 %v3036, %v3577
        %v3579 = vpop.f32.mrf.mxu0
        %v3580 = vadd.f32 %v3036, %v3579
        %3581 = vmatmul.bf16.gmra.mxu0 %v2948
        %v3582 = vpop.f32.mrf.mxu0
        %v3583 = vadd.f32 %v3036, %v3582
        %v3584 = vpop.f32.mrf.mxu0
        %v3585 = vadd.f32 %v3036, %v3584
        %3586 = vmatmul.bf16.gmra.mxu0 %v2952
        %v3587 = vpop.f32.mrf.mxu0
        %v3588 = vadd.f32 %v3036, %v3587
        %v3589 = vpop.f32.mrf.mxu0
        %v3590 = vadd.f32 %v3036, %v3589
        %3591 = vmatmul.bf16.gmra.mxu0 %v2956
        %v3592 = vpop.f32.mrf.mxu0
        %v3593 = vadd.f32 %v3036, %v3592
        %v3594 = vpop.f32.mrf.mxu0
        %v3595 = vadd.f32 %v3036, %v3594
        %3596 = vmatmul.bf16.gmra.mxu0 %v2960
        %v3597 = vpop.f32.mrf.mxu0
        %v3598 = vadd.f32 %v3036, %v3597
        %v3599 = vpop.f32.mrf.mxu0
        %v3600 = vadd.f32 %v3036, %v3599
        %3601 = vdwg.mxu0
        %3602 = vmatpush.bf16.msra.mxu0 %v3260
        %3603 = vmatpush.bf16.msra.mxu0 %v3258
        %3604 = vmatpush.bf16.msra.mxu0 %v3256
        %3605 = vmatpush.bf16.msra.mxu0 %v3254
        %3606 = vmatpush.bf16.msra.mxu0 %v3252
        %3607 = vmatpush.bf16.msra.mxu0 %v3250
        %3608 = vmatpush.bf16.msra.mxu0 %v3248
        %3609 = vmatpush.bf16.msra.mxu0 %v3246
        %3610 = vmatmul.bf16.gmra.mxu0 %v2933
        %v3611 = vpop.f32.mrf.mxu0
        %v3612 = vadd.f32 %v3563, %v3611
        %v3613 = vpop.f32.mrf.mxu0
        %v3614 = vadd.f32 %v3565, %v3613
        %3615 = vmatmul.bf16.gmra.mxu0 %v2937
        %v3616 = vpop.f32.mrf.mxu0
        %v3617 = vadd.f32 %v3568, %v3616
        %v3618 = vpop.f32.mrf.mxu0
        %v3619 = vadd.f32 %v3570, %v3618
        %3620 = vmatmul.bf16.gmra.mxu0 %v2941
        %v3621 = vpop.f32.mrf.mxu0
        %v3622 = vadd.f32 %v3573, %v3621
        %v3623 = vpop.f32.mrf.mxu0
        %v3624 = vadd.f32 %v3575, %v3623
        %3625 = vmatmul.bf16.gmra.mxu0 %v2945
        %v3626 = vpop.f32.mrf.mxu0
        %v3627 = vadd.f32 %v3578, %v3626
        %v3628 = vpop.f32.mrf.mxu0
        %v3629 = vadd.f32 %v3580, %v3628
        %3630 = vmatmul.bf16.gmra.mxu0 %v2949
        %v3631 = vpop.f32.mrf.mxu0
        %v3632 = vadd.f32 %v3583, %v3631
        %v3633 = vpop.f32.mrf.mxu0
        %v3634 = vadd.f32 %v3585, %v3633
        %3635 = vmatmul.bf16.gmra.mxu0 %v2953
        %v3636 = vpop.f32.mrf.mxu0
        %v3637 = vadd.f32 %v3588, %v3636
        %v3638 = vpop.f32.mrf.mxu0
        %v3639 = vadd.f32 %v3590, %v3638
        %3640 = vmatmul.bf16.gmra.mxu0 %v2957
        %v3641 = vpop.f32.mrf.mxu0
        %v3642 = vadd.f32 %v3593, %v3641
        %v3643 = vpop.f32.mrf.mxu0
        %v3644 = vadd.f32 %v3595, %v3643
        %3645 = vmatmul.bf16.gmra.mxu0 %v2961
        %v3646 = vpop.f32.mrf.mxu0
        %v3647 = vadd.f32 %v3598, %v3646
        %v3648 = vpop.f32.mrf.mxu0
        %v3649 = vadd.f32 %v3600, %v3648
        %3650 = vdwg.mxu0
        %3651 = vmatpush.bf16.msra.mxu0 %v3276
        %3652 = vmatpush.bf16.msra.mxu0 %v3274
        %3653 = vmatpush.bf16.msra.mxu0 %v3272
        %3654 = vmatpush.bf16.msra.mxu0 %v3270
        %3655 = vmatpush.bf16.msra.mxu0 %v3268
        %3656 = vmatpush.bf16.msra.mxu0 %v3266
        %3657 = vmatpush.bf16.msra.mxu0 %v3264
        %3658 = vmatpush.bf16.msra.mxu0 %v3262
        %3659 = vmatmul.bf16.gmra.mxu0 %v2934
        %v3660 = vpop.f32.mrf.mxu0
        %v3661 = vadd.f32 %v3612, %v3660
        %v3662 = vpop.f32.mrf.mxu0
        %v3663 = vadd.f32 %v3614, %v3662
        %3664 = vmatmul.bf16.gmra.mxu0 %v2938
        %v3665 = vpop.f32.mrf.mxu0
        %v3666 = vadd.f32 %v3617, %v3665
        %v3667 = vpop.f32.mrf.mxu0
        %v3668 = vadd.f32 %v3619, %v3667
        %3669 = vmatmul.bf16.gmra.mxu0 %v2942
        %v3670 = vpop.f32.mrf.mxu0
        %v3671 = vadd.f32 %v3622, %v3670
        %v3672 = vpop.f32.mrf.mxu0
        %v3673 = vadd.f32 %v3624, %v3672
        %3674 = vmatmul.bf16.gmra.mxu0 %v2946
        %v3675 = vpop.f32.mrf.mxu0
        %v3676 = vadd.f32 %v3627, %v3675
        %v3677 = vpop.f32.mrf.mxu0
        %v3678 = vadd.f32 %v3629, %v3677
        %3679 = vmatmul.bf16.gmra.mxu0 %v2950
        %v3680 = vpop.f32.mrf.mxu0
        %v3681 = vadd.f32 %v3632, %v3680
        %v3682 = vpop.f32.mrf.mxu0
        %v3683 = vadd.f32 %v3634, %v3682
        %3684 = vmatmul.bf16.gmra.mxu0 %v2954
        %v3685 = vpop.f32.mrf.mxu0
        %v3686 = vadd.f32 %v3637, %v3685
        %v3687 = vpop.f32.mrf.mxu0
        %v3688 = vadd.f32 %v3639, %v3687
        %3689 = vmatmul.bf16.gmra.mxu0 %v2958
        %v3690 = vpop.f32.mrf.mxu0
        %v3691 = vadd.f32 %v3642, %v3690
        %v3692 = vpop.f32.mrf.mxu0
        %v3693 = vadd.f32 %v3644, %v3692
        %3694 = vmatmul.bf16.gmra.mxu0 %v2962
        %v3695 = vpop.f32.mrf.mxu0
        %v3696 = vadd.f32 %v3647, %v3695
        %v3697 = vpop.f32.mrf.mxu0
        %v3698 = vadd.f32 %v3649, %v3697
        %3699 = vdwg.mxu0
        %3700 = vmatpush.bf16.msra.mxu0 %v3292
        %3701 = vmatpush.bf16.msra.mxu0 %v3290
        %3702 = vmatpush.bf16.msra.mxu0 %v3288
        %3703 = vmatpush.bf16.msra.mxu0 %v3286
        %3704 = vmatpush.bf16.msra.mxu0 %v3284
        %3705 = vmatpush.bf16.msra.mxu0 %v3282
        %3706 = vmatpush.bf16.msra.mxu0 %v3280
        %3707 = vmatpush.bf16.msra.mxu0 %v3278
        %3708 = vmatmul.bf16.gmra.mxu0 %v2935
        %v3709 = vpop.f32.mrf.mxu0
        %v3710 = vadd.f32 %v3661, %v3709
        %v3711 = vpop.f32.mrf.mxu0
        %v3712 = vadd.f32 %v3663, %v3711
        %3713 = vmatmul.bf16.gmra.mxu0 %v2939
        %v3714 = vpop.f32.mrf.mxu0
        %v3715 = vadd.f32 %v3666, %v3714
        %v3716 = vpop.f32.mrf.mxu0
        %v3717 = vadd.f32 %v3668, %v3716
        %3718 = vmatmul.bf16.gmra.mxu0 %v2943
        %v3719 = vpop.f32.mrf.mxu0
        %v3720 = vadd.f32 %v3671, %v3719
        %v3721 = vpop.f32.mrf.mxu0
        %v3722 = vadd.f32 %v3673, %v3721
        %3723 = vmatmul.bf16.gmra.mxu0 %v2947
        %v3724 = vpop.f32.mrf.mxu0
        %v3725 = vadd.f32 %v3676, %v3724
        %v3726 = vpop.f32.mrf.mxu0
        %v3727 = vadd.f32 %v3678, %v3726
        %3728 = vmatmul.bf16.gmra.mxu0 %v2951
        %v3729 = vpop.f32.mrf.mxu0
        %v3730 = vadd.f32 %v3681, %v3729
        %v3731 = vpop.f32.mrf.mxu0
        %v3732 = vadd.f32 %v3683, %v3731
        %3733 = vmatmul.bf16.gmra.mxu0 %v2955
        %v3734 = vpop.f32.mrf.mxu0
        %v3735 = vadd.f32 %v3686, %v3734
        %v3736 = vpop.f32.mrf.mxu0
        %v3737 = vadd.f32 %v3688, %v3736
        %3738 = vmatmul.bf16.gmra.mxu0 %v2959
        %v3739 = vpop.f32.mrf.mxu0
        %v3740 = vadd.f32 %v3691, %v3739
        %v3741 = vpop.f32.mrf.mxu0
        %v3742 = vadd.f32 %v3693, %v3741
        %3743 = vmatmul.bf16.gmra.mxu0 %v2963
        %v3744 = vpop.f32.mrf.mxu0
        %v3745 = vadd.f32 %v3696, %v3744
        %v3746 = vpop.f32.mrf.mxu0
        %v3747 = vadd.f32 %v3698, %v3746
        %3748 = vdwg.mxu0
        %v3749 = vpack.c.bf16 %v3710, %v3514
        %v3750 = vpack.c.bf16 %v3712, %v3516
        %v3751 = vpack.c.bf16 %v3715, %v3519
        %v3752 = vpack.c.bf16 %v3717, %v3521
        %v3753 = vpack.c.bf16 %v3720, %v3524
        %v3754 = vpack.c.bf16 %v3722, %v3526
        %v3755 = vpack.c.bf16 %v3725, %v3529
        %v3756 = vpack.c.bf16 %v3727, %v3531
        %v3757 = vpack.c.bf16 %v3730, %v3534
        %v3758 = vpack.c.bf16 %v3732, %v3536
        %v3759 = vpack.c.bf16 %v3735, %v3539
        %v3760 = vpack.c.bf16 %v3737, %v3541
        %v3761 = vpack.c.bf16 %v3740, %v3544
        %v3762 = vpack.c.bf16 %v3742, %v3546
        %v3763 = vpack.c.bf16 %v3745, %v3549
        %v3764 = vpack.c.bf16 %v3747, %v3551
        %3765 = vst [vmem:[%s370] sm:$0xff] %v3749
        %3766 = vst [vmem:[%s370 + $0x8] sm:$0xff] %v3750
        %3767 = vst [vmem:[%s370 + $0x10] sm:$0xff] %v3751
        %3768 = vst [vmem:[%s370 + $0x18] sm:$0xff] %v3752
        %3769 = vst [vmem:[%s370 + $0x20] sm:$0xff] %v3753
        %3770 = vst [vmem:[%s370 + $0x28] sm:$0xff] %v3754
        %3771 = vst [vmem:[%s370 + $0x30] sm:$0xff] %v3755
        %3772 = vst [vmem:[%s370 + $0x38] sm:$0xff] %v3756
        %3773 = vst [vmem:[%s370 + $0x40] sm:$0xff] %v3757
        %3774 = vst [vmem:[%s370 + $0x48] sm:$0xff] %v3758
        %3775 = vst [vmem:[%s370 + $0x50] sm:$0xff] %v3759
        %3776 = vst [vmem:[%s370 + $0x58] sm:$0xff] %v3760
        %3777 = vst [vmem:[%s370 + $0x60] sm:$0xff] %v3761
        %3778 = vst [vmem:[%s370 + $0x68] sm:$0xff] %v3762
        %3779 = vst [vmem:[%s370 + $0x70] sm:$0xff] %v3763
        %3780 = vst [vmem:[%s370 + $0x78] sm:$0xff] %v3764
        %s3781 = sand.u32 %s179, 1
        %s3782 = scalar_lea.sflag [#allocation4], %s3781
        %s3783 = sand.u32 %s179, 1
        %s3784 = smul.addr %s3783, 128
        %s3785 = scalar_lea.vmem [#allocation8], %s3784
        // Predicated region
        $region53: #{tpu_custom_call.1} parent=39 // pred_check
          %p3786 = pneg %p189
        $region54: #{tpu_custom_call.1} parent=39 // pred_check_branch
          %3788 = sbr.rel (%p3786) target = $region56
        $region55: #{tpu_custom_call.1} parent=39 // pred_region
          %s3789 = smul.u32 16, %s30
          %3791 = vsyncadd %s3782, 0
          %s3792 = smul.addr %s3789, 2
          %s3793 = smul.addr %s29, 32
          %s3794 = sadd.s32 %s3792, %s3793
          %s3795 = smul.addr %s3794, 4
          %s3796 = scalar_lea.hbm %s5, %s3795
          %s3797 = sshll.u32 %s3785, 4
          %s3798 = int_to_ptr.vmem [resolvable:$true] %s3797
          %s3799 = sshll.u32 %s3796, 4
          %s3800 = int_to_ptr.hbm [resolvable:$true] %s3799
          %3805 = dma.vmem_to_hbm [thread:$0]  %s3798, 2048, %s3800, %s3782, 128, 128, 8
        $region56: #{tpu_custom_call.1} parent=39 // pred_fallthru
          _
      $region40: #{tpu_custom_call.1} parent=5 // pred_fallthru
        _
      %p3806 = scmp.le.s32.totalorder 2, %s20
      // Predicated region
      $region57: #{tpu_custom_call.1} parent=5 // pred_check
        %p3807 = pneg %p3806
      $region58: #{tpu_custom_call.1} parent=5 // pred_check_branch
        %3809 = sbr.rel (%p3807) target = $region60
      $region59: #{tpu_custom_call.1} parent=5 // pred_region
        %s3810 = ssub.s32 %s20, 2
        // Predicated region
        $region61: #{tpu_custom_call.1} parent=59 // pred_check
          %p3811 = pneg %p195
        $region62: #{tpu_custom_call.1} parent=59 // pred_check_branch
          %3813 = sbr.rel (%p3811) target = $region64
        $region63: #{tpu_custom_call.1} parent=59 // pred_region
          %s3814 = sand.u32 %s180, 1
          %s3815 = scalar_lea.sflag [#allocation4], %s3814
          %s3816 = sand.u32 %s180, 1
          %s3817 = smul.addr %s3816, 128
          %s3818 = scalar_lea.vmem [#allocation8], %s3817
          %3820 = dma.done %s3815, 2048
        $region64: #{tpu_custom_call.1} parent=59 // pred_fallthru
          _
      $region60: #{tpu_custom_call.1} parent=5 // pred_fallthru
        _
    $region6: #{tpu_custom_call.1} parent=1 // loop_footer
      %s24 = sadd.s32 1, %s20
    $region7: #{tpu_custom_call.1} parent=1 // loop_footer_branch
      %19 = sbr.rel target = $region3
    $region8: #{tpu_custom_call.1} parent=1 // loop_exit
      _
    %3821 = vsyncpa [#allocation3], 1
    %s3822 = scalar_lea.sflag [#allocation3], 1
    %3823 = vsyncpa %s3822, 1
    %3824 = vsyncpa [#allocation6], 1
    %s3825 = scalar_lea.sflag [#allocation6], 1
    %3826 = vsyncpa %s3825, 1
    %3827 = vsyncpa [#allocation4], 1
    %s3828 = scalar_lea.sflag [#allocation4], 1
    %3829 = vsyncpa %s3828, 1

</llo_original>
